<compile_context>
chip_gen: v6e
topology: v6e:2x2x1
jax: 0.10.0
libtpu: 0.0.40
codegen_flags: <defaults>
</compile_context>

<pallas_src>
import math
import functools

import numpy as np
import jax
import jax.numpy as jnp
from jax import lax
from jax.experimental import pallas as pl
from jax.experimental.pallas import tpu as pltpu

# ---------------- config (small, consistent with the module) ----------------
B        = 2     # batch
SEQ_LEN  = 16    # configs.seq_len
ENC_IN   = 8     # configs.enc_in  -> number of "tokens" fed to Mamba
D_MODEL  = 32    # configs.d_model
D_STATE  = 8     # configs.d_state
D_CONV   = 4     # configs.dconv
EXPAND   = 2     # configs.e_fact
PRED_LEN = 8     # configs.pred_len
D_INNER  = EXPAND * D_MODEL
DT_RANK  = math.ceil(D_MODEL / 16)
EPS      = 1e-5

PK  = B * D_INNER          # 128: packed lanes  (lane = b*D_INNER + e)
PK2 = 2 * PK               # 256: packed [x | z] lanes

# ------------------------- packed weight slab layout -------------------------
SLAB_COLS = PK2            # 256 lanes
_SLAB_ENTRIES = [          # (name, rows, cols) -- every entry starts 8-row aligned
    ("eye_c",      ENC_IN,          ENC_IN),              # one-hot flip matrix (8, 8)
    ("w1_big",     B * SEQ_LEN,     B * D_MODEL),          # lin1, block-diag   (32, 64)
    ("b1_big",     1,               B * D_MODEL),          # lin1 bias          (1, 64)
    ("w_in_big",   B * D_MODEL,     PK2),                  # in_proj [x|z]      (64, 256)
    ("convt",      D_CONV,          PK2),                  # conv taps + id tap (4, 256)
    ("convb",      1,               PK2),                  # conv bias          (1, 256)
    ("wdt_blk",    PK,              PK),                   # composed dt proj   (128, 128)
    ("b_dt_big",   1,               PK),                   # dt bias            (1, 128)
    ("w_bc_pk",    2 * B * D_STATE, PK),                   # [B_b0;B_b1;C_b0;C_b1] (32, 128)
    ("a_neg_pk",   D_STATE,         PK),                   # -exp(A_log)^T packed (8, 128)
    ("dvec_pk",    1,               PK),                   # D skip vector      (1, 128)
    ("w_tail_y",   B * PRED_LEN,    PK),                   # (w_out@w_head)^T   (16, 128)
    ("w_tail_u",   B * PRED_LEN,    B * D_MODEL),          # w_head^T           (16, 64)
    ("b_head_col", B * PRED_LEN,    1),                    # head bias          (16, 1)
]
SLAB_SHAPES = {name: (nr, nc) for name, nr, nc in _SLAB_ENTRIES}


def _layout():
    offs, r = {}, 0
    for name, nr, _ in _SLAB_ENTRIES:
        offs[name] = r
        r += -(-nr // 8) * 8           # 8-row aligned segments
    return offs, r


OFF, SLAB_ROWS = _layout()             # SLAB_ROWS == 360


def _silu(x):
    # x * sigmoid(x), sigmoid via tanh identity -> transcendental on the EUP.
    return x * (0.5 * jnp.tanh(0.5 * x) + 0.5)


def _softplus(x):
    return jnp.where(x > 20.0, x, jnp.log1p(jnp.exp(x)))


# --------------------------------- kernel -----------------------------------
def mamba_model_kernel(x_ref, w_ref, o_ref, da_scr, dbx_scr, hs_scr):
    N = D_STATE

    def wslice(name):
        r0 = OFF[name]
        nr, nc = SLAB_SHAPES[name]
        return w_ref[r0:r0 + nr, 0:nc]

    # ---- instance normalisation over the seq axis (torch unbiased=False) ----
    xn_parts, stats = [], []
    for b in range(B):
        xb = x_ref[b]                                    # (SEQ_LEN, ENC_IN)
        mb = jnp.mean(xb, axis=0, keepdims=True)         # (1, ENC_IN)
        xcb = xb - mb
        vb = jnp.mean(xcb * xcb, axis=0, keepdims=True)
        sb = jnp.sqrt(vb + EPS)
        xn_parts.append(xcb / sb)
        stats.append((mb, sb))
    xn_flat = jnp.concatenate(xn_parts, axis=0)          # (B*SEQ_LEN, ENC_IN)

    # ---- (b,s,c) -> (c, b*s) flip folded into a one-hot MXU matmul ----
    xt = lax.dot_general(wslice("eye_c"), xn_flat, (((1,), (1,)), ((), ())),
                         preferred_element_type=jnp.float32)        # (8, 32)

    # ---- lin1 fused with the batch lane-packing (block-diagonal weight) ----
    u = jnp.dot(xt, wslice("w1_big"),
                preferred_element_type=jnp.float32) + wslice("b1_big")   # (8, 64)

    # ---- Mamba in_proj: [x_b0 | x_b1 | z_b0 | z_b1] in one matmul ----
    xz = jnp.dot(u, wslice("w_in_big"),
                 preferred_element_type=jnp.float32)                # (8, 256)

    # ---- causal depthwise conv over channel tokens (+ identity tap for z), SiLU ----
    convt = wslice("convt")                                         # (4, 256)
    acc = xz * convt[0:1, :] + wslice("convb")
    for s in range(1, D_CONV):
        shifted = jnp.concatenate(
            [jnp.zeros((s, PK2), jnp.float32), xz[:ENC_IN - s, :]], axis=0)
        acc = acc + shifted * convt[s:s + 1, :]
    acts = _silu(acc)                                               # (8, 256)
    xcv = acts[:, :PK]                                              # silu(conv(x)), packed
    silz = acts[:, PK:]                                             # silu(z), packed

    # ---- input-dependent SSM parameters ----
    dt = _softplus(jnp.dot(xcv, wslice("wdt_blk"),
                           preferred_element_type=jnp.float32)
                   + wslice("b_dt_big"))                            # (8, 128)
    # [B_b0; B_b1; C_b0; C_b1]: state on sublanes, channel token on lanes
    bct = lax.dot_general(wslice("w_bc_pk"), xcv, (((1,), (1,)), ((), ())),
                          preferred_element_type=jnp.float32)       # (32, 8)

    a_neg = wslice("a_neg_pk")                                      # (8, 128)
    dtx = dt * xcv

    lane = lax.broadcasted_iota(jnp.int32, (N, PK), 1)
    leftf = jnp.where(lane < D_INNER, 1.0, 0.0)                     # batch-0 lane mask
    rightf = 1.0 - leftf

    # ---- batched hoists -> aligned (8,128) tiles in VMEM scratch ----
    for c in range(ENC_IN):
        rows = slice(c * N, (c + 1) * N)
        da_scr[rows, :] = jnp.exp(dt[c:c + 1, :] * a_neg)
        b_c = bct[0:N, c:c + 1] * leftf + bct[N:2 * N, c:c + 1] * rightf
        dbx_scr[rows, :] = b_c * dtx[c:c + 1, :]

    # ---- selective scan: 8 serial steps, 2 full-lane VPU ops each ----
    h = jnp.zeros((N, PK), jnp.float32)
    for c in range(ENC_IN):
        rows = slice(c * N, (c + 1) * N)
        h = da_scr[rows, :] * h + dbx_scr[rows, :]
        hs_scr[rows, :] = h

    # ---- y = C . h (after the scan, off the carried chain), skip, gate ----
    y_rows = []
    for c in range(ENC_IN):
        rows = slice(c * N, (c + 1) * N)
        c_c = bct[2 * N:3 * N, c:c + 1] * leftf + bct[3 * N:, c:c + 1] * rightf
        y_rows.append(jnp.sum(c_c * hs_scr[rows, :], axis=0, keepdims=True))
    y = jnp.concatenate(y_rows, axis=0)                             # (8, 128)
    y = (y + wslice("dvec_pk") * xcv) * silz

    # ---- fused out_proj@head + lin1-residual@head, transposed output layout ----
    head = (lax.dot_general(wslice("w_tail_y"), y, (((1,), (1,)), ((), ())),
                            preferred_element_type=jnp.float32)
            + lax.dot_general(wslice("w_tail_u"), u, (((1,), (1,)), ((), ())),
                              preferred_element_type=jnp.float32)
            + wslice("b_head_col"))                                 # (16, 8) = [(b,p), c]

    # ---- de-normalisation straight into the (B, PRED_LEN, ENC_IN) output ----
    for b in range(B):
        mb, sb = stats[b]
        o_ref[b] = head[b * PRED_LEN:(b + 1) * PRED_LEN, :] * sb + mb


# --------------------------------- wrapper ----------------------------------
@jax.jit
def model_forward(x, slab):
    """x: (B, SEQ_LEN, ENC_IN) f32, slab: packed weights -> (B, PRED_LEN, ENC_IN)."""
    return pl.pallas_call(
        mamba_model_kernel,
        out_shape=jax.ShapeDtypeStruct((B, PRED_LEN, ENC_IN), jnp.float32),
        in_specs=[pl.BlockSpec(memory_space=pltpu.MemorySpace.VMEM),
                  pl.BlockSpec(memory_space=pltpu.MemorySpace.VMEM)],
        out_specs=pl.BlockSpec(memory_space=pltpu.MemorySpace.VMEM),
        scratch_shapes=[pltpu.VMEM((ENC_IN * D_STATE, PK), jnp.float32)
                        for _ in range(3)],
        cost_estimate=pl.CostEstimate(flops=700_000, transcendentals=12_000,
                                      bytes_accessed=380_000),
    )(x, slab)


# --------------------------- parameter packing -------------------------------
def pack_params(p):
    """Pre-fuse / pre-transpose / batch-block-diagonalise weights into one slab."""
    q = {k: np.asarray(v, np.float32) for k, v in p.items()}
    Di, Dm, N, S, P, K = D_INNER, D_MODEL, D_STATE, SEQ_LEN, PRED_LEN, D_CONV

    w_dtdt = q["w_dtin"] @ q["w_dt"]           # composed low-rank dt projection
    w_oh   = q["w_out"] @ q["w_head"]          # composed out_proj @ linear_head
    a_neg  = -np.exp(q["A_T"])                 # A = -exp(A_log), (N, Di)

    mats = {name: np.zeros((nr, nc), np.float32) for name, nr, nc in _SLAB_ENTRIES}
    mats["eye_c"][:] = np.eye(ENC_IN, dtype=np.float32)
    for b in range(B):
        mats["w1_big"][b * S:(b + 1) * S, b * Dm:(b + 1) * Dm] = q["w1"]
        mats["b1_big"][0, b * Dm:(b + 1) * Dm] = q["b1"][0]
        mats["w_in_big"][b * Dm:(b + 1) * Dm, b * Di:(b + 1) * Di] = q["w_inx"]
        mats["w_in_big"][b * Dm:(b + 1) * Dm,
                         2 * Di + b * Di:2 * Di + (b + 1) * Di] = q["w_inz"]
        for s in range(K):                     # tap used at token shift s
            mats["convt"][s, b * Di:(b + 1) * Di] = q["w_conv"][K - 1 - s]
        mats["convt"][0, 2 * Di + b * Di:2 * Di + (b + 1) * Di] = 1.0   # z identity tap
        mats["convb"][0, b * Di:(b + 1) * Di] = q["b_conv"][0]
        mats["wdt_blk"][b * Di:(b + 1) * Di, b * Di:(b + 1) * Di] = w_dtdt
        mats["b_dt_big"][0, b * Di:(b + 1) * Di] = q["b_dt"][0]
        mats["w_bc_pk"][b * N:(b + 1) * N, b * Di:(b + 1) * Di] = q["w_B"].T
        mats["w_bc_pk"][2 * N + b * N:2 * N + (b + 1) * N,
                        b * Di:(b + 1) * Di] = q["w_C"].T
        mats["a_neg_pk"][:, b * Di:(b + 1) * Di] = a_neg
        mats["dvec_pk"][0, b * Di:(b + 1) * Di] = q["Dvec"][0]
        mats["w_tail_y"][b * P:(b + 1) * P, b * Di:(b + 1) * Di] = w_oh.T
        mats["w_tail_u"][b * P:(b + 1) * P, b * Dm:(b + 1) * Dm] = q["w_head"].T
        mats["b_head_col"][b * P:(b + 1) * P, 0] = q["b_head"][0]

    slab = np.zeros((SLAB_ROWS, SLAB_COLS), np.float32)
    for name, nr, nc in _SLAB_ENTRIES:
        slab[OFF[name]:OFF[name] + nr, :nc] = mats[name]
    return jnp.asarray(slab)


# --------------------------- deterministic params ---------------------------
def init_params(key):
    ks = jax.random.split(key, 14)
    nrm = lambda k, s, sc=0.1: sc * jax.random.normal(k, s, jnp.float32)
    p = {}
    p["w1"]     = nrm(ks[0],  (SEQ_LEN, D_MODEL))           # lin1 weight^T
    p["b1"]     = nrm(ks[1],  (1, D_MODEL), 0.01)
    p["w_inx"]  = nrm(ks[2],  (D_MODEL, D_INNER))           # in_proj (x half)
    p["w_inz"]  = nrm(ks[3],  (D_MODEL, D_INNER))           # in_proj (z half)
    p["w_conv"] = nrm(ks[4],  (D_CONV, D_INNER))            # depthwise conv taps
    p["b_conv"] = nrm(ks[5],  (1, D_INNER), 0.01)
    p["w_B"]    = nrm(ks[6],  (D_INNER, D_STATE))           # x_proj splits
    p["w_C"]    = nrm(ks[7],  (D_INNER, D_STATE))
    p["w_dtin"] = nrm(ks[8],  (D_INNER, DT_RANK))
    p["w_dt"]   = nrm(ks[9],  (DT_RANK, D_INNER))
    p["b_dt"]   = nrm(ks[10], (1, D_INNER), 0.01)
    A_log = jnp.log(jnp.arange(1, D_STATE + 1, dtype=jnp.float32))     # Mamba init
    p["A_T"]    = jnp.broadcast_to(A_log[:, None], (D_STATE, D_INNER)) # A_log^T
    p["Dvec"]   = jnp.ones((1, D_INNER), jnp.float32)
    p["w_out"]  = nrm(ks[11], (D_INNER, D_MODEL))
    p["w_head"] = nrm(ks[12], (D_MODEL, PRED_LEN))
    p["b_head"] = nrm(ks[13], (1, PRED_LEN), 0.01)
    return p


# ------------------------- plain-JAX reference ------------------------------
def reference_forward(x, p):
    ein = functools.partial(jnp.einsum, precision=lax.Precision.HIGHEST)
    mean = jnp.mean(x, axis=1, keepdims=True)
    xc = x - mean
    std = jnp.sqrt(jnp.mean(xc * xc, axis=1, keepdims=True) + EPS)
    xn = xc / std                                            # (B, S, C)
    u = ein("bsc,sd->bcd", xn, p["w1"]) + p["b1"][None]      # (B, C, D)
    xm = ein("bcd,de->bce", u, p["w_inx"])
    z  = ein("bcd,de->bce", u, p["w_inz"])
    Bn, C = x.shape[0], ENC_IN
    acc = jnp.broadcast_to(p["b_conv"][None], (Bn, C, D_INNER))
    for k in range(D_CONV):
        shift = D_CONV - 1 - k
        sh = xm if shift == 0 else jnp.concatenate(
            [jnp.zeros((Bn, shift, D_INNER), jnp.float32), xm[:, :C - shift]], axis=1)
        acc = acc + sh * p["w_conv"][k][None, None, :]
    xcnv = acc * jax.nn.sigmoid(acc)
    Bm = ein("bce,en->bcn", xcnv, p["w_B"])
    Cm = ein("bce,en->bcn", xcnv, p["w_C"])
    dt = jax.nn.softplus(
        ein("bcr,re->bce", ein("bce,er->bcr", xcnv, p["w_dtin"]), p["w_dt"])
        + p["b_dt"][None])
    A = -jnp.exp(p["A_T"])                                   # (N, Di)

    def step(h, inp):
        dt_t, B_t, C_t, x_t = inp
        dA = jnp.exp(dt_t[:, None, :] * A[None])
        dBx = B_t[:, :, None] * (dt_t * x_t)[:, None, :]
        h = dA * h + dBx
        y = ein("bn,bne->be", C_t, h) + p["Dvec"][0][None] * x_t
        return h, y

    h0 = jnp.zeros((Bn, D_STATE, D_INNER), jnp.float32)
    _, ys = lax.scan(step, h0, (jnp.swapaxes(dt, 0, 1), jnp.swapaxes(Bm, 0, 1),
                                jnp.swapaxes(Cm, 0, 1), jnp.swapaxes(xcnv, 0, 1)))
    y = jnp.swapaxes(ys, 0, 1) * (z * jax.nn.sigmoid(z))
    out = ein("bce,ed->bcd", y, p["w_out"])
    head = ein("bcd,dp->bcp", out + u, p["w_head"]) + p["b_head"][None]
    res = jnp.swapaxes(head, 1, 2)                           # (B, P, C)
    return res * std[:, 0, :][:, None, :] + mean[:, 0, :][:, None, :]


if __name__ == "__main__":
    jax.config.update("jax_default_matmul_precision", "highest")
    key = jax.random.PRNGKey(0)
    kx, kp = jax.random.split(key)
    x = jax.random.normal(kx, (B, SEQ_LEN, ENC_IN), jnp.float32)
    params = init_params(kp)
    slab = pack_params(params)

    out = model_forward(x, slab)
    jax.block_until_ready(out)

    assert out.shape == (B, PRED_LEN, ENC_IN)
    ref = reference_forward(x, params)
    np.testing.assert_allclose(np.asarray(out), np.asarray(ref), rtol=5e-3, atol=5e-3)
    print("KERNEL_OK")
</pallas_src>

<mosaic_0001>
module attributes {stable_mosaic.version = 11 : i64} {
  func.func @mamba_model_kernel(%arg0: memref<2x16x8xf32, #tpu.memory_space<vmem>>, %arg1: memref<360x256xf32, #tpu.memory_space<vmem>>, %arg2: memref<2x8x8xf32, #tpu.memory_space<vmem>>, %arg3: memref<64x128xf32, #tpu.memory_space<vmem>>, %arg4: memref<64x128xf32, #tpu.memory_space<vmem>>, %arg5: memref<64x128xf32, #tpu.memory_space<vmem>>) attributes {dimension_semantics = [], scalar_prefetch = 0 : i64, scratch_operands = 3 : i64, tpu.core_type = #tpu.core_type<tc>} {
    %c0 = arith.constant 0 : index
    %c0_0 = arith.constant 0 : index
    %c0_1 = arith.constant 0 : index
    %0 = vector.load %arg0[%c0, %c0_0, %c0_1] : memref<2x16x8xf32, #tpu.memory_space<vmem>>, vector<1x16x8xf32>
    %1 = vector.shape_cast %0 : vector<1x16x8xf32> to vector<16x8xf32>
    %cst = arith.constant dense<0.000000e+00> : vector<8xf32>
    %2 = vector.multi_reduction <add>, %1, %cst [0] : vector<16x8xf32> to vector<8xf32>
    %3 = vector.shape_cast %2 : vector<8xf32> to vector<1x8xf32>
    %cst_2 = arith.constant 1.600000e+01 : f32
    %4 = vector.broadcast %cst_2 : f32 to vector<1x8xf32>
    %5 = arith.divf %3, %4 : vector<1x8xf32>
    %6 = vector.broadcast %5 : vector<1x8xf32> to vector<16x8xf32>
    %7 = arith.subf %1, %6 : vector<16x8xf32>
    %8 = arith.mulf %7, %7 : vector<16x8xf32>
    %cst_3 = arith.constant dense<0.000000e+00> : vector<8xf32>
    %9 = vector.multi_reduction <add>, %8, %cst_3 [0] : vector<16x8xf32> to vector<8xf32>
    %10 = vector.shape_cast %9 : vector<8xf32> to vector<1x8xf32>
    %cst_4 = arith.constant 1.600000e+01 : f32
    %11 = vector.broadcast %cst_4 : f32 to vector<1x8xf32>
    %12 = arith.divf %10, %11 : vector<1x8xf32>
    %cst_5 = arith.constant 9.99999974E-6 : f32
    %13 = vector.broadcast %cst_5 : f32 to vector<1x8xf32>
    %14 = arith.addf %12, %13 : vector<1x8xf32>
    %15 = math.sqrt %14 : vector<1x8xf32>
    %16 = vector.broadcast %15 : vector<1x8xf32> to vector<16x8xf32>
    %17 = arith.divf %7, %16 : vector<16x8xf32>
    %c1 = arith.constant 1 : index
    %c0_6 = arith.constant 0 : index
    %c0_7 = arith.constant 0 : index
    %18 = vector.load %arg0[%c1, %c0_6, %c0_7] : memref<2x16x8xf32, #tpu.memory_space<vmem>>, vector<1x16x8xf32>
    %19 = vector.shape_cast %18 : vector<1x16x8xf32> to vector<16x8xf32>
    %cst_8 = arith.constant dense<0.000000e+00> : vector<8xf32>
    %20 = vector.multi_reduction <add>, %19, %cst_8 [0] : vector<16x8xf32> to vector<8xf32>
    %21 = vector.shape_cast %20 : vector<8xf32> to vector<1x8xf32>
    %cst_9 = arith.constant 1.600000e+01 : f32
    %22 = vector.broadcast %cst_9 : f32 to vector<1x8xf32>
    %23 = arith.divf %21, %22 : vector<1x8xf32>
    %24 = vector.broadcast %23 : vector<1x8xf32> to vector<16x8xf32>
    %25 = arith.subf %19, %24 : vector<16x8xf32>
    %26 = arith.mulf %25, %25 : vector<16x8xf32>
    %cst_10 = arith.constant dense<0.000000e+00> : vector<8xf32>
    %27 = vector.multi_reduction <add>, %26, %cst_10 [0] : vector<16x8xf32> to vector<8xf32>
    %28 = vector.shape_cast %27 : vector<8xf32> to vector<1x8xf32>
    %cst_11 = arith.constant 1.600000e+01 : f32
    %29 = vector.broadcast %cst_11 : f32 to vector<1x8xf32>
    %30 = arith.divf %28, %29 : vector<1x8xf32>
    %cst_12 = arith.constant 9.99999974E-6 : f32
    %31 = vector.broadcast %cst_12 : f32 to vector<1x8xf32>
    %32 = arith.addf %30, %31 : vector<1x8xf32>
    %33 = math.sqrt %32 : vector<1x8xf32>
    %34 = vector.broadcast %33 : vector<1x8xf32> to vector<16x8xf32>
    %35 = arith.divf %25, %34 : vector<16x8xf32>
    %36 = tpu.concatenate %17, %35 in 0 : vector<16x8xf32>, vector<16x8xf32> -> vector<32x8xf32>
    %c0_13 = arith.constant 0 : index
    %c0_14 = arith.constant 0 : index
    %37 = vector.load %arg1[%c0_13, %c0_14] : memref<360x256xf32, #tpu.memory_space<vmem>>, vector<8x8xf32>
    %cst_15 = arith.constant dense<0.000000e+00> : vector<8x32xf32>
    %38 = tpu.matmul %37, %36, %cst_15 {dimension_numbers = #tpu.dot_dimension_numbers<[1], [1], [0], [0], [0, 0, 1, 0], [], []>, precision = #tpu.contract_precision<fp32>} : vector<8x8xf32>, vector<32x8xf32>, vector<8x32xf32> -> vector<8x32xf32>
    %c8 = arith.constant 8 : index
    %c0_16 = arith.constant 0 : index
    %39 = vector.load %arg1[%c8, %c0_16] : memref<360x256xf32, #tpu.memory_space<vmem>>, vector<32x64xf32>
    %cst_17 = arith.constant dense<0.000000e+00> : vector<8x64xf32>
    %40 = tpu.matmul %38, %39, %cst_17 {dimension_numbers = #tpu.dot_dimension_numbers<[1], [0], [0], [1], [0, 0, 1, 1], [], []>, precision = #tpu.contract_precision<fp32>} : vector<8x32xf32>, vector<32x64xf32>, vector<8x64xf32> -> vector<8x64xf32>
    %c40 = arith.constant 40 : index
    %c0_18 = arith.constant 0 : index
    %41 = vector.load %arg1[%c40, %c0_18] : memref<360x256xf32, #tpu.memory_space<vmem>>, vector<1x64xf32>
    %42 = vector.broadcast %41 : vector<1x64xf32> to vector<8x64xf32>
    %43 = arith.addf %40, %42 : vector<8x64xf32>
    %c48 = arith.constant 48 : index
    %c0_19 = arith.constant 0 : index
    %44 = vector.load %arg1[%c48, %c0_19] : memref<360x256xf32, #tpu.memory_space<vmem>>, vector<64x256xf32>
    %cst_20 = arith.constant dense<0.000000e+00> : vector<8x256xf32>
    %45 = tpu.matmul %43, %44, %cst_20 {dimension_numbers = #tpu.dot_dimension_numbers<[1], [0], [0], [1], [0, 0, 1, 1], [], []>, precision = #tpu.contract_precision<fp32>} : vector<8x64xf32>, vector<64x256xf32>, vector<8x256xf32> -> vector<8x256xf32>
    %c112 = arith.constant 112 : index
    %c0_21 = arith.constant 0 : index
    %46 = vector.load %arg1[%c112, %c0_21] : memref<360x256xf32, #tpu.memory_space<vmem>>, vector<4x256xf32>
    %47 = vector.extract_strided_slice %46 {offsets = [0, 0], sizes = [1, 256], strides = [1, 1]} : vector<4x256xf32> to vector<1x256xf32>
    %48 = vector.broadcast %47 : vector<1x256xf32> to vector<8x256xf32>
    %49 = arith.mulf %45, %48 : vector<8x256xf32>
    %c120 = arith.constant 120 : index
    %c0_22 = arith.constant 0 : index
    %50 = vector.load %arg1[%c120, %c0_22] : memref<360x256xf32, #tpu.memory_space<vmem>>, vector<1x256xf32>
    %51 = vector.broadcast %50 : vector<1x256xf32> to vector<8x256xf32>
    %52 = arith.addf %49, %51 : vector<8x256xf32>
    %cst_23 = arith.constant 0.000000e+00 : f32
    %53 = vector.broadcast %cst_23 : f32 to vector<1x256xf32>
    %54 = vector.extract_strided_slice %45 {offsets = [0, 0], sizes = [7, 256], strides = [1, 1]} : vector<8x256xf32> to vector<7x256xf32>
    %55 = tpu.concatenate %53, %54 in 0 : vector<1x256xf32>, vector<7x256xf32> -> vector<8x256xf32>
    %56 = vector.extract_strided_slice %46 {offsets = [1, 0], sizes = [1, 256], strides = [1, 1]} : vector<4x256xf32> to vector<1x256xf32>
    %57 = vector.broadcast %56 : vector<1x256xf32> to vector<8x256xf32>
    %58 = arith.mulf %55, %57 : vector<8x256xf32>
    %59 = arith.addf %52, %58 : vector<8x256xf32>
    %cst_24 = arith.constant 0.000000e+00 : f32
    %60 = vector.broadcast %cst_24 : f32 to vector<2x256xf32>
    %61 = vector.extract_strided_slice %45 {offsets = [0, 0], sizes = [6, 256], strides = [1, 1]} : vector<8x256xf32> to vector<6x256xf32>
    %62 = tpu.concatenate %60, %61 in 0 : vector<2x256xf32>, vector<6x256xf32> -> vector<8x256xf32>
    %63 = vector.extract_strided_slice %46 {offsets = [2, 0], sizes = [1, 256], strides = [1, 1]} : vector<4x256xf32> to vector<1x256xf32>
    %64 = vector.broadcast %63 : vector<1x256xf32> to vector<8x256xf32>
    %65 = arith.mulf %62, %64 : vector<8x256xf32>
    %66 = arith.addf %59, %65 : vector<8x256xf32>
    %cst_25 = arith.constant 0.000000e+00 : f32
    %67 = vector.broadcast %cst_25 : f32 to vector<3x256xf32>
    %68 = vector.extract_strided_slice %45 {offsets = [0, 0], sizes = [5, 256], strides = [1, 1]} : vector<8x256xf32> to vector<5x256xf32>
    %69 = tpu.concatenate %67, %68 in 0 : vector<3x256xf32>, vector<5x256xf32> -> vector<8x256xf32>
    %70 = vector.extract_strided_slice %46 {offsets = [3, 0], sizes = [1, 256], strides = [1, 1]} : vector<4x256xf32> to vector<1x256xf32>
    %71 = vector.broadcast %70 : vector<1x256xf32> to vector<8x256xf32>
    %72 = arith.mulf %69, %71 : vector<8x256xf32>
    %73 = arith.addf %66, %72 : vector<8x256xf32>
    %cst_26 = arith.constant 5.000000e-01 : f32
    %74 = vector.broadcast %cst_26 : f32 to vector<8x256xf32>
    %75 = arith.mulf %74, %73 : vector<8x256xf32>
    %76 = math.tanh %75 : vector<8x256xf32>
    %cst_27 = arith.constant 5.000000e-01 : f32
    %77 = vector.broadcast %cst_27 : f32 to vector<8x256xf32>
    %78 = arith.mulf %77, %76 : vector<8x256xf32>
    %cst_28 = arith.constant 5.000000e-01 : f32
    %79 = vector.broadcast %cst_28 : f32 to vector<8x256xf32>
    %80 = arith.addf %78, %79 : vector<8x256xf32>
    %81 = arith.mulf %73, %80 : vector<8x256xf32>
    %82 = vector.extract_strided_slice %81 {offsets = [0, 0], sizes = [8, 128], strides = [1, 1]} : vector<8x256xf32> to vector<8x128xf32>
    %83 = vector.extract_strided_slice %81 {offsets = [0, 128], sizes = [8, 128], strides = [1, 1]} : vector<8x256xf32> to vector<8x128xf32>
    %c128 = arith.constant 128 : index
    %c0_29 = arith.constant 0 : index
    %84 = vector.load %arg1[%c128, %c0_29] : memref<360x256xf32, #tpu.memory_space<vmem>>, vector<128x128xf32>
    %cst_30 = arith.constant dense<0.000000e+00> : vector<8x128xf32>
    %85 = tpu.matmul %82, %84, %cst_30 {dimension_numbers = #tpu.dot_dimension_numbers<[1], [0], [0], [1], [0, 0, 1, 1], [], []>, precision = #tpu.contract_precision<fp32>} : vector<8x128xf32>, vector<128x128xf32>, vector<8x128xf32> -> vector<8x128xf32>
    %c256 = arith.constant 256 : index
    %c0_31 = arith.constant 0 : index
    %86 = vector.load %arg1[%c256, %c0_31] : memref<360x256xf32, #tpu.memory_space<vmem>>, vector<1x128xf32>
    %87 = vector.broadcast %86 : vector<1x128xf32> to vector<8x128xf32>
    %88 = arith.addf %85, %87 : vector<8x128xf32>
    %cst_32 = arith.constant 2.000000e+01 : f32
    %89 = vector.broadcast %cst_32 : f32 to vector<8x128xf32>
    %90 = arith.cmpf ogt, %88, %89 : vector<8x128xf32>
    %91 = math.exp %88 : vector<8x128xf32>
    %92 = math.log1p %91 : vector<8x128xf32>
    %93 = arith.select %90, %88, %92 : vector<8x128xi1>, vector<8x128xf32>
    %c264 = arith.constant 264 : index
    %c0_33 = arith.constant 0 : index
    %94 = vector.load %arg1[%c264, %c0_33] : memref<360x256xf32, #tpu.memory_space<vmem>>, vector<32x128xf32>
    %cst_34 = arith.constant dense<0.000000e+00> : vector<32x8xf32>
    %95 = tpu.matmul %94, %82, %cst_34 {dimension_numbers = #tpu.dot_dimension_numbers<[1], [1], [0], [0], [0, 0, 1, 0], [], []>, precision = #tpu.contract_precision<fp32>} : vector<32x128xf32>, vector<8x128xf32>, vector<32x8xf32> -> vector<32x8xf32>
    %c296 = arith.constant 296 : index
    %c0_35 = arith.constant 0 : index
    %96 = vector.load %arg1[%c296, %c0_35] : memref<360x256xf32, #tpu.memory_space<vmem>>, vector<8x128xf32>
    %97 = arith.mulf %93, %82 : vector<8x128xf32>
    %98 = tpu.iota {dimensions = array<i32: 1>} : vector<8x128xi32>
    %c64_i32 = arith.constant 64 : i32
    %99 = vector.broadcast %c64_i32 : i32 to vector<8x128xi32>
    %100 = arith.cmpi slt, %98, %99 : vector<8x128xi32>
    %cst_36 = arith.constant 1.000000e+00 : f32
    %cst_37 = arith.constant 0.000000e+00 : f32
    %101 = vector.broadcast %cst_36 : f32 to vector<8x128xf32>
    %102 = vector.broadcast %cst_37 : f32 to vector<8x128xf32>
    %103 = arith.select %100, %101, %102 : vector<8x128xi1>, vector<8x128xf32>
    %cst_38 = arith.constant 1.000000e+00 : f32
    %104 = vector.broadcast %cst_38 : f32 to vector<8x128xf32>
    %105 = arith.subf %104, %103 : vector<8x128xf32>
    %106 = vector.extract_strided_slice %93 {offsets = [0, 0], sizes = [1, 128], strides = [1, 1]} : vector<8x128xf32> to vector<1x128xf32>
    %107 = vector.broadcast %106 : vector<1x128xf32> to vector<8x128xf32>
    %108 = arith.mulf %107, %96 : vector<8x128xf32>
    %109 = math.exp %108 : vector<8x128xf32>
    %c0_39 = arith.constant 0 : index
    %c0_40 = arith.constant 0 : index
    %110 = vector.load %arg3[%c0_39, %c0_40] : memref<64x128xf32, #tpu.memory_space<vmem>>, vector<8x128xf32>
    tpu.vector_store %arg3[%c0_39, %c0_40], %109 {strides = array<i32>} : memref<64x128xf32, #tpu.memory_space<vmem>>, vector<8x128xf32>,
    %111 = vector.extract_strided_slice %95 {offsets = [0, 0], sizes = [8, 1], strides = [1, 1]} : vector<32x8xf32> to vector<8x1xf32>
    %112 = vector.broadcast %111 : vector<8x1xf32> to vector<8x128xf32>
    %113 = arith.mulf %112, %103 : vector<8x128xf32>
    %114 = vector.extract_strided_slice %95 {offsets = [8, 0], sizes = [8, 1], strides = [1, 1]} : vector<32x8xf32> to vector<8x1xf32>
    %115 = vector.broadcast %114 : vector<8x1xf32> to vector<8x128xf32>
    %116 = arith.mulf %115, %105 : vector<8x128xf32>
    %117 = arith.addf %113, %116 : vector<8x128xf32>
    %118 = vector.extract_strided_slice %97 {offsets = [0, 0], sizes = [1, 128], strides = [1, 1]} : vector<8x128xf32> to vector<1x128xf32>
    %119 = vector.broadcast %118 : vector<1x128xf32> to vector<8x128xf32>
    %120 = arith.mulf %117, %119 : vector<8x128xf32>
    %c0_41 = arith.constant 0 : index
    %c0_42 = arith.constant 0 : index
    %121 = vector.load %arg4[%c0_41, %c0_42] : memref<64x128xf32, #tpu.memory_space<vmem>>, vector<8x128xf32>
    tpu.vector_store %arg4[%c0_41, %c0_42], %120 {strides = array<i32>} : memref<64x128xf32, #tpu.memory_space<vmem>>, vector<8x128xf32>,
    %122 = vector.extract_strided_slice %93 {offsets = [1, 0], sizes = [1, 128], strides = [1, 1]} : vector<8x128xf32> to vector<1x128xf32>
    %123 = vector.broadcast %122 : vector<1x128xf32> to vector<8x128xf32>
    %124 = arith.mulf %123, %96 : vector<8x128xf32>
    %125 = math.exp %124 : vector<8x128xf32>
    %c8_43 = arith.constant 8 : index
    %c0_44 = arith.constant 0 : index
    %126 = vector.load %arg3[%c8_43, %c0_44] : memref<64x128xf32, #tpu.memory_space<vmem>>, vector<8x128xf32>
    tpu.vector_store %arg3[%c8_43, %c0_44], %125 {strides = array<i32>} : memref<64x128xf32, #tpu.memory_space<vmem>>, vector<8x128xf32>,
    %127 = vector.extract_strided_slice %95 {offsets = [0, 1], sizes = [8, 1], strides = [1, 1]} : vector<32x8xf32> to vector<8x1xf32>
    %128 = vector.broadcast %127 : vector<8x1xf32> to vector<8x128xf32>
    %129 = arith.mulf %128, %103 : vector<8x128xf32>
    %130 = vector.extract_strided_slice %95 {offsets = [8, 1], sizes = [8, 1], strides = [1, 1]} : vector<32x8xf32> to vector<8x1xf32>
    %131 = vector.broadcast %130 : vector<8x1xf32> to vector<8x128xf32>
    %132 = arith.mulf %131, %105 : vector<8x128xf32>
    %133 = arith.addf %129, %132 : vector<8x128xf32>
    %134 = vector.extract_strided_slice %97 {offsets = [1, 0], sizes = [1, 128], strides = [1, 1]} : vector<8x128xf32> to vector<1x128xf32>
    %135 = vector.broadcast %134 : vector<1x128xf32> to vector<8x128xf32>
    %136 = arith.mulf %133, %135 : vector<8x128xf32>
    %c8_45 = arith.constant 8 : index
    %c0_46 = arith.constant 0 : index
    %137 = vector.load %arg4[%c8_45, %c0_46] : memref<64x128xf32, #tpu.memory_space<vmem>>, vector<8x128xf32>
    tpu.vector_store %arg4[%c8_45, %c0_46], %136 {strides = array<i32>} : memref<64x128xf32, #tpu.memory_space<vmem>>, vector<8x128xf32>,
    %138 = vector.extract_strided_slice %93 {offsets = [2, 0], sizes = [1, 128], strides = [1, 1]} : vector<8x128xf32> to vector<1x128xf32>
    %139 = vector.broadcast %138 : vector<1x128xf32> to vector<8x128xf32>
    %140 = arith.mulf %139, %96 : vector<8x128xf32>
    %141 = math.exp %140 : vector<8x128xf32>
    %c16 = arith.constant 16 : index
    %c0_47 = arith.constant 0 : index
    %142 = vector.load %arg3[%c16, %c0_47] : memref<64x128xf32, #tpu.memory_space<vmem>>, vector<8x128xf32>
    tpu.vector_store %arg3[%c16, %c0_47], %141 {strides = array<i32>} : memref<64x128xf32, #tpu.memory_space<vmem>>, vector<8x128xf32>,
    %143 = vector.extract_strided_slice %95 {offsets = [0, 2], sizes = [8, 1], strides = [1, 1]} : vector<32x8xf32> to vector<8x1xf32>
    %144 = vector.broadcast %143 : vector<8x1xf32> to vector<8x128xf32>
    %145 = arith.mulf %144, %103 : vector<8x128xf32>
    %146 = vector.extract_strided_slice %95 {offsets = [8, 2], sizes = [8, 1], strides = [1, 1]} : vector<32x8xf32> to vector<8x1xf32>
    %147 = vector.broadcast %146 : vector<8x1xf32> to vector<8x128xf32>
    %148 = arith.mulf %147, %105 : vector<8x128xf32>
    %149 = arith.addf %145, %148 : vector<8x128xf32>
    %150 = vector.extract_strided_slice %97 {offsets = [2, 0], sizes = [1, 128], strides = [1, 1]} : vector<8x128xf32> to vector<1x128xf32>
    %151 = vector.broadcast %150 : vector<1x128xf32> to vector<8x128xf32>
    %152 = arith.mulf %149, %151 : vector<8x128xf32>
    %c16_48 = arith.constant 16 : index
    %c0_49 = arith.constant 0 : index
    %153 = vector.load %arg4[%c16_48, %c0_49] : memref<64x128xf32, #tpu.memory_space<vmem>>, vector<8x128xf32>
    tpu.vector_store %arg4[%c16_48, %c0_49], %152 {strides = array<i32>} : memref<64x128xf32, #tpu.memory_space<vmem>>, vector<8x128xf32>,
    %154 = vector.extract_strided_slice %93 {offsets = [3, 0], sizes = [1, 128], strides = [1, 1]} : vector<8x128xf32> to vector<1x128xf32>
    %155 = vector.broadcast %154 : vector<1x128xf32> to vector<8x128xf32>
    %156 = arith.mulf %155, %96 : vector<8x128xf32>
    %157 = math.exp %156 : vector<8x128xf32>
    %c24 = arith.constant 24 : index
    %c0_50 = arith.constant 0 : index
    %158 = vector.load %arg3[%c24, %c0_50] : memref<64x128xf32, #tpu.memory_space<vmem>>, vector<8x128xf32>
    tpu.vector_store %arg3[%c24, %c0_50], %157 {strides = array<i32>} : memref<64x128xf32, #tpu.memory_space<vmem>>, vector<8x128xf32>,
    %159 = vector.extract_strided_slice %95 {offsets = [0, 3], sizes = [8, 1], strides = [1, 1]} : vector<32x8xf32> to vector<8x1xf32>
    %160 = vector.broadcast %159 : vector<8x1xf32> to vector<8x128xf32>
    %161 = arith.mulf %160, %103 : vector<8x128xf32>
    %162 = vector.extract_strided_slice %95 {offsets = [8, 3], sizes = [8, 1], strides = [1, 1]} : vector<32x8xf32> to vector<8x1xf32>
    %163 = vector.broadcast %162 : vector<8x1xf32> to vector<8x128xf32>
    %164 = arith.mulf %163, %105 : vector<8x128xf32>
    %165 = arith.addf %161, %164 : vector<8x128xf32>
    %166 = vector.extract_strided_slice %97 {offsets = [3, 0], sizes = [1, 128], strides = [1, 1]} : vector<8x128xf32> to vector<1x128xf32>
    %167 = vector.broadcast %166 : vector<1x128xf32> to vector<8x128xf32>
    %168 = arith.mulf %165, %167 : vector<8x128xf32>
    %c24_51 = arith.constant 24 : index
    %c0_52 = arith.constant 0 : index
    %169 = vector.load %arg4[%c24_51, %c0_52] : memref<64x128xf32, #tpu.memory_space<vmem>>, vector<8x128xf32>
    tpu.vector_store %arg4[%c24_51, %c0_52], %168 {strides = array<i32>} : memref<64x128xf32, #tpu.memory_space<vmem>>, vector<8x128xf32>,
    %170 = vector.extract_strided_slice %93 {offsets = [4, 0], sizes = [1, 128], strides = [1, 1]} : vector<8x128xf32> to vector<1x128xf32>
    %171 = vector.broadcast %170 : vector<1x128xf32> to vector<8x128xf32>
    %172 = arith.mulf %171, %96 : vector<8x128xf32>
    %173 = math.exp %172 : vector<8x128xf32>
    %c32 = arith.constant 32 : index
    %c0_53 = arith.constant 0 : index
    %174 = vector.load %arg3[%c32, %c0_53] : memref<64x128xf32, #tpu.memory_space<vmem>>, vector<8x128xf32>
    tpu.vector_store %arg3[%c32, %c0_53], %173 {strides = array<i32>} : memref<64x128xf32, #tpu.memory_space<vmem>>, vector<8x128xf32>,
    %175 = vector.extract_strided_slice %95 {offsets = [0, 4], sizes = [8, 1], strides = [1, 1]} : vector<32x8xf32> to vector<8x1xf32>
    %176 = vector.broadcast %175 : vector<8x1xf32> to vector<8x128xf32>
    %177 = arith.mulf %176, %103 : vector<8x128xf32>
    %178 = vector.extract_strided_slice %95 {offsets = [8, 4], sizes = [8, 1], strides = [1, 1]} : vector<32x8xf32> to vector<8x1xf32>
    %179 = vector.broadcast %178 : vector<8x1xf32> to vector<8x128xf32>
    %180 = arith.mulf %179, %105 : vector<8x128xf32>
    %181 = arith.addf %177, %180 : vector<8x128xf32>
    %182 = vector.extract_strided_slice %97 {offsets = [4, 0], sizes = [1, 128], strides = [1, 1]} : vector<8x128xf32> to vector<1x128xf32>
    %183 = vector.broadcast %182 : vector<1x128xf32> to vector<8x128xf32>
    %184 = arith.mulf %181, %183 : vector<8x128xf32>
    %c32_54 = arith.constant 32 : index
    %c0_55 = arith.constant 0 : index
    %185 = vector.load %arg4[%c32_54, %c0_55] : memref<64x128xf32, #tpu.memory_space<vmem>>, vector<8x128xf32>
    tpu.vector_store %arg4[%c32_54, %c0_55], %184 {strides = array<i32>} : memref<64x128xf32, #tpu.memory_space<vmem>>, vector<8x128xf32>,
    %186 = vector.extract_strided_slice %93 {offsets = [5, 0], sizes = [1, 128], strides = [1, 1]} : vector<8x128xf32> to vector<1x128xf32>
    %187 = vector.broadcast %186 : vector<1x128xf32> to vector<8x128xf32>
    %188 = arith.mulf %187, %96 : vector<8x128xf32>
    %189 = math.exp %188 : vector<8x128xf32>
    %c40_56 = arith.constant 40 : index
    %c0_57 = arith.constant 0 : index
    %190 = vector.load %arg3[%c40_56, %c0_57] : memref<64x128xf32, #tpu.memory_space<vmem>>, vector<8x128xf32>
    tpu.vector_store %arg3[%c40_56, %c0_57], %189 {strides = array<i32>} : memref<64x128xf32, #tpu.memory_space<vmem>>, vector<8x128xf32>,
    %191 = vector.extract_strided_slice %95 {offsets = [0, 5], sizes = [8, 1], strides = [1, 1]} : vector<32x8xf32> to vector<8x1xf32>
    %192 = vector.broadcast %191 : vector<8x1xf32> to vector<8x128xf32>
    %193 = arith.mulf %192, %103 : vector<8x128xf32>
    %194 = vector.extract_strided_slice %95 {offsets = [8, 5], sizes = [8, 1], strides = [1, 1]} : vector<32x8xf32> to vector<8x1xf32>
    %195 = vector.broadcast %194 : vector<8x1xf32> to vector<8x128xf32>
    %196 = arith.mulf %195, %105 : vector<8x128xf32>
    %197 = arith.addf %193, %196 : vector<8x128xf32>
    %198 = vector.extract_strided_slice %97 {offsets = [5, 0], sizes = [1, 128], strides = [1, 1]} : vector<8x128xf32> to vector<1x128xf32>
    %199 = vector.broadcast %198 : vector<1x128xf32> to vector<8x128xf32>
    %200 = arith.mulf %197, %199 : vector<8x128xf32>
    %c40_58 = arith.constant 40 : index
    %c0_59 = arith.constant 0 : index
    %201 = vector.load %arg4[%c40_58, %c0_59] : memref<64x128xf32, #tpu.memory_space<vmem>>, vector<8x128xf32>
    tpu.vector_store %arg4[%c40_58, %c0_59], %200 {strides = array<i32>} : memref<64x128xf32, #tpu.memory_space<vmem>>, vector<8x128xf32>,
    %202 = vector.extract_strided_slice %93 {offsets = [6, 0], sizes = [1, 128], strides = [1, 1]} : vector<8x128xf32> to vector<1x128xf32>
    %203 = vector.broadcast %202 : vector<1x128xf32> to vector<8x128xf32>
    %204 = arith.mulf %203, %96 : vector<8x128xf32>
    %205 = math.exp %204 : vector<8x128xf32>
    %c48_60 = arith.constant 48 : index
    %c0_61 = arith.constant 0 : index
    %206 = vector.load %arg3[%c48_60, %c0_61] : memref<64x128xf32, #tpu.memory_space<vmem>>, vector<8x128xf32>
    tpu.vector_store %arg3[%c48_60, %c0_61], %205 {strides = array<i32>} : memref<64x128xf32, #tpu.memory_space<vmem>>, vector<8x128xf32>,
    %207 = vector.extract_strided_slice %95 {offsets = [0, 6], sizes = [8, 1], strides = [1, 1]} : vector<32x8xf32> to vector<8x1xf32>
    %208 = vector.broadcast %207 : vector<8x1xf32> to vector<8x128xf32>
    %209 = arith.mulf %208, %103 : vector<8x128xf32>
    %210 = vector.extract_strided_slice %95 {offsets = [8, 6], sizes = [8, 1], strides = [1, 1]} : vector<32x8xf32> to vector<8x1xf32>
    %211 = vector.broadcast %210 : vector<8x1xf32> to vector<8x128xf32>
    %212 = arith.mulf %211, %105 : vector<8x128xf32>
    %213 = arith.addf %209, %212 : vector<8x128xf32>
    %214 = vector.extract_strided_slice %97 {offsets = [6, 0], sizes = [1, 128], strides = [1, 1]} : vector<8x128xf32> to vector<1x128xf32>
    %215 = vector.broadcast %214 : vector<1x128xf32> to vector<8x128xf32>
    %216 = arith.mulf %213, %215 : vector<8x128xf32>
    %c48_62 = arith.constant 48 : index
    %c0_63 = arith.constant 0 : index
    %217 = vector.load %arg4[%c48_62, %c0_63] : memref<64x128xf32, #tpu.memory_space<vmem>>, vector<8x128xf32>
    tpu.vector_store %arg4[%c48_62, %c0_63], %216 {strides = array<i32>} : memref<64x128xf32, #tpu.memory_space<vmem>>, vector<8x128xf32>,
    %218 = vector.extract_strided_slice %93 {offsets = [7, 0], sizes = [1, 128], strides = [1, 1]} : vector<8x128xf32> to vector<1x128xf32>
    %219 = vector.broadcast %218 : vector<1x128xf32> to vector<8x128xf32>
    %220 = arith.mulf %219, %96 : vector<8x128xf32>
    %221 = math.exp %220 : vector<8x128xf32>
    %c56 = arith.constant 56 : index
    %c0_64 = arith.constant 0 : index
    %222 = vector.load %arg3[%c56, %c0_64] : memref<64x128xf32, #tpu.memory_space<vmem>>, vector<8x128xf32>
    tpu.vector_store %arg3[%c56, %c0_64], %221 {strides = array<i32>} : memref<64x128xf32, #tpu.memory_space<vmem>>, vector<8x128xf32>,
    %223 = vector.extract_strided_slice %95 {offsets = [0, 7], sizes = [8, 1], strides = [1, 1]} : vector<32x8xf32> to vector<8x1xf32>
    %224 = vector.broadcast %223 : vector<8x1xf32> to vector<8x128xf32>
    %225 = arith.mulf %224, %103 : vector<8x128xf32>
    %226 = vector.extract_strided_slice %95 {offsets = [8, 7], sizes = [8, 1], strides = [1, 1]} : vector<32x8xf32> to vector<8x1xf32>
    %227 = vector.broadcast %226 : vector<8x1xf32> to vector<8x128xf32>
    %228 = arith.mulf %227, %105 : vector<8x128xf32>
    %229 = arith.addf %225, %228 : vector<8x128xf32>
    %230 = vector.extract_strided_slice %97 {offsets = [7, 0], sizes = [1, 128], strides = [1, 1]} : vector<8x128xf32> to vector<1x128xf32>
    %231 = vector.broadcast %230 : vector<1x128xf32> to vector<8x128xf32>
    %232 = arith.mulf %229, %231 : vector<8x128xf32>
    %c56_65 = arith.constant 56 : index
    %c0_66 = arith.constant 0 : index
    %233 = vector.load %arg4[%c56_65, %c0_66] : memref<64x128xf32, #tpu.memory_space<vmem>>, vector<8x128xf32>
    tpu.vector_store %arg4[%c56_65, %c0_66], %232 {strides = array<i32>} : memref<64x128xf32, #tpu.memory_space<vmem>>, vector<8x128xf32>,
    %cst_67 = arith.constant 0.000000e+00 : f32
    %234 = vector.broadcast %cst_67 : f32 to vector<8x128xf32>
    %c0_68 = arith.constant 0 : index
    %c0_69 = arith.constant 0 : index
    %235 = vector.load %arg3[%c0_68, %c0_69] : memref<64x128xf32, #tpu.memory_space<vmem>>, vector<8x128xf32>
    %236 = arith.mulf %235, %234 : vector<8x128xf32>
    %c0_70 = arith.constant 0 : index
    %c0_71 = arith.constant 0 : index
    %237 = vector.load %arg4[%c0_70, %c0_71] : memref<64x128xf32, #tpu.memory_space<vmem>>, vector<8x128xf32>
    %238 = arith.addf %236, %237 : vector<8x128xf32>
    %c0_72 = arith.constant 0 : index
    %c0_73 = arith.constant 0 : index
    %239 = vector.load %arg5[%c0_72, %c0_73] : memref<64x128xf32, #tpu.memory_space<vmem>>, vector<8x128xf32>
    tpu.vector_store %arg5[%c0_72, %c0_73], %238 {strides = array<i32>} : memref<64x128xf32, #tpu.memory_space<vmem>>, vector<8x128xf32>,
    %c8_74 = arith.constant 8 : index
    %c0_75 = arith.constant 0 : index
    %240 = vector.load %arg3[%c8_74, %c0_75] : memref<64x128xf32, #tpu.memory_space<vmem>>, vector<8x128xf32>
    %241 = arith.mulf %240, %238 : vector<8x128xf32>
    %c8_76 = arith.constant 8 : index
    %c0_77 = arith.constant 0 : index
    %242 = vector.load %arg4[%c8_76, %c0_77] : memref<64x128xf32, #tpu.memory_space<vmem>>, vector<8x128xf32>
    %243 = arith.addf %241, %242 : vector<8x128xf32>
    %c8_78 = arith.constant 8 : index
    %c0_79 = arith.constant 0 : index
    %244 = vector.load %arg5[%c8_78, %c0_79] : memref<64x128xf32, #tpu.memory_space<vmem>>, vector<8x128xf32>
    tpu.vector_store %arg5[%c8_78, %c0_79], %243 {strides = array<i32>} : memref<64x128xf32, #tpu.memory_space<vmem>>, vector<8x128xf32>,
    %c16_80 = arith.constant 16 : index
    %c0_81 = arith.constant 0 : index
    %245 = vector.load %arg3[%c16_80, %c0_81] : memref<64x128xf32, #tpu.memory_space<vmem>>, vector<8x128xf32>
    %246 = arith.mulf %245, %243 : vector<8x128xf32>
    %c16_82 = arith.constant 16 : index
    %c0_83 = arith.constant 0 : index
    %247 = vector.load %arg4[%c16_82, %c0_83] : memref<64x128xf32, #tpu.memory_space<vmem>>, vector<8x128xf32>
    %248 = arith.addf %246, %247 : vector<8x128xf32>
    %c16_84 = arith.constant 16 : index
    %c0_85 = arith.constant 0 : index
    %249 = vector.load %arg5[%c16_84, %c0_85] : memref<64x128xf32, #tpu.memory_space<vmem>>, vector<8x128xf32>
    tpu.vector_store %arg5[%c16_84, %c0_85], %248 {strides = array<i32>} : memref<64x128xf32, #tpu.memory_space<vmem>>, vector<8x128xf32>,
    %c24_86 = arith.constant 24 : index
    %c0_87 = arith.constant 0 : index
    %250 = vector.load %arg3[%c24_86, %c0_87] : memref<64x128xf32, #tpu.memory_space<vmem>>, vector<8x128xf32>
    %251 = arith.mulf %250, %248 : vector<8x128xf32>
    %c24_88 = arith.constant 24 : index
    %c0_89 = arith.constant 0 : index
    %252 = vector.load %arg4[%c24_88, %c0_89] : memref<64x128xf32, #tpu.memory_space<vmem>>, vector<8x128xf32>
    %253 = arith.addf %251, %252 : vector<8x128xf32>
    %c24_90 = arith.constant 24 : index
    %c0_91 = arith.constant 0 : index
    %254 = vector.load %arg5[%c24_90, %c0_91] : memref<64x128xf32, #tpu.memory_space<vmem>>, vector<8x128xf32>
    tpu.vector_store %arg5[%c24_90, %c0_91], %253 {strides = array<i32>} : memref<64x128xf32, #tpu.memory_space<vmem>>, vector<8x128xf32>,
    %c32_92 = arith.constant 32 : index
    %c0_93 = arith.constant 0 : index
    %255 = vector.load %arg3[%c32_92, %c0_93] : memref<64x128xf32, #tpu.memory_space<vmem>>, vector<8x128xf32>
    %256 = arith.mulf %255, %253 : vector<8x128xf32>
    %c32_94 = arith.constant 32 : index
    %c0_95 = arith.constant 0 : index
    %257 = vector.load %arg4[%c32_94, %c0_95] : memref<64x128xf32, #tpu.memory_space<vmem>>, vector<8x128xf32>
    %258 = arith.addf %256, %257 : vector<8x128xf32>
    %c32_96 = arith.constant 32 : index
    %c0_97 = arith.constant 0 : index
    %259 = vector.load %arg5[%c32_96, %c0_97] : memref<64x128xf32, #tpu.memory_space<vmem>>, vector<8x128xf32>
    tpu.vector_store %arg5[%c32_96, %c0_97], %258 {strides = array<i32>} : memref<64x128xf32, #tpu.memory_space<vmem>>, vector<8x128xf32>,
    %c40_98 = arith.constant 40 : index
    %c0_99 = arith.constant 0 : index
    %260 = vector.load %arg3[%c40_98, %c0_99] : memref<64x128xf32, #tpu.memory_space<vmem>>, vector<8x128xf32>
    %261 = arith.mulf %260, %258 : vector<8x128xf32>
    %c40_100 = arith.constant 40 : index
    %c0_101 = arith.constant 0 : index
    %262 = vector.load %arg4[%c40_100, %c0_101] : memref<64x128xf32, #tpu.memory_space<vmem>>, vector<8x128xf32>
    %263 = arith.addf %261, %262 : vector<8x128xf32>
    %c40_102 = arith.constant 40 : index
    %c0_103 = arith.constant 0 : index
    %264 = vector.load %arg5[%c40_102, %c0_103] : memref<64x128xf32, #tpu.memory_space<vmem>>, vector<8x128xf32>
    tpu.vector_store %arg5[%c40_102, %c0_103], %263 {strides = array<i32>} : memref<64x128xf32, #tpu.memory_space<vmem>>, vector<8x128xf32>,
    %c48_104 = arith.constant 48 : index
    %c0_105 = arith.constant 0 : index
    %265 = vector.load %arg3[%c48_104, %c0_105] : memref<64x128xf32, #tpu.memory_space<vmem>>, vector<8x128xf32>
    %266 = arith.mulf %265, %263 : vector<8x128xf32>
    %c48_106 = arith.constant 48 : index
    %c0_107 = arith.constant 0 : index
    %267 = vector.load %arg4[%c48_106, %c0_107] : memref<64x128xf32, #tpu.memory_space<vmem>>, vector<8x128xf32>
    %268 = arith.addf %266, %267 : vector<8x128xf32>
    %c48_108 = arith.constant 48 : index
    %c0_109 = arith.constant 0 : index
    %269 = vector.load %arg5[%c48_108, %c0_109] : memref<64x128xf32, #tpu.memory_space<vmem>>, vector<8x128xf32>
    tpu.vector_store %arg5[%c48_108, %c0_109], %268 {strides = array<i32>} : memref<64x128xf32, #tpu.memory_space<vmem>>, vector<8x128xf32>,
    %c56_110 = arith.constant 56 : index
    %c0_111 = arith.constant 0 : index
    %270 = vector.load %arg3[%c56_110, %c0_111] : memref<64x128xf32, #tpu.memory_space<vmem>>, vector<8x128xf32>
    %271 = arith.mulf %270, %268 : vector<8x128xf32>
    %c56_112 = arith.constant 56 : index
    %c0_113 = arith.constant 0 : index
    %272 = vector.load %arg4[%c56_112, %c0_113] : memref<64x128xf32, #tpu.memory_space<vmem>>, vector<8x128xf32>
    %273 = arith.addf %271, %272 : vector<8x128xf32>
    %c56_114 = arith.constant 56 : index
    %c0_115 = arith.constant 0 : index
    %274 = vector.load %arg5[%c56_114, %c0_115] : memref<64x128xf32, #tpu.memory_space<vmem>>, vector<8x128xf32>
    tpu.vector_store %arg5[%c56_114, %c0_115], %273 {strides = array<i32>} : memref<64x128xf32, #tpu.memory_space<vmem>>, vector<8x128xf32>,
    %275 = vector.extract_strided_slice %95 {offsets = [16, 0], sizes = [8, 1], strides = [1, 1]} : vector<32x8xf32> to vector<8x1xf32>
    %276 = vector.broadcast %275 : vector<8x1xf32> to vector<8x128xf32>
    %277 = arith.mulf %276, %103 : vector<8x128xf32>
    %278 = vector.extract_strided_slice %95 {offsets = [24, 0], sizes = [8, 1], strides = [1, 1]} : vector<32x8xf32> to vector<8x1xf32>
    %279 = vector.broadcast %278 : vector<8x1xf32> to vector<8x128xf32>
    %280 = arith.mulf %279, %105 : vector<8x128xf32>
    %281 = arith.addf %277, %280 : vector<8x128xf32>
    %c0_116 = arith.constant 0 : index
    %c0_117 = arith.constant 0 : index
    %282 = vector.load %arg5[%c0_116, %c0_117] : memref<64x128xf32, #tpu.memory_space<vmem>>, vector<8x128xf32>
    %283 = arith.mulf %281, %282 : vector<8x128xf32>
    %cst_118 = arith.constant dense<0.000000e+00> : vector<128xf32>
    %284 = vector.multi_reduction <add>, %283, %cst_118 [0] : vector<8x128xf32> to vector<128xf32>
    %285 = vector.shape_cast %284 : vector<128xf32> to vector<1x128xf32>
    %286 = vector.extract_strided_slice %95 {offsets = [16, 1], sizes = [8, 1], strides = [1, 1]} : vector<32x8xf32> to vector<8x1xf32>
    %287 = vector.broadcast %286 : vector<8x1xf32> to vector<8x128xf32>
    %288 = arith.mulf %287, %103 : vector<8x128xf32>
    %289 = vector.extract_strided_slice %95 {offsets = [24, 1], sizes = [8, 1], strides = [1, 1]} : vector<32x8xf32> to vector<8x1xf32>
    %290 = vector.broadcast %289 : vector<8x1xf32> to vector<8x128xf32>
    %291 = arith.mulf %290, %105 : vector<8x128xf32>
    %292 = arith.addf %288, %291 : vector<8x128xf32>
    %c8_119 = arith.constant 8 : index
    %c0_120 = arith.constant 0 : index
    %293 = vector.load %arg5[%c8_119, %c0_120] : memref<64x128xf32, #tpu.memory_space<vmem>>, vector<8x128xf32>
    %294 = arith.mulf %292, %293 : vector<8x128xf32>
    %cst_121 = arith.constant dense<0.000000e+00> : vector<128xf32>
    %295 = vector.multi_reduction <add>, %294, %cst_121 [0] : vector<8x128xf32> to vector<128xf32>
    %296 = vector.shape_cast %295 : vector<128xf32> to vector<1x128xf32>
    %297 = vector.extract_strided_slice %95 {offsets = [16, 2], sizes = [8, 1], strides = [1, 1]} : vector<32x8xf32> to vector<8x1xf32>
    %298 = vector.broadcast %297 : vector<8x1xf32> to vector<8x128xf32>
    %299 = arith.mulf %298, %103 : vector<8x128xf32>
    %300 = vector.extract_strided_slice %95 {offsets = [24, 2], sizes = [8, 1], strides = [1, 1]} : vector<32x8xf32> to vector<8x1xf32>
    %301 = vector.broadcast %300 : vector<8x1xf32> to vector<8x128xf32>
    %302 = arith.mulf %301, %105 : vector<8x128xf32>
    %303 = arith.addf %299, %302 : vector<8x128xf32>
    %c16_122 = arith.constant 16 : index
    %c0_123 = arith.constant 0 : index
    %304 = vector.load %arg5[%c16_122, %c0_123] : memref<64x128xf32, #tpu.memory_space<vmem>>, vector<8x128xf32>
    %305 = arith.mulf %303, %304 : vector<8x128xf32>
    %cst_124 = arith.constant dense<0.000000e+00> : vector<128xf32>
    %306 = vector.multi_reduction <add>, %305, %cst_124 [0] : vector<8x128xf32> to vector<128xf32>
    %307 = vector.shape_cast %306 : vector<128xf32> to vector<1x128xf32>
    %308 = vector.extract_strided_slice %95 {offsets = [16, 3], sizes = [8, 1], strides = [1, 1]} : vector<32x8xf32> to vector<8x1xf32>
    %309 = vector.broadcast %308 : vector<8x1xf32> to vector<8x128xf32>
    %310 = arith.mulf %309, %103 : vector<8x128xf32>
    %311 = vector.extract_strided_slice %95 {offsets = [24, 3], sizes = [8, 1], strides = [1, 1]} : vector<32x8xf32> to vector<8x1xf32>
    %312 = vector.broadcast %311 : vector<8x1xf32> to vector<8x128xf32>
    %313 = arith.mulf %312, %105 : vector<8x128xf32>
    %314 = arith.addf %310, %313 : vector<8x128xf32>
    %c24_125 = arith.constant 24 : index
    %c0_126 = arith.constant 0 : index
    %315 = vector.load %arg5[%c24_125, %c0_126] : memref<64x128xf32, #tpu.memory_space<vmem>>, vector<8x128xf32>
    %316 = arith.mulf %314, %315 : vector<8x128xf32>
    %cst_127 = arith.constant dense<0.000000e+00> : vector<128xf32>
    %317 = vector.multi_reduction <add>, %316, %cst_127 [0] : vector<8x128xf32> to vector<128xf32>
    %318 = vector.shape_cast %317 : vector<128xf32> to vector<1x128xf32>
    %319 = vector.extract_strided_slice %95 {offsets = [16, 4], sizes = [8, 1], strides = [1, 1]} : vector<32x8xf32> to vector<8x1xf32>
    %320 = vector.broadcast %319 : vector<8x1xf32> to vector<8x128xf32>
    %321 = arith.mulf %320, %103 : vector<8x128xf32>
    %322 = vector.extract_strided_slice %95 {offsets = [24, 4], sizes = [8, 1], strides = [1, 1]} : vector<32x8xf32> to vector<8x1xf32>
    %323 = vector.broadcast %322 : vector<8x1xf32> to vector<8x128xf32>
    %324 = arith.mulf %323, %105 : vector<8x128xf32>
    %325 = arith.addf %321, %324 : vector<8x128xf32>
    %c32_128 = arith.constant 32 : index
    %c0_129 = arith.constant 0 : index
    %326 = vector.load %arg5[%c32_128, %c0_129] : memref<64x128xf32, #tpu.memory_space<vmem>>, vector<8x128xf32>
    %327 = arith.mulf %325, %326 : vector<8x128xf32>
    %cst_130 = arith.constant dense<0.000000e+00> : vector<128xf32>
    %328 = vector.multi_reduction <add>, %327, %cst_130 [0] : vector<8x128xf32> to vector<128xf32>
    %329 = vector.shape_cast %328 : vector<128xf32> to vector<1x128xf32>
    %330 = vector.extract_strided_slice %95 {offsets = [16, 5], sizes = [8, 1], strides = [1, 1]} : vector<32x8xf32> to vector<8x1xf32>
    %331 = vector.broadcast %330 : vector<8x1xf32> to vector<8x128xf32>
    %332 = arith.mulf %331, %103 : vector<8x128xf32>
    %333 = vector.extract_strided_slice %95 {offsets = [24, 5], sizes = [8, 1], strides = [1, 1]} : vector<32x8xf32> to vector<8x1xf32>
    %334 = vector.broadcast %333 : vector<8x1xf32> to vector<8x128xf32>
    %335 = arith.mulf %334, %105 : vector<8x128xf32>
    %336 = arith.addf %332, %335 : vector<8x128xf32>
    %c40_131 = arith.constant 40 : index
    %c0_132 = arith.constant 0 : index
    %337 = vector.load %arg5[%c40_131, %c0_132] : memref<64x128xf32, #tpu.memory_space<vmem>>, vector<8x128xf32>
    %338 = arith.mulf %336, %337 : vector<8x128xf32>
    %cst_133 = arith.constant dense<0.000000e+00> : vector<128xf32>
    %339 = vector.multi_reduction <add>, %338, %cst_133 [0] : vector<8x128xf32> to vector<128xf32>
    %340 = vector.shape_cast %339 : vector<128xf32> to vector<1x128xf32>
    %341 = vector.extract_strided_slice %95 {offsets = [16, 6], sizes = [8, 1], strides = [1, 1]} : vector<32x8xf32> to vector<8x1xf32>
    %342 = vector.broadcast %341 : vector<8x1xf32> to vector<8x128xf32>
    %343 = arith.mulf %342, %103 : vector<8x128xf32>
    %344 = vector.extract_strided_slice %95 {offsets = [24, 6], sizes = [8, 1], strides = [1, 1]} : vector<32x8xf32> to vector<8x1xf32>
    %345 = vector.broadcast %344 : vector<8x1xf32> to vector<8x128xf32>
    %346 = arith.mulf %345, %105 : vector<8x128xf32>
    %347 = arith.addf %343, %346 : vector<8x128xf32>
    %c48_134 = arith.constant 48 : index
    %c0_135 = arith.constant 0 : index
    %348 = vector.load %arg5[%c48_134, %c0_135] : memref<64x128xf32, #tpu.memory_space<vmem>>, vector<8x128xf32>
    %349 = arith.mulf %347, %348 : vector<8x128xf32>
    %cst_136 = arith.constant dense<0.000000e+00> : vector<128xf32>
    %350 = vector.multi_reduction <add>, %349, %cst_136 [0] : vector<8x128xf32> to vector<128xf32>
    %351 = vector.shape_cast %350 : vector<128xf32> to vector<1x128xf32>
    %352 = vector.extract_strided_slice %95 {offsets = [16, 7], sizes = [8, 1], strides = [1, 1]} : vector<32x8xf32> to vector<8x1xf32>
    %353 = vector.broadcast %352 : vector<8x1xf32> to vector<8x128xf32>
    %354 = arith.mulf %353, %103 : vector<8x128xf32>
    %355 = vector.extract_strided_slice %95 {offsets = [24, 7], sizes = [8, 1], strides = [1, 1]} : vector<32x8xf32> to vector<8x1xf32>
    %356 = vector.broadcast %355 : vector<8x1xf32> to vector<8x128xf32>
    %357 = arith.mulf %356, %105 : vector<8x128xf32>
    %358 = arith.addf %354, %357 : vector<8x128xf32>
    %c56_137 = arith.constant 56 : index
    %c0_138 = arith.constant 0 : index
    %359 = vector.load %arg5[%c56_137, %c0_138] : memref<64x128xf32, #tpu.memory_space<vmem>>, vector<8x128xf32>
    %360 = arith.mulf %358, %359 : vector<8x128xf32>
    %cst_139 = arith.constant dense<0.000000e+00> : vector<128xf32>
    %361 = vector.multi_reduction <add>, %360, %cst_139 [0] : vector<8x128xf32> to vector<128xf32>
    %362 = vector.shape_cast %361 : vector<128xf32> to vector<1x128xf32>
    %363 = tpu.concatenate %285, %296, %307, %318, %329, %340, %351, %362 in 0 : vector<1x128xf32>, vector<1x128xf32>, vector<1x128xf32>, vector<1x128xf32>, vector<1x128xf32>, vector<1x128xf32>, vector<1x128xf32>, vector<1x128xf32> -> vector<8x128xf32>
    %c304 = arith.constant 304 : index
    %c0_140 = arith.constant 0 : index
    %364 = vector.load %arg1[%c304, %c0_140] : memref<360x256xf32, #tpu.memory_space<vmem>>, vector<1x128xf32>
    %365 = vector.broadcast %364 : vector<1x128xf32> to vector<8x128xf32>
    %366 = arith.mulf %365, %82 : vector<8x128xf32>
    %367 = arith.addf %363, %366 : vector<8x128xf32>
    %368 = arith.mulf %367, %83 : vector<8x128xf32>
    %c312 = arith.constant 312 : index
    %c0_141 = arith.constant 0 : index
    %369 = vector.load %arg1[%c312, %c0_141] : memref<360x256xf32, #tpu.memory_space<vmem>>, vector<16x128xf32>
    %cst_142 = arith.constant dense<0.000000e+00> : vector<16x8xf32>
    %370 = tpu.matmul %369, %368, %cst_142 {dimension_numbers = #tpu.dot_dimension_numbers<[1], [1], [0], [0], [0, 0, 1, 0], [], []>, precision = #tpu.contract_precision<fp32>} : vector<16x128xf32>, vector<8x128xf32>, vector<16x8xf32> -> vector<16x8xf32>
    %c328 = arith.constant 328 : index
    %c0_143 = arith.constant 0 : index
    %371 = vector.load %arg1[%c328, %c0_143] : memref<360x256xf32, #tpu.memory_space<vmem>>, vector<16x64xf32>
    %cst_144 = arith.constant dense<0.000000e+00> : vector<16x8xf32>
    %372 = tpu.matmul %371, %43, %cst_144 {dimension_numbers = #tpu.dot_dimension_numbers<[1], [1], [0], [0], [0, 0, 1, 0], [], []>, precision = #tpu.contract_precision<fp32>} : vector<16x64xf32>, vector<8x64xf32>, vector<16x8xf32> -> vector<16x8xf32>
    %373 = arith.addf %370, %372 : vector<16x8xf32>
    %c344 = arith.constant 344 : index
    %c0_145 = arith.constant 0 : index
    %374 = vector.load %arg1[%c344, %c0_145] : memref<360x256xf32, #tpu.memory_space<vmem>>, vector<16x1xf32>
    %375 = vector.broadcast %374 : vector<16x1xf32> to vector<16x8xf32>
    %376 = arith.addf %373, %375 : vector<16x8xf32>
    %377 = vector.extract_strided_slice %376 {offsets = [0, 0], sizes = [8, 8], strides = [1, 1]} : vector<16x8xf32> to vector<8x8xf32>
    %378 = vector.broadcast %15 : vector<1x8xf32> to vector<8x8xf32>
    %379 = arith.mulf %377, %378 : vector<8x8xf32>
    %380 = vector.broadcast %5 : vector<1x8xf32> to vector<8x8xf32>
    %381 = arith.addf %379, %380 : vector<8x8xf32>
    %c0_146 = arith.constant 0 : index
    %c0_147 = arith.constant 0 : index
    %c0_148 = arith.constant 0 : index
    %382 = vector.load %arg2[%c0_146, %c0_147, %c0_148] : memref<2x8x8xf32, #tpu.memory_space<vmem>>, vector<1x8x8xf32>
    %383 = vector.shape_cast %382 : vector<1x8x8xf32> to vector<8x8xf32>
    %384 = vector.shape_cast %381 : vector<8x8xf32> to vector<1x8x8xf32>
    tpu.vector_store %arg2[%c0_146, %c0_147, %c0_148], %384 {strides = array<i32>} : memref<2x8x8xf32, #tpu.memory_space<vmem>>, vector<1x8x8xf32>,
    %385 = vector.extract_strided_slice %376 {offsets = [8, 0], sizes = [8, 8], strides = [1, 1]} : vector<16x8xf32> to vector<8x8xf32>
    %386 = vector.broadcast %33 : vector<1x8xf32> to vector<8x8xf32>
    %387 = arith.mulf %385, %386 : vector<8x8xf32>
    %388 = vector.broadcast %23 : vector<1x8xf32> to vector<8x8xf32>
    %389 = arith.addf %387, %388 : vector<8x8xf32>
    %c1_149 = arith.constant 1 : index
    %c0_150 = arith.constant 0 : index
    %c0_151 = arith.constant 0 : index
    %390 = vector.load %arg2[%c1_149, %c0_150, %c0_151] : memref<2x8x8xf32, #tpu.memory_space<vmem>>, vector<1x8x8xf32>
    %391 = vector.shape_cast %390 : vector<1x8x8xf32> to vector<8x8xf32>
    %392 = vector.shape_cast %389 : vector<8x8xf32> to vector<1x8x8xf32>
    tpu.vector_store %arg2[%c1_149, %c0_150, %c0_151], %392 {strides = array<i32>} : memref<2x8x8xf32, #tpu.memory_space<vmem>>, vector<1x8x8xf32>,
    return
  }
}

</mosaic_0001>

<llo_original>
// kernel: model_forward.1
$region0: #{model_forward.1}
  #allocation0 [shape = 'u32[]', space=smem, size = 0x4, offset = 0x4, fixed_abs, tag = 'smem constant byte address 0x4 - core index']
  #allocation1 [shape = 'u32[144,128]{1,0:T(1,128)}', space=vmem, size = 0x12000, scoped, tag = 'internal scratch']
  #allocation2 [shape = 'f32[64,128]{1,0:T(8,128)}', space=vmem, size = 0x8000, scoped, tag = 'scratch operand']
  #allocation3 [shape = 'f32[64,128]{1,0:T(8,128)}', space=vmem, size = 0x8000, scoped, tag = 'scratch operand']
  #allocation4 [shape = 'f32[64,128]{1,0:T(8,128)}', space=vmem, size = 0x8000, scoped, tag = 'scratch operand']
  %s0 = inlined_call_operand.vmem [shape: f32[2,16,8], index: 0, kind: input, shape index: {}]
  %s1 = inlined_call_operand.hbm [shape: f32[360,256], index: 1, kind: input, shape index: {}]
  %s2 = inlined_call_operand.hbm [shape: f32[2,8,8], index: 2, kind: output, shape index: {}]
  %s3 = sld [smem:[#allocation0]]
  $region22: #{model_forward.1} parent=0
    _
  %s5 = ssub.s32 1, %s3
  %s6 = scalar_select 0, %s5, %s3
  $region1: #{model_forward.1} parent=0
    #allocation5 [shape = 'u8[368640]{0}', space=vmem, size = 0x5a000, scoped, tag = 'input window, operand 1, single buffered']
    #allocation6 [shape = 's32[1]{0}', space=sflag, size = 0x4, scoped, tag = 'scoped memory for model_forward.1']
    #allocation7 [shape = 's32[1]{0}', space=sflag, size = 0x4, scoped, tag = 'scoped memory for model_forward.1']
    #allocation8 [shape = 'u8[8192]{0}', space=vmem, size = 0x2000, scoped, tag = 'output window, operand 0, single buffered']
    %7 = vsyncpa [#allocation6], 0
    %8 = vsyncpa [#allocation7], 0
    // Predicated region
    $region2: #{model_forward.1} parent=1 // pred_check
      _
    $region3: #{model_forward.1} parent=1 // pred_check_branch
      %10 = sbr.rel (0) target = $region5
    $region4: #{model_forward.1} parent=1 // pred_region
      _
    $region5: #{model_forward.1} parent=1 // pred_fallthru
      _
    // Predicated region
    $region6: #{model_forward.1} parent=1 // pred_check
      _
    $region7: #{model_forward.1} parent=1 // pred_check_branch
      %12 = sbr.rel (0) target = $region9
    $region8: #{model_forward.1} parent=1 // pred_region
      %s14 = ssub.s32 11520, 11520
      %15 = vsyncadd [#allocation6], %s14
      %s16 = sshll.u32 [#allocation5], 4
      %s17 = int_to_ptr.vmem [resolvable:$true] %s16
      %22 = dma.hbm_to_vmem [thread:$0]  %s1, 11520, %s17, [#allocation6], 256, 256, 16
    $region9: #{model_forward.1} parent=1 // pred_fallthru
      _
    // Predicated region
    $region10: #{model_forward.1} parent=1 // pred_check
      _
    $region11: #{model_forward.1} parent=1 // pred_check_branch
      %24 = sbr.rel (0) target = $region13
    $region12: #{model_forward.1} parent=1 // pred_region
      %25 = dma.done [#allocation6], 11520
    $region13: #{model_forward.1} parent=1 // pred_fallthru
      _
    %v26 = vld [vmem:[%s0] sm:$0xff]
    %v27 = vld [vmem:[%s0 + $0x8] sm:$0xff]
    %vm28 = vcmask 64512
    %v29 = vsel %vm28, %v26, 0.0
    %v30 = vsel %vm28, %v27, 0.0
    %v31 = vadd.f32 %v29, %v30
    %v32 = vrot.slane %v31, 4
    %v33 = vadd.f32 %v31, %v32
    %v34 = vrot.slane %v33, 2
    %v35 = vadd.f32 %v33, %v34
    %v36 = vrot.slane %v35, 1
    %v37 = vadd.f32 %v35, %v36
    %v38 = vrcp.pop 16.0
    %v39 = vmul.f32 %v37, %v38
    %v40 = vsub.f32 %v26, %v39
    %v41 = vsub.f32 %v27, %v39
    %v42 = vmul.f32 %v40, %v40
    %v43 = vmul.f32 %v41, %v41
    %v44 = vsel %vm28, %v42, 0.0
    %v45 = vsel %vm28, %v43, 0.0
    %v46 = vadd.f32 %v44, %v45
    %v47 = vrot.slane %v46, 4
    %v48 = vadd.f32 %v46, %v47
    %v49 = vrot.slane %v48, 2
    %v50 = vadd.f32 %v48, %v49
    %v51 = vrot.slane %v50, 1
    %v52 = vadd.f32 %v50, %v51
    %v53 = vmul.f32 %v52, %v38
    %v54 = vadd.f32 %v53, 1e-05
    %v55 = vrsqrt.pop %v54
    %v56 = vmul.f32 %v54, %v55
    %vm57 = vcmp.eq.f32.partialorder %v54, inf
    %v58 = vsel %vm57, %v54, %v56
    %vm59 = vcmp.eq.f32.partialorder %v54, 0.0
    %v60 = vand.u32 %v54, 2147483648
    %v61 = vsel %vm59, %v60, %v58
    %v62 = vrcp.pop %v61
    %v63 = vmul.f32 %v40, %v62
    %v64 = vmul.f32 %v41, %v62
    %s65 = scalar_lea.vmem %s0, 16
    %v66 = vld [vmem:[%s65] sm:$0xff]
    %v67 = vld [vmem:[%s65 + $0x8] sm:$0xff]
    %v68 = vsel %vm28, %v66, 0.0
    %v69 = vsel %vm28, %v67, 0.0
    %v70 = vadd.f32 %v68, %v69
    %v71 = vrot.slane %v70, 4
    %v72 = vadd.f32 %v70, %v71
    %v73 = vrot.slane %v72, 2
    %v74 = vadd.f32 %v72, %v73
    %v75 = vrot.slane %v74, 1
    %v76 = vadd.f32 %v74, %v75
    %v77 = vmul.f32 %v76, %v38
    %v78 = vsub.f32 %v66, %v77
    %v79 = vsub.f32 %v67, %v77
    %v80 = vmul.f32 %v78, %v78
    %v81 = vmul.f32 %v79, %v79
    %v82 = vsel %vm28, %v80, 0.0
    %v83 = vsel %vm28, %v81, 0.0
    %v84 = vadd.f32 %v82, %v83
    %v85 = vrot.slane %v84, 4
    %v86 = vadd.f32 %v84, %v85
    %v87 = vrot.slane %v86, 2
    %v88 = vadd.f32 %v86, %v87
    %v89 = vrot.slane %v88, 1
    %v90 = vadd.f32 %v88, %v89
    %v91 = vmul.f32 %v90, %v38
    %v92 = vadd.f32 %v91, 1e-05
    %v93 = vrsqrt.pop %v92
    %v94 = vmul.f32 %v92, %v93
    %vm95 = vcmp.eq.f32.partialorder %v92, inf
    %v96 = vsel %vm95, %v92, %v94
    %vm97 = vcmp.eq.f32.partialorder %v92, 0.0
    %v98 = vand.u32 %v92, 2147483648
    %v99 = vsel %vm97, %v98, %v96
    %v100 = vrcp.pop %v99
    %v101 = vmul.f32 %v78, %v100
    %v102 = vmul.f32 %v79, %v100
    %v103 = vld [vmem:[#allocation5] sm:$0xff]
    %v105 = vsel %vm28, %v103, 0
    %v108 = vsel %vm28, %v63, 0
    %v111 = vsel %vm28, %v64, 0
    %v114 = vsel %vm28, %v101, 0
    %v117 = vsel %vm28, %v102, 0
    %119 = vmatprep.subr.mxu0 0.0
    %120 = vmatpush1.xpose.msra.mxu0 0.0
    %121 = vmatprep.subr.mxu0 0.0
    %122 = vmatpush1.xpose.msra.mxu0 0.0
    %123 = vmatprep.subr.mxu0 0.0
    %124 = vmatpush1.xpose.msra.mxu0 0.0
    %125 = vmatprep.subr.mxu0 0.0
    %126 = vmatpush1.xpose.msra.mxu0 0.0
    %127 = vmatprep.subr.mxu0 0.0
    %128 = vmatpush1.xpose.msra.mxu0 0.0
    %129 = vmatprep.subr.mxu0 0.0
    %130 = vmatpush1.xpose.msra.mxu0 0.0
    %131 = vmatprep.subr.mxu0 0.0
    %132 = vmatpush1.xpose.msra.mxu0 0.0
    %133 = vmatprep.subr.mxu0 0.0
    %134 = vmatpush1.xpose.msra.mxu0 0.0
    %135 = vmatprep.subr.mxu0 0.0
    %136 = vmatpush1.xpose.msra.mxu0 0.0
    %137 = vmatprep.subr.mxu0 0.0
    %138 = vmatpush1.xpose.msra.mxu0 0.0
    %139 = vmatprep.subr.mxu0 0.0
    %140 = vmatpush1.xpose.msra.mxu0 0.0
    %141 = vmatprep.subr.mxu0 0.0
    %142 = vmatpush1.xpose.msra.mxu0 0.0
    %143 = vmatprep.subr.mxu0 0.0
    %v144 = vand.u32 %v117, 4294901760
    %145 = vmatpush1.xpose.msra.mxu0 %v144
    %146 = vmatprep.subr.mxu0 0.0
    %v147 = vand.u32 %v114, 4294901760
    %148 = vmatpush1.xpose.msra.mxu0 %v147
    %149 = vmatprep.subr.mxu0 0.0
    %v150 = vand.u32 %v111, 4294901760
    %151 = vmatpush1.xpose.msra.mxu0 %v150
    %152 = vmatprep.subr.mxu0 0.0
    %v153 = vand.u32 %v108, 4294901760
    %154 = vmatpush1.xpose.msra.mxu0 %v153
    %155 = vmatprep.subr.mxu0 0.0
    %156 = vmatpush2.xpose.msra.mxu0 0.0
    %157 = vmatprep.subr.mxu0 0.0
    %158 = vmatpush2.xpose.msra.mxu0 0.0
    %159 = vmatprep.subr.mxu0 0.0
    %160 = vmatpush2.xpose.msra.mxu0 0.0
    %161 = vmatprep.subr.mxu0 0.0
    %162 = vmatpush2.xpose.msra.mxu0 0.0
    %163 = vmatprep.subr.mxu0 0.0
    %164 = vmatpush2.xpose.msra.mxu0 0.0
    %165 = vmatprep.subr.mxu0 0.0
    %166 = vmatpush2.xpose.msra.mxu0 0.0
    %167 = vmatprep.subr.mxu0 0.0
    %168 = vmatpush2.xpose.msra.mxu0 0.0
    %169 = vmatprep.subr.mxu0 0.0
    %170 = vmatpush2.xpose.msra.mxu0 0.0
    %171 = vmatprep.subr.mxu0 0.0
    %172 = vmatpush2.xpose.msra.mxu0 0.0
    %173 = vmatprep.subr.mxu0 0.0
    %174 = vmatpush2.xpose.msra.mxu0 0.0
    %175 = vmatprep.subr.mxu0 0.0
    %176 = vmatpush2.xpose.msra.mxu0 0.0
    %177 = vmatprep.subr.mxu0 0.0
    %178 = vmatpush2.xpose.msra.mxu0 0.0
    %179 = vmatprep.subr.mxu0 0.0
    %180 = vmatpush2.xpose.msra.mxu0 0.0
    %181 = vmatprep.subr.mxu0 0.0
    %182 = vmatpush2.xpose.msra.mxu0 0.0
    %183 = vmatprep.subr.mxu0 0.0
    %184 = vmatpush2.xpose.msra.mxu0 0.0
    %185 = vmatprep.subr.mxu0 0.0
    %186 = vmatpush2.xpose.msra.mxu0 0.0
    %187 = vmatprep.mubr.f32.mxu0 0.0
    %v188 = vand.u32 %v105, 4294901760
    %v189 = vsub.f32 %v105, %v188
    %v190 = vand.u32 %v189, 4294901760
    %v191 = vsub.f32 %v189, %v190
    %v192 = vand.u32 %v191, 4294901760
    %193 = vmatmul.mubr.f32.gmra.mxu0 %v192
    %v194 = vpop.f32.mrf.mxu0
    %v195 = vadd.f32 0.0, %v194
    %v196 = vpop.f32.mrf.mxu0
    %197 = vdwg.mxu0
    %198 = vmatprep.subr.mxu0 0.0
    %199 = vmatpush1.xpose.msra.mxu0 0.0
    %200 = vmatprep.subr.mxu0 0.0
    %201 = vmatpush1.xpose.msra.mxu0 0.0
    %202 = vmatprep.subr.mxu0 0.0
    %203 = vmatpush1.xpose.msra.mxu0 0.0
    %204 = vmatprep.subr.mxu0 0.0
    %205 = vmatpush1.xpose.msra.mxu0 0.0
    %206 = vmatprep.subr.mxu0 0.0
    %207 = vmatpush1.xpose.msra.mxu0 0.0
    %208 = vmatprep.subr.mxu0 0.0
    %209 = vmatpush1.xpose.msra.mxu0 0.0
    %210 = vmatprep.subr.mxu0 0.0
    %211 = vmatpush1.xpose.msra.mxu0 0.0
    %212 = vmatprep.subr.mxu0 0.0
    %213 = vmatpush1.xpose.msra.mxu0 0.0
    %214 = vmatprep.subr.mxu0 0.0
    %215 = vmatpush1.xpose.msra.mxu0 0.0
    %216 = vmatprep.subr.mxu0 0.0
    %217 = vmatpush1.xpose.msra.mxu0 0.0
    %218 = vmatprep.subr.mxu0 0.0
    %219 = vmatpush1.xpose.msra.mxu0 0.0
    %220 = vmatprep.subr.mxu0 0.0
    %221 = vmatpush1.xpose.msra.mxu0 0.0
    %222 = vmatprep.subr.mxu0 0.0
    %v223 = vand.u32 %v117, 4294901760
    %v224 = vsub.f32 %v117, %v223
    %v225 = vand.u32 %v224, 4294901760
    %v226 = vsub.f32 %v224, %v225
    %v227 = vand.u32 %v226, 4294901760
    %228 = vmatpush1.xpose.msra.mxu0 %v227
    %229 = vmatprep.subr.mxu0 0.0
    %v230 = vand.u32 %v114, 4294901760
    %v231 = vsub.f32 %v114, %v230
    %v232 = vand.u32 %v231, 4294901760
    %v233 = vsub.f32 %v231, %v232
    %v234 = vand.u32 %v233, 4294901760
    %235 = vmatpush1.xpose.msra.mxu0 %v234
    %236 = vmatprep.subr.mxu0 0.0
    %v237 = vand.u32 %v111, 4294901760
    %v238 = vsub.f32 %v111, %v237
    %v239 = vand.u32 %v238, 4294901760
    %v240 = vsub.f32 %v238, %v239
    %v241 = vand.u32 %v240, 4294901760
    %242 = vmatpush1.xpose.msra.mxu0 %v241
    %243 = vmatprep.subr.mxu0 0.0
    %v244 = vand.u32 %v108, 4294901760
    %v245 = vsub.f32 %v108, %v244
    %v246 = vand.u32 %v245, 4294901760
    %v247 = vsub.f32 %v245, %v246
    %v248 = vand.u32 %v247, 4294901760
    %249 = vmatpush1.xpose.msra.mxu0 %v248
    %250 = vmatprep.subr.mxu0 0.0
    %251 = vmatpush2.xpose.msra.mxu0 0.0
    %252 = vmatprep.subr.mxu0 0.0
    %253 = vmatpush2.xpose.msra.mxu0 0.0
    %254 = vmatprep.subr.mxu0 0.0
    %255 = vmatpush2.xpose.msra.mxu0 0.0
    %256 = vmatprep.subr.mxu0 0.0
    %257 = vmatpush2.xpose.msra.mxu0 0.0
    %258 = vmatprep.subr.mxu0 0.0
    %259 = vmatpush2.xpose.msra.mxu0 0.0
    %260 = vmatprep.subr.mxu0 0.0
    %261 = vmatpush2.xpose.msra.mxu0 0.0
    %262 = vmatprep.subr.mxu0 0.0
    %263 = vmatpush2.xpose.msra.mxu0 0.0
    %264 = vmatprep.subr.mxu0 0.0
    %265 = vmatpush2.xpose.msra.mxu0 0.0
    %266 = vmatprep.subr.mxu0 0.0
    %267 = vmatpush2.xpose.msra.mxu0 0.0
    %268 = vmatprep.subr.mxu0 0.0
    %269 = vmatpush2.xpose.msra.mxu0 0.0
    %270 = vmatprep.subr.mxu0 0.0
    %271 = vmatpush2.xpose.msra.mxu0 0.0
    %272 = vmatprep.subr.mxu0 0.0
    %273 = vmatpush2.xpose.msra.mxu0 0.0
    %274 = vmatprep.subr.mxu0 0.0
    %275 = vmatpush2.xpose.msra.mxu0 0.0
    %276 = vmatprep.subr.mxu0 0.0
    %277 = vmatpush2.xpose.msra.mxu0 0.0
    %278 = vmatprep.subr.mxu0 0.0
    %279 = vmatpush2.xpose.msra.mxu0 0.0
    %280 = vmatprep.subr.mxu0 0.0
    %281 = vmatpush2.xpose.msra.mxu0 0.0
    %282 = vmatprep.mubr.f32.mxu0 0.0
    %v283 = vand.u32 %v105, 4294901760
    %284 = vmatmul.mubr.f32.gmra.mxu0 %v283
    %v285 = vpop.f32.mrf.mxu0
    %v286 = vadd.f32 %v195, %v285
    %v287 = vpop.f32.mrf.mxu0
    %288 = vdwg.mxu0
    %289 = vmatprep.subr.mxu0 0.0
    %290 = vmatpush1.xpose.msra.mxu0 0.0
    %291 = vmatprep.subr.mxu0 0.0
    %292 = vmatpush1.xpose.msra.mxu0 0.0
    %293 = vmatprep.subr.mxu0 0.0
    %294 = vmatpush1.xpose.msra.mxu0 0.0
    %295 = vmatprep.subr.mxu0 0.0
    %296 = vmatpush1.xpose.msra.mxu0 0.0
    %297 = vmatprep.subr.mxu0 0.0
    %298 = vmatpush1.xpose.msra.mxu0 0.0
    %299 = vmatprep.subr.mxu0 0.0
    %300 = vmatpush1.xpose.msra.mxu0 0.0
    %301 = vmatprep.subr.mxu0 0.0
    %302 = vmatpush1.xpose.msra.mxu0 0.0
    %303 = vmatprep.subr.mxu0 0.0
    %304 = vmatpush1.xpose.msra.mxu0 0.0
    %305 = vmatprep.subr.mxu0 0.0
    %306 = vmatpush1.xpose.msra.mxu0 0.0
    %307 = vmatprep.subr.mxu0 0.0
    %308 = vmatpush1.xpose.msra.mxu0 0.0
    %309 = vmatprep.subr.mxu0 0.0
    %310 = vmatpush1.xpose.msra.mxu0 0.0
    %311 = vmatprep.subr.mxu0 0.0
    %312 = vmatpush1.xpose.msra.mxu0 0.0
    %313 = vmatprep.subr.mxu0 0.0
    %v314 = vand.u32 %v117, 4294901760
    %v315 = vsub.f32 %v117, %v314
    %316 = vmatpush1.xpose.msra.mxu0 %v315
    %317 = vmatprep.subr.mxu0 0.0
    %v318 = vand.u32 %v114, 4294901760
    %v319 = vsub.f32 %v114, %v318
    %320 = vmatpush1.xpose.msra.mxu0 %v319
    %321 = vmatprep.subr.mxu0 0.0
    %v322 = vand.u32 %v111, 4294901760
    %v323 = vsub.f32 %v111, %v322
    %324 = vmatpush1.xpose.msra.mxu0 %v323
    %325 = vmatprep.subr.mxu0 0.0
    %v326 = vand.u32 %v108, 4294901760
    %v327 = vsub.f32 %v108, %v326
    %328 = vmatpush1.xpose.msra.mxu0 %v327
    %329 = vmatprep.subr.mxu0 0.0
    %330 = vmatpush2.xpose.msra.mxu0 0.0
    %331 = vmatprep.subr.mxu0 0.0
    %332 = vmatpush2.xpose.msra.mxu0 0.0
    %333 = vmatprep.subr.mxu0 0.0
    %334 = vmatpush2.xpose.msra.mxu0 0.0
    %335 = vmatprep.subr.mxu0 0.0
    %336 = vmatpush2.xpose.msra.mxu0 0.0
    %337 = vmatprep.subr.mxu0 0.0
    %338 = vmatpush2.xpose.msra.mxu0 0.0
    %339 = vmatprep.subr.mxu0 0.0
    %340 = vmatpush2.xpose.msra.mxu0 0.0
    %341 = vmatprep.subr.mxu0 0.0
    %342 = vmatpush2.xpose.msra.mxu0 0.0
    %343 = vmatprep.subr.mxu0 0.0
    %344 = vmatpush2.xpose.msra.mxu0 0.0
    %345 = vmatprep.subr.mxu0 0.0
    %346 = vmatpush2.xpose.msra.mxu0 0.0
    %347 = vmatprep.subr.mxu0 0.0
    %348 = vmatpush2.xpose.msra.mxu0 0.0
    %349 = vmatprep.subr.mxu0 0.0
    %350 = vmatpush2.xpose.msra.mxu0 0.0
    %351 = vmatprep.subr.mxu0 0.0
    %352 = vmatpush2.xpose.msra.mxu0 0.0
    %353 = vmatprep.subr.mxu0 0.0
    %354 = vmatpush2.xpose.msra.mxu0 0.0
    %355 = vmatprep.subr.mxu0 0.0
    %356 = vmatpush2.xpose.msra.mxu0 0.0
    %357 = vmatprep.subr.mxu0 0.0
    %358 = vmatpush2.xpose.msra.mxu0 0.0
    %359 = vmatprep.subr.mxu0 0.0
    %360 = vmatpush2.xpose.msra.mxu0 0.0
    %361 = vmatprep.mubr.f32.mxu0 0.0
    %v362 = vand.u32 %v105, 4294901760
    %v363 = vsub.f32 %v105, %v362
    %364 = vmatmul.mubr.f32.gmra.mxu0 %v363
    %v365 = vpop.f32.mrf.mxu0
    %v366 = vadd.f32 %v286, %v365
    %v367 = vpop.f32.mrf.mxu0
    %368 = vdwg.mxu0
    %369 = vmatprep.subr.mxu0 0.0
    %370 = vmatpush1.xpose.msra.mxu0 0.0
    %371 = vmatprep.subr.mxu0 0.0
    %372 = vmatpush1.xpose.msra.mxu0 0.0
    %373 = vmatprep.subr.mxu0 0.0
    %374 = vmatpush1.xpose.msra.mxu0 0.0
    %375 = vmatprep.subr.mxu0 0.0
    %376 = vmatpush1.xpose.msra.mxu0 0.0
    %377 = vmatprep.subr.mxu0 0.0
    %378 = vmatpush1.xpose.msra.mxu0 0.0
    %379 = vmatprep.subr.mxu0 0.0
    %380 = vmatpush1.xpose.msra.mxu0 0.0
    %381 = vmatprep.subr.mxu0 0.0
    %382 = vmatpush1.xpose.msra.mxu0 0.0
    %383 = vmatprep.subr.mxu0 0.0
    %384 = vmatpush1.xpose.msra.mxu0 0.0
    %385 = vmatprep.subr.mxu0 0.0
    %386 = vmatpush1.xpose.msra.mxu0 0.0
    %387 = vmatprep.subr.mxu0 0.0
    %388 = vmatpush1.xpose.msra.mxu0 0.0
    %389 = vmatprep.subr.mxu0 0.0
    %390 = vmatpush1.xpose.msra.mxu0 0.0
    %391 = vmatprep.subr.mxu0 0.0
    %392 = vmatpush1.xpose.msra.mxu0 0.0
    %393 = vmatprep.subr.mxu0 0.0
    %v394 = vand.u32 %v117, 4294901760
    %395 = vmatpush1.xpose.msra.mxu0 %v394
    %396 = vmatprep.subr.mxu0 0.0
    %v397 = vand.u32 %v114, 4294901760
    %398 = vmatpush1.xpose.msra.mxu0 %v397
    %399 = vmatprep.subr.mxu0 0.0
    %v400 = vand.u32 %v111, 4294901760
    %401 = vmatpush1.xpose.msra.mxu0 %v400
    %402 = vmatprep.subr.mxu0 0.0
    %v403 = vand.u32 %v108, 4294901760
    %404 = vmatpush1.xpose.msra.mxu0 %v403
    %405 = vmatprep.subr.mxu0 0.0
    %406 = vmatpush2.xpose.msra.mxu0 0.0
    %407 = vmatprep.subr.mxu0 0.0
    %408 = vmatpush2.xpose.msra.mxu0 0.0
    %409 = vmatprep.subr.mxu0 0.0
    %410 = vmatpush2.xpose.msra.mxu0 0.0
    %411 = vmatprep.subr.mxu0 0.0
    %412 = vmatpush2.xpose.msra.mxu0 0.0
    %413 = vmatprep.subr.mxu0 0.0
    %414 = vmatpush2.xpose.msra.mxu0 0.0
    %415 = vmatprep.subr.mxu0 0.0
    %416 = vmatpush2.xpose.msra.mxu0 0.0
    %417 = vmatprep.subr.mxu0 0.0
    %418 = vmatpush2.xpose.msra.mxu0 0.0
    %419 = vmatprep.subr.mxu0 0.0
    %420 = vmatpush2.xpose.msra.mxu0 0.0
    %421 = vmatprep.subr.mxu0 0.0
    %422 = vmatpush2.xpose.msra.mxu0 0.0
    %423 = vmatprep.subr.mxu0 0.0
    %424 = vmatpush2.xpose.msra.mxu0 0.0
    %425 = vmatprep.subr.mxu0 0.0
    %426 = vmatpush2.xpose.msra.mxu0 0.0
    %427 = vmatprep.subr.mxu0 0.0
    %428 = vmatpush2.xpose.msra.mxu0 0.0
    %429 = vmatprep.subr.mxu0 0.0
    %430 = vmatpush2.xpose.msra.mxu0 0.0
    %431 = vmatprep.subr.mxu0 0.0
    %432 = vmatpush2.xpose.msra.mxu0 0.0
    %433 = vmatprep.subr.mxu0 0.0
    %434 = vmatpush2.xpose.msra.mxu0 0.0
    %435 = vmatprep.subr.mxu0 0.0
    %436 = vmatpush2.xpose.msra.mxu0 0.0
    %437 = vmatprep.mubr.f32.mxu0 0.0
    %v438 = vand.u32 %v105, 4294901760
    %v439 = vsub.f32 %v105, %v438
    %v440 = vand.u32 %v439, 4294901760
    %441 = vmatmul.mubr.f32.gmra.mxu0 %v440
    %v442 = vpop.f32.mrf.mxu0
    %v443 = vadd.f32 %v366, %v442
    %v444 = vpop.f32.mrf.mxu0
    %445 = vdwg.mxu0
    %446 = vmatprep.subr.mxu0 0.0
    %447 = vmatpush1.xpose.msra.mxu0 0.0
    %448 = vmatprep.subr.mxu0 0.0
    %449 = vmatpush1.xpose.msra.mxu0 0.0
    %450 = vmatprep.subr.mxu0 0.0
    %451 = vmatpush1.xpose.msra.mxu0 0.0
    %452 = vmatprep.subr.mxu0 0.0
    %453 = vmatpush1.xpose.msra.mxu0 0.0
    %454 = vmatprep.subr.mxu0 0.0
    %455 = vmatpush1.xpose.msra.mxu0 0.0
    %456 = vmatprep.subr.mxu0 0.0
    %457 = vmatpush1.xpose.msra.mxu0 0.0
    %458 = vmatprep.subr.mxu0 0.0
    %459 = vmatpush1.xpose.msra.mxu0 0.0
    %460 = vmatprep.subr.mxu0 0.0
    %461 = vmatpush1.xpose.msra.mxu0 0.0
    %462 = vmatprep.subr.mxu0 0.0
    %463 = vmatpush1.xpose.msra.mxu0 0.0
    %464 = vmatprep.subr.mxu0 0.0
    %465 = vmatpush1.xpose.msra.mxu0 0.0
    %466 = vmatprep.subr.mxu0 0.0
    %467 = vmatpush1.xpose.msra.mxu0 0.0
    %468 = vmatprep.subr.mxu0 0.0
    %469 = vmatpush1.xpose.msra.mxu0 0.0
    %470 = vmatprep.subr.mxu0 0.0
    %v471 = vand.u32 %v117, 4294901760
    %v472 = vsub.f32 %v117, %v471
    %v473 = vand.u32 %v472, 4294901760
    %474 = vmatpush1.xpose.msra.mxu0 %v473
    %475 = vmatprep.subr.mxu0 0.0
    %v476 = vand.u32 %v114, 4294901760
    %v477 = vsub.f32 %v114, %v476
    %v478 = vand.u32 %v477, 4294901760
    %479 = vmatpush1.xpose.msra.mxu0 %v478
    %480 = vmatprep.subr.mxu0 0.0
    %v481 = vand.u32 %v111, 4294901760
    %v482 = vsub.f32 %v111, %v481
    %v483 = vand.u32 %v482, 4294901760
    %484 = vmatpush1.xpose.msra.mxu0 %v483
    %485 = vmatprep.subr.mxu0 0.0
    %v486 = vand.u32 %v108, 4294901760
    %v487 = vsub.f32 %v108, %v486
    %v488 = vand.u32 %v487, 4294901760
    %489 = vmatpush1.xpose.msra.mxu0 %v488
    %490 = vmatprep.subr.mxu0 0.0
    %491 = vmatpush2.xpose.msra.mxu0 0.0
    %492 = vmatprep.subr.mxu0 0.0
    %493 = vmatpush2.xpose.msra.mxu0 0.0
    %494 = vmatprep.subr.mxu0 0.0
    %495 = vmatpush2.xpose.msra.mxu0 0.0
    %496 = vmatprep.subr.mxu0 0.0
    %497 = vmatpush2.xpose.msra.mxu0 0.0
    %498 = vmatprep.subr.mxu0 0.0
    %499 = vmatpush2.xpose.msra.mxu0 0.0
    %500 = vmatprep.subr.mxu0 0.0
    %501 = vmatpush2.xpose.msra.mxu0 0.0
    %502 = vmatprep.subr.mxu0 0.0
    %503 = vmatpush2.xpose.msra.mxu0 0.0
    %504 = vmatprep.subr.mxu0 0.0
    %505 = vmatpush2.xpose.msra.mxu0 0.0
    %506 = vmatprep.subr.mxu0 0.0
    %507 = vmatpush2.xpose.msra.mxu0 0.0
    %508 = vmatprep.subr.mxu0 0.0
    %509 = vmatpush2.xpose.msra.mxu0 0.0
    %510 = vmatprep.subr.mxu0 0.0
    %511 = vmatpush2.xpose.msra.mxu0 0.0
    %512 = vmatprep.subr.mxu0 0.0
    %513 = vmatpush2.xpose.msra.mxu0 0.0
    %514 = vmatprep.subr.mxu0 0.0
    %515 = vmatpush2.xpose.msra.mxu0 0.0
    %516 = vmatprep.subr.mxu0 0.0
    %517 = vmatpush2.xpose.msra.mxu0 0.0
    %518 = vmatprep.subr.mxu0 0.0
    %519 = vmatpush2.xpose.msra.mxu0 0.0
    %520 = vmatprep.subr.mxu0 0.0
    %521 = vmatpush2.xpose.msra.mxu0 0.0
    %522 = vmatprep.mubr.f32.mxu0 0.0
    %v523 = vand.u32 %v105, 4294901760
    %524 = vmatmul.mubr.f32.gmra.mxu0 %v523
    %v525 = vpop.f32.mrf.mxu0
    %v526 = vadd.f32 %v443, %v525
    %v527 = vpop.f32.mrf.mxu0
    %528 = vdwg.mxu0
    %529 = vmatprep.subr.mxu0 0.0
    %530 = vmatpush1.xpose.msra.mxu0 0.0
    %531 = vmatprep.subr.mxu0 0.0
    %532 = vmatpush1.xpose.msra.mxu0 0.0
    %533 = vmatprep.subr.mxu0 0.0
    %534 = vmatpush1.xpose.msra.mxu0 0.0
    %535 = vmatprep.subr.mxu0 0.0
    %536 = vmatpush1.xpose.msra.mxu0 0.0
    %537 = vmatprep.subr.mxu0 0.0
    %538 = vmatpush1.xpose.msra.mxu0 0.0
    %539 = vmatprep.subr.mxu0 0.0
    %540 = vmatpush1.xpose.msra.mxu0 0.0
    %541 = vmatprep.subr.mxu0 0.0
    %542 = vmatpush1.xpose.msra.mxu0 0.0
    %543 = vmatprep.subr.mxu0 0.0
    %544 = vmatpush1.xpose.msra.mxu0 0.0
    %545 = vmatprep.subr.mxu0 0.0
    %546 = vmatpush1.xpose.msra.mxu0 0.0
    %547 = vmatprep.subr.mxu0 0.0
    %548 = vmatpush1.xpose.msra.mxu0 0.0
    %549 = vmatprep.subr.mxu0 0.0
    %550 = vmatpush1.xpose.msra.mxu0 0.0
    %551 = vmatprep.subr.mxu0 0.0
    %552 = vmatpush1.xpose.msra.mxu0 0.0
    %553 = vmatprep.subr.mxu0 0.0
    %v554 = vand.u32 %v117, 4294901760
    %555 = vmatpush1.xpose.msra.mxu0 %v554
    %556 = vmatprep.subr.mxu0 0.0
    %v557 = vand.u32 %v114, 4294901760
    %558 = vmatpush1.xpose.msra.mxu0 %v557
    %559 = vmatprep.subr.mxu0 0.0
    %v560 = vand.u32 %v111, 4294901760
    %561 = vmatpush1.xpose.msra.mxu0 %v560
    %562 = vmatprep.subr.mxu0 0.0
    %v563 = vand.u32 %v108, 4294901760
    %564 = vmatpush1.xpose.msra.mxu0 %v563
    %565 = vmatprep.subr.mxu0 0.0
    %566 = vmatpush2.xpose.msra.mxu0 0.0
    %567 = vmatprep.subr.mxu0 0.0
    %568 = vmatpush2.xpose.msra.mxu0 0.0
    %569 = vmatprep.subr.mxu0 0.0
    %570 = vmatpush2.xpose.msra.mxu0 0.0
    %571 = vmatprep.subr.mxu0 0.0
    %572 = vmatpush2.xpose.msra.mxu0 0.0
    %573 = vmatprep.subr.mxu0 0.0
    %574 = vmatpush2.xpose.msra.mxu0 0.0
    %575 = vmatprep.subr.mxu0 0.0
    %576 = vmatpush2.xpose.msra.mxu0 0.0
    %577 = vmatprep.subr.mxu0 0.0
    %578 = vmatpush2.xpose.msra.mxu0 0.0
    %579 = vmatprep.subr.mxu0 0.0
    %580 = vmatpush2.xpose.msra.mxu0 0.0
    %581 = vmatprep.subr.mxu0 0.0
    %582 = vmatpush2.xpose.msra.mxu0 0.0
    %583 = vmatprep.subr.mxu0 0.0
    %584 = vmatpush2.xpose.msra.mxu0 0.0
    %585 = vmatprep.subr.mxu0 0.0
    %586 = vmatpush2.xpose.msra.mxu0 0.0
    %587 = vmatprep.subr.mxu0 0.0
    %588 = vmatpush2.xpose.msra.mxu0 0.0
    %589 = vmatprep.subr.mxu0 0.0
    %590 = vmatpush2.xpose.msra.mxu0 0.0
    %591 = vmatprep.subr.mxu0 0.0
    %592 = vmatpush2.xpose.msra.mxu0 0.0
    %593 = vmatprep.subr.mxu0 0.0
    %594 = vmatpush2.xpose.msra.mxu0 0.0
    %595 = vmatprep.subr.mxu0 0.0
    %596 = vmatpush2.xpose.msra.mxu0 0.0
    %597 = vmatprep.mubr.f32.mxu0 0.0
    %v598 = vand.u32 %v105, 4294901760
    %599 = vmatmul.mubr.f32.gmra.mxu0 %v598
    %v600 = vpop.f32.mrf.mxu0
    %v601 = vadd.f32 %v526, %v600
    %v602 = vpop.f32.mrf.mxu0
    %603 = vdwg.mxu0
    %v604 = vld [vmem:[#allocation5 + $0x10] sm:$0xff]
    %v605 = vld [vmem:[#allocation5 + $0x20] sm:$0xff]
    %v606 = vld [vmem:[#allocation5 + $0x30] sm:$0xff]
    %v607 = vld [vmem:[#allocation5 + $0x40] sm:$0xff]
    %v608 = vld [vmem:[#allocation5 + $0x50] ss:$0 sm:$0xff]
    %vm609 = vcmask 261120
    %v611 = vsel %vm609, %v601, 0
    %613 = vmatprep.subr.mxu0 0.0
    %614 = vmatpush1.msra.mxu0 0.0
    %615 = vmatprep.subr.mxu0 0.0
    %616 = vmatpush1.msra.mxu0 0.0
    %617 = vmatprep.subr.mxu0 0.0
    %618 = vmatpush1.msra.mxu0 0.0
    %619 = vmatprep.subr.mxu0 0.0
    %620 = vmatpush1.msra.mxu0 0.0
    %621 = vmatprep.subr.mxu0 0.0
    %622 = vmatpush1.msra.mxu0 0.0
    %623 = vmatprep.subr.mxu0 0.0
    %624 = vmatpush1.msra.mxu0 0.0
    %625 = vmatprep.subr.mxu0 0.0
    %626 = vmatpush1.msra.mxu0 0.0
    %627 = vmatprep.subr.mxu0 0.0
    %628 = vmatpush1.msra.mxu0 0.0
    %629 = vmatprep.subr.mxu0 0.0
    %630 = vmatpush1.msra.mxu0 0.0
    %631 = vmatprep.subr.mxu0 0.0
    %632 = vmatpush1.msra.mxu0 0.0
    %633 = vmatprep.subr.mxu0 0.0
    %634 = vmatpush1.msra.mxu0 0.0
    %635 = vmatprep.subr.mxu0 0.0
    %636 = vmatpush1.msra.mxu0 0.0
    %637 = vmatprep.subr.mxu0 0.0
    %v638 = vand.u32 %v607, 4294901760
    %639 = vmatpush1.msra.mxu0 %v638
    %640 = vmatprep.subr.mxu0 0.0
    %v641 = vand.u32 %v606, 4294901760
    %642 = vmatpush1.msra.mxu0 %v641
    %643 = vmatprep.subr.mxu0 0.0
    %v644 = vand.u32 %v605, 4294901760
    %645 = vmatpush1.msra.mxu0 %v644
    %646 = vmatprep.subr.mxu0 0.0
    %v647 = vand.u32 %v604, 4294901760
    %648 = vmatpush1.msra.mxu0 %v647
    %649 = vmatprep.subr.mxu0 0.0
    %650 = vmatpush2.msra.mxu0 0.0
    %651 = vmatprep.subr.mxu0 0.0
    %652 = vmatpush2.msra.mxu0 0.0
    %653 = vmatprep.subr.mxu0 0.0
    %654 = vmatpush2.msra.mxu0 0.0
    %655 = vmatprep.subr.mxu0 0.0
    %656 = vmatpush2.msra.mxu0 0.0
    %657 = vmatprep.subr.mxu0 0.0
    %658 = vmatpush2.msra.mxu0 0.0
    %659 = vmatprep.subr.mxu0 0.0
    %660 = vmatpush2.msra.mxu0 0.0
    %661 = vmatprep.subr.mxu0 0.0
    %662 = vmatpush2.msra.mxu0 0.0
    %663 = vmatprep.subr.mxu0 0.0
    %664 = vmatpush2.msra.mxu0 0.0
    %665 = vmatprep.subr.mxu0 0.0
    %666 = vmatpush2.msra.mxu0 0.0
    %667 = vmatprep.subr.mxu0 0.0
    %668 = vmatpush2.msra.mxu0 0.0
    %669 = vmatprep.subr.mxu0 0.0
    %670 = vmatpush2.msra.mxu0 0.0
    %671 = vmatprep.subr.mxu0 0.0
    %672 = vmatpush2.msra.mxu0 0.0
    %673 = vmatprep.subr.mxu0 0.0
    %674 = vmatpush2.msra.mxu0 0.0
    %675 = vmatprep.subr.mxu0 0.0
    %676 = vmatpush2.msra.mxu0 0.0
    %677 = vmatprep.subr.mxu0 0.0
    %678 = vmatpush2.msra.mxu0 0.0
    %679 = vmatprep.subr.mxu0 0.0
    %680 = vmatpush2.msra.mxu0 0.0
    %681 = vmatprep.mubr.f32.mxu0 0.0
    %v682 = vand.u32 %v611, 4294901760
    %v683 = vsub.f32 %v611, %v682
    %v684 = vand.u32 %v683, 4294901760
    %v685 = vsub.f32 %v683, %v684
    %v686 = vand.u32 %v685, 4294901760
    %687 = vmatmul.mubr.f32.gmra.mxu0 %v686
    %v688 = vpop.f32.mrf.mxu0
    %v689 = vadd.f32 %v608, %v688
    %v690 = vpop.f32.mrf.mxu0
    %691 = vdwg.mxu0
    %692 = vmatprep.subr.mxu0 0.0
    %693 = vmatpush1.msra.mxu0 0.0
    %694 = vmatprep.subr.mxu0 0.0
    %695 = vmatpush1.msra.mxu0 0.0
    %696 = vmatprep.subr.mxu0 0.0
    %697 = vmatpush1.msra.mxu0 0.0
    %698 = vmatprep.subr.mxu0 0.0
    %699 = vmatpush1.msra.mxu0 0.0
    %700 = vmatprep.subr.mxu0 0.0
    %701 = vmatpush1.msra.mxu0 0.0
    %702 = vmatprep.subr.mxu0 0.0
    %703 = vmatpush1.msra.mxu0 0.0
    %704 = vmatprep.subr.mxu0 0.0
    %705 = vmatpush1.msra.mxu0 0.0
    %706 = vmatprep.subr.mxu0 0.0
    %707 = vmatpush1.msra.mxu0 0.0
    %708 = vmatprep.subr.mxu0 0.0
    %709 = vmatpush1.msra.mxu0 0.0
    %710 = vmatprep.subr.mxu0 0.0
    %711 = vmatpush1.msra.mxu0 0.0
    %712 = vmatprep.subr.mxu0 0.0
    %713 = vmatpush1.msra.mxu0 0.0
    %714 = vmatprep.subr.mxu0 0.0
    %715 = vmatpush1.msra.mxu0 0.0
    %716 = vmatprep.subr.mxu0 0.0
    %v717 = vand.u32 %v607, 4294901760
    %v718 = vsub.f32 %v607, %v717
    %v719 = vand.u32 %v718, 4294901760
    %v720 = vsub.f32 %v718, %v719
    %v721 = vand.u32 %v720, 4294901760
    %722 = vmatpush1.msra.mxu0 %v721
    %723 = vmatprep.subr.mxu0 0.0
    %v724 = vand.u32 %v606, 4294901760
    %v725 = vsub.f32 %v606, %v724
    %v726 = vand.u32 %v725, 4294901760
    %v727 = vsub.f32 %v725, %v726
    %v728 = vand.u32 %v727, 4294901760
    %729 = vmatpush1.msra.mxu0 %v728
    %730 = vmatprep.subr.mxu0 0.0
    %v731 = vand.u32 %v605, 4294901760
    %v732 = vsub.f32 %v605, %v731
    %v733 = vand.u32 %v732, 4294901760
    %v734 = vsub.f32 %v732, %v733
    %v735 = vand.u32 %v734, 4294901760
    %736 = vmatpush1.msra.mxu0 %v735
    %737 = vmatprep.subr.mxu0 0.0
    %v738 = vand.u32 %v604, 4294901760
    %v739 = vsub.f32 %v604, %v738
    %v740 = vand.u32 %v739, 4294901760
    %v741 = vsub.f32 %v739, %v740
    %v742 = vand.u32 %v741, 4294901760
    %743 = vmatpush1.msra.mxu0 %v742
    %744 = vmatprep.subr.mxu0 0.0
    %745 = vmatpush2.msra.mxu0 0.0
    %746 = vmatprep.subr.mxu0 0.0
    %747 = vmatpush2.msra.mxu0 0.0
    %748 = vmatprep.subr.mxu0 0.0
    %749 = vmatpush2.msra.mxu0 0.0
    %750 = vmatprep.subr.mxu0 0.0
    %751 = vmatpush2.msra.mxu0 0.0
    %752 = vmatprep.subr.mxu0 0.0
    %753 = vmatpush2.msra.mxu0 0.0
    %754 = vmatprep.subr.mxu0 0.0
    %755 = vmatpush2.msra.mxu0 0.0
    %756 = vmatprep.subr.mxu0 0.0
    %757 = vmatpush2.msra.mxu0 0.0
    %758 = vmatprep.subr.mxu0 0.0
    %759 = vmatpush2.msra.mxu0 0.0
    %760 = vmatprep.subr.mxu0 0.0
    %761 = vmatpush2.msra.mxu0 0.0
    %762 = vmatprep.subr.mxu0 0.0
    %763 = vmatpush2.msra.mxu0 0.0
    %764 = vmatprep.subr.mxu0 0.0
    %765 = vmatpush2.msra.mxu0 0.0
    %766 = vmatprep.subr.mxu0 0.0
    %767 = vmatpush2.msra.mxu0 0.0
    %768 = vmatprep.subr.mxu0 0.0
    %769 = vmatpush2.msra.mxu0 0.0
    %770 = vmatprep.subr.mxu0 0.0
    %771 = vmatpush2.msra.mxu0 0.0
    %772 = vmatprep.subr.mxu0 0.0
    %773 = vmatpush2.msra.mxu0 0.0
    %774 = vmatprep.subr.mxu0 0.0
    %775 = vmatpush2.msra.mxu0 0.0
    %776 = vmatprep.mubr.f32.mxu0 0.0
    %v777 = vand.u32 %v611, 4294901760
    %778 = vmatmul.mubr.f32.gmra.mxu0 %v777
    %v779 = vpop.f32.mrf.mxu0
    %v780 = vadd.f32 %v689, %v779
    %v781 = vpop.f32.mrf.mxu0
    %782 = vdwg.mxu0
    %783 = vmatprep.subr.mxu0 0.0
    %784 = vmatpush1.msra.mxu0 0.0
    %785 = vmatprep.subr.mxu0 0.0
    %786 = vmatpush1.msra.mxu0 0.0
    %787 = vmatprep.subr.mxu0 0.0
    %788 = vmatpush1.msra.mxu0 0.0
    %789 = vmatprep.subr.mxu0 0.0
    %790 = vmatpush1.msra.mxu0 0.0
    %791 = vmatprep.subr.mxu0 0.0
    %792 = vmatpush1.msra.mxu0 0.0
    %793 = vmatprep.subr.mxu0 0.0
    %794 = vmatpush1.msra.mxu0 0.0
    %795 = vmatprep.subr.mxu0 0.0
    %796 = vmatpush1.msra.mxu0 0.0
    %797 = vmatprep.subr.mxu0 0.0
    %798 = vmatpush1.msra.mxu0 0.0
    %799 = vmatprep.subr.mxu0 0.0
    %800 = vmatpush1.msra.mxu0 0.0
    %801 = vmatprep.subr.mxu0 0.0
    %802 = vmatpush1.msra.mxu0 0.0
    %803 = vmatprep.subr.mxu0 0.0
    %804 = vmatpush1.msra.mxu0 0.0
    %805 = vmatprep.subr.mxu0 0.0
    %806 = vmatpush1.msra.mxu0 0.0
    %807 = vmatprep.subr.mxu0 0.0
    %v808 = vand.u32 %v607, 4294901760
    %v809 = vsub.f32 %v607, %v808
    %810 = vmatpush1.msra.mxu0 %v809
    %811 = vmatprep.subr.mxu0 0.0
    %v812 = vand.u32 %v606, 4294901760
    %v813 = vsub.f32 %v606, %v812
    %814 = vmatpush1.msra.mxu0 %v813
    %815 = vmatprep.subr.mxu0 0.0
    %v816 = vand.u32 %v605, 4294901760
    %v817 = vsub.f32 %v605, %v816
    %818 = vmatpush1.msra.mxu0 %v817
    %819 = vmatprep.subr.mxu0 0.0
    %v820 = vand.u32 %v604, 4294901760
    %v821 = vsub.f32 %v604, %v820
    %822 = vmatpush1.msra.mxu0 %v821
    %823 = vmatprep.subr.mxu0 0.0
    %824 = vmatpush2.msra.mxu0 0.0
    %825 = vmatprep.subr.mxu0 0.0
    %826 = vmatpush2.msra.mxu0 0.0
    %827 = vmatprep.subr.mxu0 0.0
    %828 = vmatpush2.msra.mxu0 0.0
    %829 = vmatprep.subr.mxu0 0.0
    %830 = vmatpush2.msra.mxu0 0.0
    %831 = vmatprep.subr.mxu0 0.0
    %832 = vmatpush2.msra.mxu0 0.0
    %833 = vmatprep.subr.mxu0 0.0
    %834 = vmatpush2.msra.mxu0 0.0
    %835 = vmatprep.subr.mxu0 0.0
    %836 = vmatpush2.msra.mxu0 0.0
    %837 = vmatprep.subr.mxu0 0.0
    %838 = vmatpush2.msra.mxu0 0.0
    %839 = vmatprep.subr.mxu0 0.0
    %840 = vmatpush2.msra.mxu0 0.0
    %841 = vmatprep.subr.mxu0 0.0
    %842 = vmatpush2.msra.mxu0 0.0
    %843 = vmatprep.subr.mxu0 0.0
    %844 = vmatpush2.msra.mxu0 0.0
    %845 = vmatprep.subr.mxu0 0.0
    %846 = vmatpush2.msra.mxu0 0.0
    %847 = vmatprep.subr.mxu0 0.0
    %848 = vmatpush2.msra.mxu0 0.0
    %849 = vmatprep.subr.mxu0 0.0
    %850 = vmatpush2.msra.mxu0 0.0
    %851 = vmatprep.subr.mxu0 0.0
    %852 = vmatpush2.msra.mxu0 0.0
    %853 = vmatprep.subr.mxu0 0.0
    %854 = vmatpush2.msra.mxu0 0.0
    %855 = vmatprep.mubr.f32.mxu0 0.0
    %v856 = vand.u32 %v611, 4294901760
    %v857 = vsub.f32 %v611, %v856
    %858 = vmatmul.mubr.f32.gmra.mxu0 %v857
    %v859 = vpop.f32.mrf.mxu0
    %v860 = vadd.f32 %v780, %v859
    %v861 = vpop.f32.mrf.mxu0
    %862 = vdwg.mxu0
    %863 = vmatprep.subr.mxu0 0.0
    %864 = vmatpush1.msra.mxu0 0.0
    %865 = vmatprep.subr.mxu0 0.0
    %866 = vmatpush1.msra.mxu0 0.0
    %867 = vmatprep.subr.mxu0 0.0
    %868 = vmatpush1.msra.mxu0 0.0
    %869 = vmatprep.subr.mxu0 0.0
    %870 = vmatpush1.msra.mxu0 0.0
    %871 = vmatprep.subr.mxu0 0.0
    %872 = vmatpush1.msra.mxu0 0.0
    %873 = vmatprep.subr.mxu0 0.0
    %874 = vmatpush1.msra.mxu0 0.0
    %875 = vmatprep.subr.mxu0 0.0
    %876 = vmatpush1.msra.mxu0 0.0
    %877 = vmatprep.subr.mxu0 0.0
    %878 = vmatpush1.msra.mxu0 0.0
    %879 = vmatprep.subr.mxu0 0.0
    %880 = vmatpush1.msra.mxu0 0.0
    %881 = vmatprep.subr.mxu0 0.0
    %882 = vmatpush1.msra.mxu0 0.0
    %883 = vmatprep.subr.mxu0 0.0
    %884 = vmatpush1.msra.mxu0 0.0
    %885 = vmatprep.subr.mxu0 0.0
    %886 = vmatpush1.msra.mxu0 0.0
    %887 = vmatprep.subr.mxu0 0.0
    %v888 = vand.u32 %v607, 4294901760
    %889 = vmatpush1.msra.mxu0 %v888
    %890 = vmatprep.subr.mxu0 0.0
    %v891 = vand.u32 %v606, 4294901760
    %892 = vmatpush1.msra.mxu0 %v891
    %893 = vmatprep.subr.mxu0 0.0
    %v894 = vand.u32 %v605, 4294901760
    %895 = vmatpush1.msra.mxu0 %v894
    %896 = vmatprep.subr.mxu0 0.0
    %v897 = vand.u32 %v604, 4294901760
    %898 = vmatpush1.msra.mxu0 %v897
    %899 = vmatprep.subr.mxu0 0.0
    %900 = vmatpush2.msra.mxu0 0.0
    %901 = vmatprep.subr.mxu0 0.0
    %902 = vmatpush2.msra.mxu0 0.0
    %903 = vmatprep.subr.mxu0 0.0
    %904 = vmatpush2.msra.mxu0 0.0
    %905 = vmatprep.subr.mxu0 0.0
    %906 = vmatpush2.msra.mxu0 0.0
    %907 = vmatprep.subr.mxu0 0.0
    %908 = vmatpush2.msra.mxu0 0.0
    %909 = vmatprep.subr.mxu0 0.0
    %910 = vmatpush2.msra.mxu0 0.0
    %911 = vmatprep.subr.mxu0 0.0
    %912 = vmatpush2.msra.mxu0 0.0
    %913 = vmatprep.subr.mxu0 0.0
    %914 = vmatpush2.msra.mxu0 0.0
    %915 = vmatprep.subr.mxu0 0.0
    %916 = vmatpush2.msra.mxu0 0.0
    %917 = vmatprep.subr.mxu0 0.0
    %918 = vmatpush2.msra.mxu0 0.0
    %919 = vmatprep.subr.mxu0 0.0
    %920 = vmatpush2.msra.mxu0 0.0
    %921 = vmatprep.subr.mxu0 0.0
    %922 = vmatpush2.msra.mxu0 0.0
    %923 = vmatprep.subr.mxu0 0.0
    %924 = vmatpush2.msra.mxu0 0.0
    %925 = vmatprep.subr.mxu0 0.0
    %926 = vmatpush2.msra.mxu0 0.0
    %927 = vmatprep.subr.mxu0 0.0
    %928 = vmatpush2.msra.mxu0 0.0
    %929 = vmatprep.subr.mxu0 0.0
    %930 = vmatpush2.msra.mxu0 0.0
    %931 = vmatprep.mubr.f32.mxu0 0.0
    %v932 = vand.u32 %v611, 4294901760
    %v933 = vsub.f32 %v611, %v932
    %v934 = vand.u32 %v933, 4294901760
    %935 = vmatmul.mubr.f32.gmra.mxu0 %v934
    %v936 = vpop.f32.mrf.mxu0
    %v937 = vadd.f32 %v860, %v936
    %v938 = vpop.f32.mrf.mxu0
    %939 = vdwg.mxu0
    %940 = vmatprep.subr.mxu0 0.0
    %941 = vmatpush1.msra.mxu0 0.0
    %942 = vmatprep.subr.mxu0 0.0
    %943 = vmatpush1.msra.mxu0 0.0
    %944 = vmatprep.subr.mxu0 0.0
    %945 = vmatpush1.msra.mxu0 0.0
    %946 = vmatprep.subr.mxu0 0.0
    %947 = vmatpush1.msra.mxu0 0.0
    %948 = vmatprep.subr.mxu0 0.0
    %949 = vmatpush1.msra.mxu0 0.0
    %950 = vmatprep.subr.mxu0 0.0
    %951 = vmatpush1.msra.mxu0 0.0
    %952 = vmatprep.subr.mxu0 0.0
    %953 = vmatpush1.msra.mxu0 0.0
    %954 = vmatprep.subr.mxu0 0.0
    %955 = vmatpush1.msra.mxu0 0.0
    %956 = vmatprep.subr.mxu0 0.0
    %957 = vmatpush1.msra.mxu0 0.0
    %958 = vmatprep.subr.mxu0 0.0
    %959 = vmatpush1.msra.mxu0 0.0
    %960 = vmatprep.subr.mxu0 0.0
    %961 = vmatpush1.msra.mxu0 0.0
    %962 = vmatprep.subr.mxu0 0.0
    %963 = vmatpush1.msra.mxu0 0.0
    %964 = vmatprep.subr.mxu0 0.0
    %v965 = vand.u32 %v607, 4294901760
    %v966 = vsub.f32 %v607, %v965
    %v967 = vand.u32 %v966, 4294901760
    %968 = vmatpush1.msra.mxu0 %v967
    %969 = vmatprep.subr.mxu0 0.0
    %v970 = vand.u32 %v606, 4294901760
    %v971 = vsub.f32 %v606, %v970
    %v972 = vand.u32 %v971, 4294901760
    %973 = vmatpush1.msra.mxu0 %v972
    %974 = vmatprep.subr.mxu0 0.0
    %v975 = vand.u32 %v605, 4294901760
    %v976 = vsub.f32 %v605, %v975
    %v977 = vand.u32 %v976, 4294901760
    %978 = vmatpush1.msra.mxu0 %v977
    %979 = vmatprep.subr.mxu0 0.0
    %v980 = vand.u32 %v604, 4294901760
    %v981 = vsub.f32 %v604, %v980
    %v982 = vand.u32 %v981, 4294901760
    %983 = vmatpush1.msra.mxu0 %v982
    %984 = vmatprep.subr.mxu0 0.0
    %985 = vmatpush2.msra.mxu0 0.0
    %986 = vmatprep.subr.mxu0 0.0
    %987 = vmatpush2.msra.mxu0 0.0
    %988 = vmatprep.subr.mxu0 0.0
    %989 = vmatpush2.msra.mxu0 0.0
    %990 = vmatprep.subr.mxu0 0.0
    %991 = vmatpush2.msra.mxu0 0.0
    %992 = vmatprep.subr.mxu0 0.0
    %993 = vmatpush2.msra.mxu0 0.0
    %994 = vmatprep.subr.mxu0 0.0
    %995 = vmatpush2.msra.mxu0 0.0
    %996 = vmatprep.subr.mxu0 0.0
    %997 = vmatpush2.msra.mxu0 0.0
    %998 = vmatprep.subr.mxu0 0.0
    %999 = vmatpush2.msra.mxu0 0.0
    %1000 = vmatprep.subr.mxu0 0.0
    %1001 = vmatpush2.msra.mxu0 0.0
    %1002 = vmatprep.subr.mxu0 0.0
    %1003 = vmatpush2.msra.mxu0 0.0
    %1004 = vmatprep.subr.mxu0 0.0
    %1005 = vmatpush2.msra.mxu0 0.0
    %1006 = vmatprep.subr.mxu0 0.0
    %1007 = vmatpush2.msra.mxu0 0.0
    %1008 = vmatprep.subr.mxu0 0.0
    %1009 = vmatpush2.msra.mxu0 0.0
    %1010 = vmatprep.subr.mxu0 0.0
    %1011 = vmatpush2.msra.mxu0 0.0
    %1012 = vmatprep.subr.mxu0 0.0
    %1013 = vmatpush2.msra.mxu0 0.0
    %1014 = vmatprep.subr.mxu0 0.0
    %1015 = vmatpush2.msra.mxu0 0.0
    %1016 = vmatprep.mubr.f32.mxu0 0.0
    %v1017 = vand.u32 %v611, 4294901760
    %1018 = vmatmul.mubr.f32.gmra.mxu0 %v1017
    %v1019 = vpop.f32.mrf.mxu0
    %v1020 = vadd.f32 %v937, %v1019
    %v1021 = vpop.f32.mrf.mxu0
    %1022 = vdwg.mxu0
    %1023 = vmatprep.subr.mxu0 0.0
    %1024 = vmatpush1.msra.mxu0 0.0
    %1025 = vmatprep.subr.mxu0 0.0
    %1026 = vmatpush1.msra.mxu0 0.0
    %1027 = vmatprep.subr.mxu0 0.0
    %1028 = vmatpush1.msra.mxu0 0.0
    %1029 = vmatprep.subr.mxu0 0.0
    %1030 = vmatpush1.msra.mxu0 0.0
    %1031 = vmatprep.subr.mxu0 0.0
    %1032 = vmatpush1.msra.mxu0 0.0
    %1033 = vmatprep.subr.mxu0 0.0
    %1034 = vmatpush1.msra.mxu0 0.0
    %1035 = vmatprep.subr.mxu0 0.0
    %1036 = vmatpush1.msra.mxu0 0.0
    %1037 = vmatprep.subr.mxu0 0.0
    %1038 = vmatpush1.msra.mxu0 0.0
    %1039 = vmatprep.subr.mxu0 0.0
    %1040 = vmatpush1.msra.mxu0 0.0
    %1041 = vmatprep.subr.mxu0 0.0
    %1042 = vmatpush1.msra.mxu0 0.0
    %1043 = vmatprep.subr.mxu0 0.0
    %1044 = vmatpush1.msra.mxu0 0.0
    %1045 = vmatprep.subr.mxu0 0.0
    %1046 = vmatpush1.msra.mxu0 0.0
    %1047 = vmatprep.subr.mxu0 0.0
    %v1048 = vand.u32 %v607, 4294901760
    %1049 = vmatpush1.msra.mxu0 %v1048
    %1050 = vmatprep.subr.mxu0 0.0
    %v1051 = vand.u32 %v606, 4294901760
    %1052 = vmatpush1.msra.mxu0 %v1051
    %1053 = vmatprep.subr.mxu0 0.0
    %v1054 = vand.u32 %v605, 4294901760
    %1055 = vmatpush1.msra.mxu0 %v1054
    %1056 = vmatprep.subr.mxu0 0.0
    %v1057 = vand.u32 %v604, 4294901760
    %1058 = vmatpush1.msra.mxu0 %v1057
    %1059 = vmatprep.subr.mxu0 0.0
    %1060 = vmatpush2.msra.mxu0 0.0
    %1061 = vmatprep.subr.mxu0 0.0
    %1062 = vmatpush2.msra.mxu0 0.0
    %1063 = vmatprep.subr.mxu0 0.0
    %1064 = vmatpush2.msra.mxu0 0.0
    %1065 = vmatprep.subr.mxu0 0.0
    %1066 = vmatpush2.msra.mxu0 0.0
    %1067 = vmatprep.subr.mxu0 0.0
    %1068 = vmatpush2.msra.mxu0 0.0
    %1069 = vmatprep.subr.mxu0 0.0
    %1070 = vmatpush2.msra.mxu0 0.0
    %1071 = vmatprep.subr.mxu0 0.0
    %1072 = vmatpush2.msra.mxu0 0.0
    %1073 = vmatprep.subr.mxu0 0.0
    %1074 = vmatpush2.msra.mxu0 0.0
    %1075 = vmatprep.subr.mxu0 0.0
    %1076 = vmatpush2.msra.mxu0 0.0
    %1077 = vmatprep.subr.mxu0 0.0
    %1078 = vmatpush2.msra.mxu0 0.0
    %1079 = vmatprep.subr.mxu0 0.0
    %1080 = vmatpush2.msra.mxu0 0.0
    %1081 = vmatprep.subr.mxu0 0.0
    %1082 = vmatpush2.msra.mxu0 0.0
    %1083 = vmatprep.subr.mxu0 0.0
    %1084 = vmatpush2.msra.mxu0 0.0
    %1085 = vmatprep.subr.mxu0 0.0
    %1086 = vmatpush2.msra.mxu0 0.0
    %1087 = vmatprep.subr.mxu0 0.0
    %1088 = vmatpush2.msra.mxu0 0.0
    %1089 = vmatprep.subr.mxu0 0.0
    %1090 = vmatpush2.msra.mxu0 0.0
    %1091 = vmatprep.mubr.f32.mxu0 0.0
    %v1092 = vand.u32 %v611, 4294901760
    %1093 = vmatmul.mubr.f32.gmra.mxu0 %v1092
    %v1094 = vpop.f32.mrf.mxu0
    %v1095 = vadd.f32 %v1020, %v1094
    %v1096 = vpop.f32.mrf.mxu0
    %1097 = vdwg.mxu0
    %v1098 = vld [vmem:[#allocation5 + $0x60] sm:$0xff]
    %v1099 = vld [vmem:[#allocation5 + $0x68] sm:$0xff]
    %v1100 = vld [vmem:[#allocation5 + $0x70] sm:$0xff]
    %v1101 = vld [vmem:[#allocation5 + $0x78] sm:$0xff]
    %v1102 = vld [vmem:[#allocation5 + $0x80] sm:$0xff]
    %v1103 = vld [vmem:[#allocation5 + $0x88] sm:$0xff]
    %v1104 = vld [vmem:[#allocation5 + $0x90] sm:$0xff]
    %v1105 = vld [vmem:[#allocation5 + $0x98] sm:$0xff]
    %v1106 = vld [vmem:[#allocation5 + $0xa0] sm:$0xff]
    %v1107 = vld [vmem:[#allocation5 + $0xa8] sm:$0xff]
    %v1108 = vld [vmem:[#allocation5 + $0xb0] sm:$0xff]
    %v1109 = vld [vmem:[#allocation5 + $0xb8] sm:$0xff]
    %v1110 = vld [vmem:[#allocation5 + $0xc0] sm:$0xff]
    %v1111 = vld [vmem:[#allocation5 + $0xc8] sm:$0xff]
    %v1112 = vld [vmem:[#allocation5 + $0xd0] sm:$0xff]
    %v1113 = vld [vmem:[#allocation5 + $0xd8] sm:$0xff]
    %vm1114 = vcmask 523264
    %v1116 = vsel %vm1114, %v1095, 0
    %1118 = vmatprep.subr.mxu0 0.0
    %1119 = vmatpush1.msra.mxu0 0.0
    %1120 = vmatprep.subr.mxu0 0.0
    %1121 = vmatpush1.msra.mxu0 0.0
    %1122 = vmatprep.subr.mxu0 0.0
    %1123 = vmatpush1.msra.mxu0 0.0
    %1124 = vmatprep.subr.mxu0 0.0
    %1125 = vmatpush1.msra.mxu0 0.0
    %1126 = vmatprep.subr.mxu0 0.0
    %1127 = vmatpush1.msra.mxu0 0.0
    %1128 = vmatprep.subr.mxu0 0.0
    %1129 = vmatpush1.msra.mxu0 0.0
    %1130 = vmatprep.subr.mxu0 0.0
    %1131 = vmatpush1.msra.mxu0 0.0
    %1132 = vmatprep.subr.mxu0 0.0
    %1133 = vmatpush1.msra.mxu0 0.0
    %v1134 = vand.u32 %v1113, 4294901760
    %1135 = vmatprep.subr.mxu0 %v1134
    %v1136 = vand.u32 %v1112, 4294901760
    %1137 = vmatpush1.msra.mxu0 %v1136
    %v1138 = vand.u32 %v1111, 4294901760
    %1139 = vmatprep.subr.mxu0 %v1138
    %v1140 = vand.u32 %v1110, 4294901760
    %1141 = vmatpush1.msra.mxu0 %v1140
    %v1142 = vand.u32 %v1109, 4294901760
    %1143 = vmatprep.subr.mxu0 %v1142
    %v1144 = vand.u32 %v1108, 4294901760
    %1145 = vmatpush1.msra.mxu0 %v1144
    %v1146 = vand.u32 %v1107, 4294901760
    %1147 = vmatprep.subr.mxu0 %v1146
    %v1148 = vand.u32 %v1106, 4294901760
    %1149 = vmatpush1.msra.mxu0 %v1148
    %v1150 = vand.u32 %v1105, 4294901760
    %1151 = vmatprep.subr.mxu0 %v1150
    %v1152 = vand.u32 %v1104, 4294901760
    %1153 = vmatpush1.msra.mxu0 %v1152
    %v1154 = vand.u32 %v1103, 4294901760
    %1155 = vmatprep.subr.mxu0 %v1154
    %v1156 = vand.u32 %v1102, 4294901760
    %1157 = vmatpush1.msra.mxu0 %v1156
    %v1158 = vand.u32 %v1101, 4294901760
    %1159 = vmatprep.subr.mxu0 %v1158
    %v1160 = vand.u32 %v1100, 4294901760
    %1161 = vmatpush1.msra.mxu0 %v1160
    %v1162 = vand.u32 %v1099, 4294901760
    %1163 = vmatprep.subr.mxu0 %v1162
    %v1164 = vand.u32 %v1098, 4294901760
    %1165 = vmatpush1.msra.mxu0 %v1164
    %1166 = vmatprep.subr.mxu0 0.0
    %1167 = vmatpush2.msra.mxu0 0.0
    %1168 = vmatprep.subr.mxu0 0.0
    %1169 = vmatpush2.msra.mxu0 0.0
    %1170 = vmatprep.subr.mxu0 0.0
    %1171 = vmatpush2.msra.mxu0 0.0
    %1172 = vmatprep.subr.mxu0 0.0
    %1173 = vmatpush2.msra.mxu0 0.0
    %1174 = vmatprep.subr.mxu0 0.0
    %1175 = vmatpush2.msra.mxu0 0.0
    %1176 = vmatprep.subr.mxu0 0.0
    %1177 = vmatpush2.msra.mxu0 0.0
    %1178 = vmatprep.subr.mxu0 0.0
    %1179 = vmatpush2.msra.mxu0 0.0
    %1180 = vmatprep.subr.mxu0 0.0
    %1181 = vmatpush2.msra.mxu0 0.0
    %1182 = vmatprep.subr.mxu0 0.0
    %1183 = vmatpush2.msra.mxu0 0.0
    %1184 = vmatprep.subr.mxu0 0.0
    %1185 = vmatpush2.msra.mxu0 0.0
    %1186 = vmatprep.subr.mxu0 0.0
    %1187 = vmatpush2.msra.mxu0 0.0
    %1188 = vmatprep.subr.mxu0 0.0
    %1189 = vmatpush2.msra.mxu0 0.0
    %1190 = vmatprep.subr.mxu0 0.0
    %1191 = vmatpush2.msra.mxu0 0.0
    %1192 = vmatprep.subr.mxu0 0.0
    %1193 = vmatpush2.msra.mxu0 0.0
    %1194 = vmatprep.subr.mxu0 0.0
    %1195 = vmatpush2.msra.mxu0 0.0
    %1196 = vmatprep.subr.mxu0 0.0
    %1197 = vmatpush2.msra.mxu0 0.0
    %1198 = vmatprep.mubr.f32.mxu0 0.0
    %v1199 = vand.u32 %v1116, 4294901760
    %v1200 = vsub.f32 %v1116, %v1199
    %v1201 = vand.u32 %v1200, 4294901760
    %v1202 = vsub.f32 %v1200, %v1201
    %v1203 = vand.u32 %v1202, 4294901760
    %1204 = vmatmul.mubr.f32.gmra.mxu0 %v1203
    %v1205 = vpop.f32.mrf.mxu0
    %v1206 = vadd.f32 0.0, %v1205
    %v1207 = vpop.f32.mrf.mxu0
    %v1208 = vadd.f32 0.0, %v1207
    %1209 = vdwg.mxu0
    %1210 = vmatprep.subr.mxu0 0.0
    %1211 = vmatpush1.msra.mxu0 0.0
    %1212 = vmatprep.subr.mxu0 0.0
    %1213 = vmatpush1.msra.mxu0 0.0
    %1214 = vmatprep.subr.mxu0 0.0
    %1215 = vmatpush1.msra.mxu0 0.0
    %1216 = vmatprep.subr.mxu0 0.0
    %1217 = vmatpush1.msra.mxu0 0.0
    %1218 = vmatprep.subr.mxu0 0.0
    %1219 = vmatpush1.msra.mxu0 0.0
    %1220 = vmatprep.subr.mxu0 0.0
    %1221 = vmatpush1.msra.mxu0 0.0
    %1222 = vmatprep.subr.mxu0 0.0
    %1223 = vmatpush1.msra.mxu0 0.0
    %1224 = vmatprep.subr.mxu0 0.0
    %1225 = vmatpush1.msra.mxu0 0.0
    %v1226 = vand.u32 %v1113, 4294901760
    %v1227 = vsub.f32 %v1113, %v1226
    %v1228 = vand.u32 %v1227, 4294901760
    %v1229 = vsub.f32 %v1227, %v1228
    %v1230 = vand.u32 %v1229, 4294901760
    %1231 = vmatprep.subr.mxu0 %v1230
    %v1232 = vand.u32 %v1112, 4294901760
    %v1233 = vsub.f32 %v1112, %v1232
    %v1234 = vand.u32 %v1233, 4294901760
    %v1235 = vsub.f32 %v1233, %v1234
    %v1236 = vand.u32 %v1235, 4294901760
    %1237 = vmatpush1.msra.mxu0 %v1236
    %v1238 = vand.u32 %v1111, 4294901760
    %v1239 = vsub.f32 %v1111, %v1238
    %v1240 = vand.u32 %v1239, 4294901760
    %v1241 = vsub.f32 %v1239, %v1240
    %v1242 = vand.u32 %v1241, 4294901760
    %1243 = vmatprep.subr.mxu0 %v1242
    %v1244 = vand.u32 %v1110, 4294901760
    %v1245 = vsub.f32 %v1110, %v1244
    %v1246 = vand.u32 %v1245, 4294901760
    %v1247 = vsub.f32 %v1245, %v1246
    %v1248 = vand.u32 %v1247, 4294901760
    %1249 = vmatpush1.msra.mxu0 %v1248
    %v1250 = vand.u32 %v1109, 4294901760
    %v1251 = vsub.f32 %v1109, %v1250
    %v1252 = vand.u32 %v1251, 4294901760
    %v1253 = vsub.f32 %v1251, %v1252
    %v1254 = vand.u32 %v1253, 4294901760
    %1255 = vmatprep.subr.mxu0 %v1254
    %v1256 = vand.u32 %v1108, 4294901760
    %v1257 = vsub.f32 %v1108, %v1256
    %v1258 = vand.u32 %v1257, 4294901760
    %v1259 = vsub.f32 %v1257, %v1258
    %v1260 = vand.u32 %v1259, 4294901760
    %1261 = vmatpush1.msra.mxu0 %v1260
    %v1262 = vand.u32 %v1107, 4294901760
    %v1263 = vsub.f32 %v1107, %v1262
    %v1264 = vand.u32 %v1263, 4294901760
    %v1265 = vsub.f32 %v1263, %v1264
    %v1266 = vand.u32 %v1265, 4294901760
    %1267 = vmatprep.subr.mxu0 %v1266
    %v1268 = vand.u32 %v1106, 4294901760
    %v1269 = vsub.f32 %v1106, %v1268
    %v1270 = vand.u32 %v1269, 4294901760
    %v1271 = vsub.f32 %v1269, %v1270
    %v1272 = vand.u32 %v1271, 4294901760
    %1273 = vmatpush1.msra.mxu0 %v1272
    %v1274 = vand.u32 %v1105, 4294901760
    %v1275 = vsub.f32 %v1105, %v1274
    %v1276 = vand.u32 %v1275, 4294901760
    %v1277 = vsub.f32 %v1275, %v1276
    %v1278 = vand.u32 %v1277, 4294901760
    %1279 = vmatprep.subr.mxu0 %v1278
    %v1280 = vand.u32 %v1104, 4294901760
    %v1281 = vsub.f32 %v1104, %v1280
    %v1282 = vand.u32 %v1281, 4294901760
    %v1283 = vsub.f32 %v1281, %v1282
    %v1284 = vand.u32 %v1283, 4294901760
    %1285 = vmatpush1.msra.mxu0 %v1284
    %v1286 = vand.u32 %v1103, 4294901760
    %v1287 = vsub.f32 %v1103, %v1286
    %v1288 = vand.u32 %v1287, 4294901760
    %v1289 = vsub.f32 %v1287, %v1288
    %v1290 = vand.u32 %v1289, 4294901760
    %1291 = vmatprep.subr.mxu0 %v1290
    %v1292 = vand.u32 %v1102, 4294901760
    %v1293 = vsub.f32 %v1102, %v1292
    %v1294 = vand.u32 %v1293, 4294901760
    %v1295 = vsub.f32 %v1293, %v1294
    %v1296 = vand.u32 %v1295, 4294901760
    %1297 = vmatpush1.msra.mxu0 %v1296
    %v1298 = vand.u32 %v1101, 4294901760
    %v1299 = vsub.f32 %v1101, %v1298
    %v1300 = vand.u32 %v1299, 4294901760
    %v1301 = vsub.f32 %v1299, %v1300
    %v1302 = vand.u32 %v1301, 4294901760
    %1303 = vmatprep.subr.mxu0 %v1302
    %v1304 = vand.u32 %v1100, 4294901760
    %v1305 = vsub.f32 %v1100, %v1304
    %v1306 = vand.u32 %v1305, 4294901760
    %v1307 = vsub.f32 %v1305, %v1306
    %v1308 = vand.u32 %v1307, 4294901760
    %1309 = vmatpush1.msra.mxu0 %v1308
    %v1310 = vand.u32 %v1099, 4294901760
    %v1311 = vsub.f32 %v1099, %v1310
    %v1312 = vand.u32 %v1311, 4294901760
    %v1313 = vsub.f32 %v1311, %v1312
    %v1314 = vand.u32 %v1313, 4294901760
    %1315 = vmatprep.subr.mxu0 %v1314
    %v1316 = vand.u32 %v1098, 4294901760
    %v1317 = vsub.f32 %v1098, %v1316
    %v1318 = vand.u32 %v1317, 4294901760
    %v1319 = vsub.f32 %v1317, %v1318
    %v1320 = vand.u32 %v1319, 4294901760
    %1321 = vmatpush1.msra.mxu0 %v1320
    %1322 = vmatprep.subr.mxu0 0.0
    %1323 = vmatpush2.msra.mxu0 0.0
    %1324 = vmatprep.subr.mxu0 0.0
    %1325 = vmatpush2.msra.mxu0 0.0
    %1326 = vmatprep.subr.mxu0 0.0
    %1327 = vmatpush2.msra.mxu0 0.0
    %1328 = vmatprep.subr.mxu0 0.0
    %1329 = vmatpush2.msra.mxu0 0.0
    %1330 = vmatprep.subr.mxu0 0.0
    %1331 = vmatpush2.msra.mxu0 0.0
    %1332 = vmatprep.subr.mxu0 0.0
    %1333 = vmatpush2.msra.mxu0 0.0
    %1334 = vmatprep.subr.mxu0 0.0
    %1335 = vmatpush2.msra.mxu0 0.0
    %1336 = vmatprep.subr.mxu0 0.0
    %1337 = vmatpush2.msra.mxu0 0.0
    %1338 = vmatprep.subr.mxu0 0.0
    %1339 = vmatpush2.msra.mxu0 0.0
    %1340 = vmatprep.subr.mxu0 0.0
    %1341 = vmatpush2.msra.mxu0 0.0
    %1342 = vmatprep.subr.mxu0 0.0
    %1343 = vmatpush2.msra.mxu0 0.0
    %1344 = vmatprep.subr.mxu0 0.0
    %1345 = vmatpush2.msra.mxu0 0.0
    %1346 = vmatprep.subr.mxu0 0.0
    %1347 = vmatpush2.msra.mxu0 0.0
    %1348 = vmatprep.subr.mxu0 0.0
    %1349 = vmatpush2.msra.mxu0 0.0
    %1350 = vmatprep.subr.mxu0 0.0
    %1351 = vmatpush2.msra.mxu0 0.0
    %1352 = vmatprep.subr.mxu0 0.0
    %1353 = vmatpush2.msra.mxu0 0.0
    %1354 = vmatprep.mubr.f32.mxu0 0.0
    %v1355 = vand.u32 %v1116, 4294901760
    %1356 = vmatmul.mubr.f32.gmra.mxu0 %v1355
    %v1357 = vpop.f32.mrf.mxu0
    %v1358 = vadd.f32 %v1206, %v1357
    %v1359 = vpop.f32.mrf.mxu0
    %v1360 = vadd.f32 %v1208, %v1359
    %1361 = vdwg.mxu0
    %1362 = vmatprep.subr.mxu0 0.0
    %1363 = vmatpush1.msra.mxu0 0.0
    %1364 = vmatprep.subr.mxu0 0.0
    %1365 = vmatpush1.msra.mxu0 0.0
    %1366 = vmatprep.subr.mxu0 0.0
    %1367 = vmatpush1.msra.mxu0 0.0
    %1368 = vmatprep.subr.mxu0 0.0
    %1369 = vmatpush1.msra.mxu0 0.0
    %1370 = vmatprep.subr.mxu0 0.0
    %1371 = vmatpush1.msra.mxu0 0.0
    %1372 = vmatprep.subr.mxu0 0.0
    %1373 = vmatpush1.msra.mxu0 0.0
    %1374 = vmatprep.subr.mxu0 0.0
    %1375 = vmatpush1.msra.mxu0 0.0
    %1376 = vmatprep.subr.mxu0 0.0
    %1377 = vmatpush1.msra.mxu0 0.0
    %v1378 = vand.u32 %v1113, 4294901760
    %v1379 = vsub.f32 %v1113, %v1378
    %1380 = vmatprep.subr.mxu0 %v1379
    %v1381 = vand.u32 %v1112, 4294901760
    %v1382 = vsub.f32 %v1112, %v1381
    %1383 = vmatpush1.msra.mxu0 %v1382
    %v1384 = vand.u32 %v1111, 4294901760
    %v1385 = vsub.f32 %v1111, %v1384
    %1386 = vmatprep.subr.mxu0 %v1385
    %v1387 = vand.u32 %v1110, 4294901760
    %v1388 = vsub.f32 %v1110, %v1387
    %1389 = vmatpush1.msra.mxu0 %v1388
    %v1390 = vand.u32 %v1109, 4294901760
    %v1391 = vsub.f32 %v1109, %v1390
    %1392 = vmatprep.subr.mxu0 %v1391
    %v1393 = vand.u32 %v1108, 4294901760
    %v1394 = vsub.f32 %v1108, %v1393
    %1395 = vmatpush1.msra.mxu0 %v1394
    %v1396 = vand.u32 %v1107, 4294901760
    %v1397 = vsub.f32 %v1107, %v1396
    %1398 = vmatprep.subr.mxu0 %v1397
    %v1399 = vand.u32 %v1106, 4294901760
    %v1400 = vsub.f32 %v1106, %v1399
    %1401 = vmatpush1.msra.mxu0 %v1400
    %v1402 = vand.u32 %v1105, 4294901760
    %v1403 = vsub.f32 %v1105, %v1402
    %1404 = vmatprep.subr.mxu0 %v1403
    %v1405 = vand.u32 %v1104, 4294901760
    %v1406 = vsub.f32 %v1104, %v1405
    %1407 = vmatpush1.msra.mxu0 %v1406
    %v1408 = vand.u32 %v1103, 4294901760
    %v1409 = vsub.f32 %v1103, %v1408
    %1410 = vmatprep.subr.mxu0 %v1409
    %v1411 = vand.u32 %v1102, 4294901760
    %v1412 = vsub.f32 %v1102, %v1411
    %1413 = vmatpush1.msra.mxu0 %v1412
    %v1414 = vand.u32 %v1101, 4294901760
    %v1415 = vsub.f32 %v1101, %v1414
    %1416 = vmatprep.subr.mxu0 %v1415
    %v1417 = vand.u32 %v1100, 4294901760
    %v1418 = vsub.f32 %v1100, %v1417
    %1419 = vmatpush1.msra.mxu0 %v1418
    %v1420 = vand.u32 %v1099, 4294901760
    %v1421 = vsub.f32 %v1099, %v1420
    %1422 = vmatprep.subr.mxu0 %v1421
    %v1423 = vand.u32 %v1098, 4294901760
    %v1424 = vsub.f32 %v1098, %v1423
    %1425 = vmatpush1.msra.mxu0 %v1424
    %1426 = vmatprep.subr.mxu0 0.0
    %1427 = vmatpush2.msra.mxu0 0.0
    %1428 = vmatprep.subr.mxu0 0.0
    %1429 = vmatpush2.msra.mxu0 0.0
    %1430 = vmatprep.subr.mxu0 0.0
    %1431 = vmatpush2.msra.mxu0 0.0
    %1432 = vmatprep.subr.mxu0 0.0
    %1433 = vmatpush2.msra.mxu0 0.0
    %1434 = vmatprep.subr.mxu0 0.0
    %1435 = vmatpush2.msra.mxu0 0.0
    %1436 = vmatprep.subr.mxu0 0.0
    %1437 = vmatpush2.msra.mxu0 0.0
    %1438 = vmatprep.subr.mxu0 0.0
    %1439 = vmatpush2.msra.mxu0 0.0
    %1440 = vmatprep.subr.mxu0 0.0
    %1441 = vmatpush2.msra.mxu0 0.0
    %1442 = vmatprep.subr.mxu0 0.0
    %1443 = vmatpush2.msra.mxu0 0.0
    %1444 = vmatprep.subr.mxu0 0.0
    %1445 = vmatpush2.msra.mxu0 0.0
    %1446 = vmatprep.subr.mxu0 0.0
    %1447 = vmatpush2.msra.mxu0 0.0
    %1448 = vmatprep.subr.mxu0 0.0
    %1449 = vmatpush2.msra.mxu0 0.0
    %1450 = vmatprep.subr.mxu0 0.0
    %1451 = vmatpush2.msra.mxu0 0.0
    %1452 = vmatprep.subr.mxu0 0.0
    %1453 = vmatpush2.msra.mxu0 0.0
    %1454 = vmatprep.subr.mxu0 0.0
    %1455 = vmatpush2.msra.mxu0 0.0
    %1456 = vmatprep.subr.mxu0 0.0
    %1457 = vmatpush2.msra.mxu0 0.0
    %1458 = vmatprep.mubr.f32.mxu0 0.0
    %v1459 = vand.u32 %v1116, 4294901760
    %v1460 = vsub.f32 %v1116, %v1459
    %1461 = vmatmul.mubr.f32.gmra.mxu0 %v1460
    %v1462 = vpop.f32.mrf.mxu0
    %v1463 = vadd.f32 %v1358, %v1462
    %v1464 = vpop.f32.mrf.mxu0
    %v1465 = vadd.f32 %v1360, %v1464
    %1466 = vdwg.mxu0
    %1467 = vmatprep.subr.mxu0 0.0
    %1468 = vmatpush1.msra.mxu0 0.0
    %1469 = vmatprep.subr.mxu0 0.0
    %1470 = vmatpush1.msra.mxu0 0.0
    %1471 = vmatprep.subr.mxu0 0.0
    %1472 = vmatpush1.msra.mxu0 0.0
    %1473 = vmatprep.subr.mxu0 0.0
    %1474 = vmatpush1.msra.mxu0 0.0
    %1475 = vmatprep.subr.mxu0 0.0
    %1476 = vmatpush1.msra.mxu0 0.0
    %1477 = vmatprep.subr.mxu0 0.0
    %1478 = vmatpush1.msra.mxu0 0.0
    %1479 = vmatprep.subr.mxu0 0.0
    %1480 = vmatpush1.msra.mxu0 0.0
    %1481 = vmatprep.subr.mxu0 0.0
    %1482 = vmatpush1.msra.mxu0 0.0
    %v1483 = vand.u32 %v1113, 4294901760
    %1484 = vmatprep.subr.mxu0 %v1483
    %v1485 = vand.u32 %v1112, 4294901760
    %1486 = vmatpush1.msra.mxu0 %v1485
    %v1487 = vand.u32 %v1111, 4294901760
    %1488 = vmatprep.subr.mxu0 %v1487
    %v1489 = vand.u32 %v1110, 4294901760
    %1490 = vmatpush1.msra.mxu0 %v1489
    %v1491 = vand.u32 %v1109, 4294901760
    %1492 = vmatprep.subr.mxu0 %v1491
    %v1493 = vand.u32 %v1108, 4294901760
    %1494 = vmatpush1.msra.mxu0 %v1493
    %v1495 = vand.u32 %v1107, 4294901760
    %1496 = vmatprep.subr.mxu0 %v1495
    %v1497 = vand.u32 %v1106, 4294901760
    %1498 = vmatpush1.msra.mxu0 %v1497
    %v1499 = vand.u32 %v1105, 4294901760
    %1500 = vmatprep.subr.mxu0 %v1499
    %v1501 = vand.u32 %v1104, 4294901760
    %1502 = vmatpush1.msra.mxu0 %v1501
    %v1503 = vand.u32 %v1103, 4294901760
    %1504 = vmatprep.subr.mxu0 %v1503
    %v1505 = vand.u32 %v1102, 4294901760
    %1506 = vmatpush1.msra.mxu0 %v1505
    %v1507 = vand.u32 %v1101, 4294901760
    %1508 = vmatprep.subr.mxu0 %v1507
    %v1509 = vand.u32 %v1100, 4294901760
    %1510 = vmatpush1.msra.mxu0 %v1509
    %v1511 = vand.u32 %v1099, 4294901760
    %1512 = vmatprep.subr.mxu0 %v1511
    %v1513 = vand.u32 %v1098, 4294901760
    %1514 = vmatpush1.msra.mxu0 %v1513
    %1515 = vmatprep.subr.mxu0 0.0
    %1516 = vmatpush2.msra.mxu0 0.0
    %1517 = vmatprep.subr.mxu0 0.0
    %1518 = vmatpush2.msra.mxu0 0.0
    %1519 = vmatprep.subr.mxu0 0.0
    %1520 = vmatpush2.msra.mxu0 0.0
    %1521 = vmatprep.subr.mxu0 0.0
    %1522 = vmatpush2.msra.mxu0 0.0
    %1523 = vmatprep.subr.mxu0 0.0
    %1524 = vmatpush2.msra.mxu0 0.0
    %1525 = vmatprep.subr.mxu0 0.0
    %1526 = vmatpush2.msra.mxu0 0.0
    %1527 = vmatprep.subr.mxu0 0.0
    %1528 = vmatpush2.msra.mxu0 0.0
    %1529 = vmatprep.subr.mxu0 0.0
    %1530 = vmatpush2.msra.mxu0 0.0
    %1531 = vmatprep.subr.mxu0 0.0
    %1532 = vmatpush2.msra.mxu0 0.0
    %1533 = vmatprep.subr.mxu0 0.0
    %1534 = vmatpush2.msra.mxu0 0.0
    %1535 = vmatprep.subr.mxu0 0.0
    %1536 = vmatpush2.msra.mxu0 0.0
    %1537 = vmatprep.subr.mxu0 0.0
    %1538 = vmatpush2.msra.mxu0 0.0
    %1539 = vmatprep.subr.mxu0 0.0
    %1540 = vmatpush2.msra.mxu0 0.0
    %1541 = vmatprep.subr.mxu0 0.0
    %1542 = vmatpush2.msra.mxu0 0.0
    %1543 = vmatprep.subr.mxu0 0.0
    %1544 = vmatpush2.msra.mxu0 0.0
    %1545 = vmatprep.subr.mxu0 0.0
    %1546 = vmatpush2.msra.mxu0 0.0
    %1547 = vmatprep.mubr.f32.mxu0 0.0
    %v1548 = vand.u32 %v1116, 4294901760
    %v1549 = vsub.f32 %v1116, %v1548
    %v1550 = vand.u32 %v1549, 4294901760
    %1551 = vmatmul.mubr.f32.gmra.mxu0 %v1550
    %v1552 = vpop.f32.mrf.mxu0
    %v1553 = vadd.f32 %v1463, %v1552
    %v1554 = vpop.f32.mrf.mxu0
    %v1555 = vadd.f32 %v1465, %v1554
    %1556 = vdwg.mxu0
    %1557 = vmatprep.subr.mxu0 0.0
    %1558 = vmatpush1.msra.mxu0 0.0
    %1559 = vmatprep.subr.mxu0 0.0
    %1560 = vmatpush1.msra.mxu0 0.0
    %1561 = vmatprep.subr.mxu0 0.0
    %1562 = vmatpush1.msra.mxu0 0.0
    %1563 = vmatprep.subr.mxu0 0.0
    %1564 = vmatpush1.msra.mxu0 0.0
    %1565 = vmatprep.subr.mxu0 0.0
    %1566 = vmatpush1.msra.mxu0 0.0
    %1567 = vmatprep.subr.mxu0 0.0
    %1568 = vmatpush1.msra.mxu0 0.0
    %1569 = vmatprep.subr.mxu0 0.0
    %1570 = vmatpush1.msra.mxu0 0.0
    %1571 = vmatprep.subr.mxu0 0.0
    %1572 = vmatpush1.msra.mxu0 0.0
    %v1573 = vand.u32 %v1113, 4294901760
    %v1574 = vsub.f32 %v1113, %v1573
    %v1575 = vand.u32 %v1574, 4294901760
    %1576 = vmatprep.subr.mxu0 %v1575
    %v1577 = vand.u32 %v1112, 4294901760
    %v1578 = vsub.f32 %v1112, %v1577
    %v1579 = vand.u32 %v1578, 4294901760
    %1580 = vmatpush1.msra.mxu0 %v1579
    %v1581 = vand.u32 %v1111, 4294901760
    %v1582 = vsub.f32 %v1111, %v1581
    %v1583 = vand.u32 %v1582, 4294901760
    %1584 = vmatprep.subr.mxu0 %v1583
    %v1585 = vand.u32 %v1110, 4294901760
    %v1586 = vsub.f32 %v1110, %v1585
    %v1587 = vand.u32 %v1586, 4294901760
    %1588 = vmatpush1.msra.mxu0 %v1587
    %v1589 = vand.u32 %v1109, 4294901760
    %v1590 = vsub.f32 %v1109, %v1589
    %v1591 = vand.u32 %v1590, 4294901760
    %1592 = vmatprep.subr.mxu0 %v1591
    %v1593 = vand.u32 %v1108, 4294901760
    %v1594 = vsub.f32 %v1108, %v1593
    %v1595 = vand.u32 %v1594, 4294901760
    %1596 = vmatpush1.msra.mxu0 %v1595
    %v1597 = vand.u32 %v1107, 4294901760
    %v1598 = vsub.f32 %v1107, %v1597
    %v1599 = vand.u32 %v1598, 4294901760
    %1600 = vmatprep.subr.mxu0 %v1599
    %v1601 = vand.u32 %v1106, 4294901760
    %v1602 = vsub.f32 %v1106, %v1601
    %v1603 = vand.u32 %v1602, 4294901760
    %1604 = vmatpush1.msra.mxu0 %v1603
    %v1605 = vand.u32 %v1105, 4294901760
    %v1606 = vsub.f32 %v1105, %v1605
    %v1607 = vand.u32 %v1606, 4294901760
    %1608 = vmatprep.subr.mxu0 %v1607
    %v1609 = vand.u32 %v1104, 4294901760
    %v1610 = vsub.f32 %v1104, %v1609
    %v1611 = vand.u32 %v1610, 4294901760
    %1612 = vmatpush1.msra.mxu0 %v1611
    %v1613 = vand.u32 %v1103, 4294901760
    %v1614 = vsub.f32 %v1103, %v1613
    %v1615 = vand.u32 %v1614, 4294901760
    %1616 = vmatprep.subr.mxu0 %v1615
    %v1617 = vand.u32 %v1102, 4294901760
    %v1618 = vsub.f32 %v1102, %v1617
    %v1619 = vand.u32 %v1618, 4294901760
    %1620 = vmatpush1.msra.mxu0 %v1619
    %v1621 = vand.u32 %v1101, 4294901760
    %v1622 = vsub.f32 %v1101, %v1621
    %v1623 = vand.u32 %v1622, 4294901760
    %1624 = vmatprep.subr.mxu0 %v1623
    %v1625 = vand.u32 %v1100, 4294901760
    %v1626 = vsub.f32 %v1100, %v1625
    %v1627 = vand.u32 %v1626, 4294901760
    %1628 = vmatpush1.msra.mxu0 %v1627
    %v1629 = vand.u32 %v1099, 4294901760
    %v1630 = vsub.f32 %v1099, %v1629
    %v1631 = vand.u32 %v1630, 4294901760
    %1632 = vmatprep.subr.mxu0 %v1631
    %v1633 = vand.u32 %v1098, 4294901760
    %v1634 = vsub.f32 %v1098, %v1633
    %v1635 = vand.u32 %v1634, 4294901760
    %1636 = vmatpush1.msra.mxu0 %v1635
    %1637 = vmatprep.subr.mxu0 0.0
    %1638 = vmatpush2.msra.mxu0 0.0
    %1639 = vmatprep.subr.mxu0 0.0
    %1640 = vmatpush2.msra.mxu0 0.0
    %1641 = vmatprep.subr.mxu0 0.0
    %1642 = vmatpush2.msra.mxu0 0.0
    %1643 = vmatprep.subr.mxu0 0.0
    %1644 = vmatpush2.msra.mxu0 0.0
    %1645 = vmatprep.subr.mxu0 0.0
    %1646 = vmatpush2.msra.mxu0 0.0
    %1647 = vmatprep.subr.mxu0 0.0
    %1648 = vmatpush2.msra.mxu0 0.0
    %1649 = vmatprep.subr.mxu0 0.0
    %1650 = vmatpush2.msra.mxu0 0.0
    %1651 = vmatprep.subr.mxu0 0.0
    %1652 = vmatpush2.msra.mxu0 0.0
    %1653 = vmatprep.subr.mxu0 0.0
    %1654 = vmatpush2.msra.mxu0 0.0
    %1655 = vmatprep.subr.mxu0 0.0
    %1656 = vmatpush2.msra.mxu0 0.0
    %1657 = vmatprep.subr.mxu0 0.0
    %1658 = vmatpush2.msra.mxu0 0.0
    %1659 = vmatprep.subr.mxu0 0.0
    %1660 = vmatpush2.msra.mxu0 0.0
    %1661 = vmatprep.subr.mxu0 0.0
    %1662 = vmatpush2.msra.mxu0 0.0
    %1663 = vmatprep.subr.mxu0 0.0
    %1664 = vmatpush2.msra.mxu0 0.0
    %1665 = vmatprep.subr.mxu0 0.0
    %1666 = vmatpush2.msra.mxu0 0.0
    %1667 = vmatprep.subr.mxu0 0.0
    %1668 = vmatpush2.msra.mxu0 0.0
    %1669 = vmatprep.mubr.f32.mxu0 0.0
    %v1670 = vand.u32 %v1116, 4294901760
    %1671 = vmatmul.mubr.f32.gmra.mxu0 %v1670
    %v1672 = vpop.f32.mrf.mxu0
    %v1673 = vadd.f32 %v1553, %v1672
    %v1674 = vpop.f32.mrf.mxu0
    %v1675 = vadd.f32 %v1555, %v1674
    %1676 = vdwg.mxu0
    %1677 = vmatprep.subr.mxu0 0.0
    %1678 = vmatpush1.msra.mxu0 0.0
    %1679 = vmatprep.subr.mxu0 0.0
    %1680 = vmatpush1.msra.mxu0 0.0
    %1681 = vmatprep.subr.mxu0 0.0
    %1682 = vmatpush1.msra.mxu0 0.0
    %1683 = vmatprep.subr.mxu0 0.0
    %1684 = vmatpush1.msra.mxu0 0.0
    %1685 = vmatprep.subr.mxu0 0.0
    %1686 = vmatpush1.msra.mxu0 0.0
    %1687 = vmatprep.subr.mxu0 0.0
    %1688 = vmatpush1.msra.mxu0 0.0
    %1689 = vmatprep.subr.mxu0 0.0
    %1690 = vmatpush1.msra.mxu0 0.0
    %1691 = vmatprep.subr.mxu0 0.0
    %1692 = vmatpush1.msra.mxu0 0.0
    %v1693 = vand.u32 %v1113, 4294901760
    %1694 = vmatprep.subr.mxu0 %v1693
    %v1695 = vand.u32 %v1112, 4294901760
    %1696 = vmatpush1.msra.mxu0 %v1695
    %v1697 = vand.u32 %v1111, 4294901760
    %1698 = vmatprep.subr.mxu0 %v1697
    %v1699 = vand.u32 %v1110, 4294901760
    %1700 = vmatpush1.msra.mxu0 %v1699
    %v1701 = vand.u32 %v1109, 4294901760
    %1702 = vmatprep.subr.mxu0 %v1701
    %v1703 = vand.u32 %v1108, 4294901760
    %1704 = vmatpush1.msra.mxu0 %v1703
    %v1705 = vand.u32 %v1107, 4294901760
    %1706 = vmatprep.subr.mxu0 %v1705
    %v1707 = vand.u32 %v1106, 4294901760
    %1708 = vmatpush1.msra.mxu0 %v1707
    %v1709 = vand.u32 %v1105, 4294901760
    %1710 = vmatprep.subr.mxu0 %v1709
    %v1711 = vand.u32 %v1104, 4294901760
    %1712 = vmatpush1.msra.mxu0 %v1711
    %v1713 = vand.u32 %v1103, 4294901760
    %1714 = vmatprep.subr.mxu0 %v1713
    %v1715 = vand.u32 %v1102, 4294901760
    %1716 = vmatpush1.msra.mxu0 %v1715
    %v1717 = vand.u32 %v1101, 4294901760
    %1718 = vmatprep.subr.mxu0 %v1717
    %v1719 = vand.u32 %v1100, 4294901760
    %1720 = vmatpush1.msra.mxu0 %v1719
    %v1721 = vand.u32 %v1099, 4294901760
    %1722 = vmatprep.subr.mxu0 %v1721
    %v1723 = vand.u32 %v1098, 4294901760
    %1724 = vmatpush1.msra.mxu0 %v1723
    %1725 = vmatprep.subr.mxu0 0.0
    %1726 = vmatpush2.msra.mxu0 0.0
    %1727 = vmatprep.subr.mxu0 0.0
    %1728 = vmatpush2.msra.mxu0 0.0
    %1729 = vmatprep.subr.mxu0 0.0
    %1730 = vmatpush2.msra.mxu0 0.0
    %1731 = vmatprep.subr.mxu0 0.0
    %1732 = vmatpush2.msra.mxu0 0.0
    %1733 = vmatprep.subr.mxu0 0.0
    %1734 = vmatpush2.msra.mxu0 0.0
    %1735 = vmatprep.subr.mxu0 0.0
    %1736 = vmatpush2.msra.mxu0 0.0
    %1737 = vmatprep.subr.mxu0 0.0
    %1738 = vmatpush2.msra.mxu0 0.0
    %1739 = vmatprep.subr.mxu0 0.0
    %1740 = vmatpush2.msra.mxu0 0.0
    %1741 = vmatprep.subr.mxu0 0.0
    %1742 = vmatpush2.msra.mxu0 0.0
    %1743 = vmatprep.subr.mxu0 0.0
    %1744 = vmatpush2.msra.mxu0 0.0
    %1745 = vmatprep.subr.mxu0 0.0
    %1746 = vmatpush2.msra.mxu0 0.0
    %1747 = vmatprep.subr.mxu0 0.0
    %1748 = vmatpush2.msra.mxu0 0.0
    %1749 = vmatprep.subr.mxu0 0.0
    %1750 = vmatpush2.msra.mxu0 0.0
    %1751 = vmatprep.subr.mxu0 0.0
    %1752 = vmatpush2.msra.mxu0 0.0
    %1753 = vmatprep.subr.mxu0 0.0
    %1754 = vmatpush2.msra.mxu0 0.0
    %1755 = vmatprep.subr.mxu0 0.0
    %1756 = vmatpush2.msra.mxu0 0.0
    %1757 = vmatprep.mubr.f32.mxu0 0.0
    %v1758 = vand.u32 %v1116, 4294901760
    %1759 = vmatmul.mubr.f32.gmra.mxu0 %v1758
    %v1760 = vpop.f32.mrf.mxu0
    %v1761 = vadd.f32 %v1673, %v1760
    %v1762 = vpop.f32.mrf.mxu0
    %v1763 = vadd.f32 %v1675, %v1762
    %1764 = vdwg.mxu0
    %v1765 = vld [vmem:[#allocation5 + $0xe0] sm:$0xf]
    %v1766 = vld [vmem:[#allocation5 + $0xe8] sm:$0xf]
    %v1767 = vlaneseq
    %v1768 = vshrl.u32 %v1767, 7
    %v1769 = vsub.s32 0, %v1768
    %v1770 = vrot.slane %v1765, %v1769
    %v1771 = vlaneseq
    %v1772 = vshrl.u32 %v1771, 7
    %v1773 = vsub.s32 0, %v1772
    %v1774 = vrot.slane %v1766, %v1773
    %v1775 = vmul.f32 %v1761, %v1770
    %v1776 = vmul.f32 %v1763, %v1774
    %s1777 = scalar_lea.vmem [#allocation5], 240
    %v1778 = vld [vmem:[%s1777] ss:$8 sm:$0x3]
    %v1780 = vlaneseq
    %v1781 = vshrl.u32 %v1780, 7
    %v1782 = vsub.s32 0, %v1781
    %v1783 = vrot.slane %v1778, %v1782
    %v1784 = vlaneseq
    %v1785 = vshrl.u32 %v1784, 7
    %v1786 = vsub.s32 1, %v1785
    %v1787 = vrot.slane %v1778, %v1786
    %v1790 = vadd.f32 %v1775, %v1783
    %v1791 = vadd.f32 %v1776, %v1787
    %v1794 = vrot.slane %v1761, 7
    %v1795 = vrot.slane %v1763, 7
    %vm1798 = vcmask 1040384
    %v1799 = vsel %vm1798, 0.0, %v1794
    %v1800 = vsel %vm1798, 0.0, %v1795
    %v1801 = vlaneseq
    %v1802 = vshrl.u32 %v1801, 7
    %v1803 = vsub.s32 1, %v1802
    %v1804 = vrot.slane %v1765, %v1803
    %v1805 = vlaneseq
    %v1806 = vshrl.u32 %v1805, 7
    %v1807 = vsub.s32 1, %v1806
    %v1808 = vrot.slane %v1766, %v1807
    %v1809 = vmul.f32 %v1799, %v1804
    %v1810 = vmul.f32 %v1800, %v1808
    %v1811 = vadd.f32 %v1790, %v1809
    %v1812 = vadd.f32 %v1791, %v1810
    %v1813 = vrot.slane %v1761, 6
    %v1814 = vrot.slane %v1763, 6
    %vm1817 = vcmask 1041408
    %v1818 = vsel %vm1817, 0.0, %v1813
    %v1819 = vsel %vm1817, 0.0, %v1814
    %v1820 = vlaneseq
    %v1821 = vshrl.u32 %v1820, 7
    %v1822 = vsub.s32 2, %v1821
    %v1823 = vrot.slane %v1765, %v1822
    %v1824 = vlaneseq
    %v1825 = vshrl.u32 %v1824, 7
    %v1826 = vsub.s32 2, %v1825
    %v1827 = vrot.slane %v1766, %v1826
    %v1828 = vmul.f32 %v1818, %v1823
    %v1829 = vmul.f32 %v1819, %v1827
    %v1830 = vadd.f32 %v1811, %v1828
    %v1831 = vadd.f32 %v1812, %v1829
    %v1832 = vrot.slane %v1761, 5
    %v1833 = vrot.slane %v1763, 5
    %vm1836 = vcmask 1042432
    %v1837 = vsel %vm1836, 0.0, %v1832
    %v1838 = vsel %vm1836, 0.0, %v1833
    %v1839 = vlaneseq
    %v1840 = vshrl.u32 %v1839, 7
    %v1841 = vsub.s32 3, %v1840
    %v1842 = vrot.slane %v1765, %v1841
    %v1843 = vlaneseq
    %v1844 = vshrl.u32 %v1843, 7
    %v1845 = vsub.s32 3, %v1844
    %v1846 = vrot.slane %v1766, %v1845
    %v1847 = vmul.f32 %v1837, %v1842
    %v1848 = vmul.f32 %v1838, %v1846
    %v1849 = vadd.f32 %v1830, %v1847
    %v1850 = vadd.f32 %v1831, %v1848
    %v1851 = vmul.f32 %v1849, 0.5
    %v1852 = vmul.f32 %v1850, 0.5
    %v1853 = vtanh.pop %v1851
    %v1854 = vtanh.pop %v1852
    %v1855 = vmul.f32 %v1853, 0.5
    %v1856 = vmul.f32 %v1854, 0.5
    %v1857 = vadd.f32 %v1855, 0.5
    %v1858 = vadd.f32 %v1856, 0.5
    %v1859 = vmul.f32 %v1849, %v1857
    %v1860 = vmul.f32 %v1850, %v1858
    %v1861 = vld [vmem:[#allocation5 + $0x100] sm:$0xff]
    %v1862 = vld [vmem:[#allocation5 + $0x110] sm:$0xff]
    %v1863 = vld [vmem:[#allocation5 + $0x120] sm:$0xff]
    %v1864 = vld [vmem:[#allocation5 + $0x130] sm:$0xff]
    %v1865 = vld [vmem:[#allocation5 + $0x140] sm:$0xff]
    %v1866 = vld [vmem:[#allocation5 + $0x150] sm:$0xff]
    %v1867 = vld [vmem:[#allocation5 + $0x160] sm:$0xff]
    %v1868 = vld [vmem:[#allocation5 + $0x170] sm:$0xff]
    %v1869 = vld [vmem:[#allocation5 + $0x180] sm:$0xff]
    %v1870 = vld [vmem:[#allocation5 + $0x190] sm:$0xff]
    %v1871 = vld [vmem:[#allocation5 + $0x1a0] sm:$0xff]
    %v1872 = vld [vmem:[#allocation5 + $0x1b0] sm:$0xff]
    %v1873 = vld [vmem:[#allocation5 + $0x1c0] sm:$0xff]
    %v1874 = vld [vmem:[#allocation5 + $0x1d0] sm:$0xff]
    %v1875 = vld [vmem:[#allocation5 + $0x1e0] sm:$0xff]
    %v1876 = vld [vmem:[#allocation5 + $0x1f0] sm:$0xff]
    %v1877 = vld [vmem:[#allocation5 + $0x200] ss:$0 sm:$0xff]
    %1878 = vmatprep.subr.mxu0 0.0
    %v1879 = vand.u32 %v1876, 4294901760
    %1880 = vmatpush1.msra.mxu0 %v1879
    %1881 = vmatprep.subr.mxu0 0.0
    %v1882 = vand.u32 %v1875, 4294901760
    %1883 = vmatpush1.msra.mxu0 %v1882
    %1884 = vmatprep.subr.mxu0 0.0
    %v1885 = vand.u32 %v1874, 4294901760
    %1886 = vmatpush1.msra.mxu0 %v1885
    %1887 = vmatprep.subr.mxu0 0.0
    %v1888 = vand.u32 %v1873, 4294901760
    %1889 = vmatpush1.msra.mxu0 %v1888
    %1890 = vmatprep.subr.mxu0 0.0
    %v1891 = vand.u32 %v1872, 4294901760
    %1892 = vmatpush1.msra.mxu0 %v1891
    %1893 = vmatprep.subr.mxu0 0.0
    %v1894 = vand.u32 %v1871, 4294901760
    %1895 = vmatpush1.msra.mxu0 %v1894
    %1896 = vmatprep.subr.mxu0 0.0
    %v1897 = vand.u32 %v1870, 4294901760
    %1898 = vmatpush1.msra.mxu0 %v1897
    %1899 = vmatprep.subr.mxu0 0.0
    %v1900 = vand.u32 %v1869, 4294901760
    %1901 = vmatpush1.msra.mxu0 %v1900
    %1902 = vmatprep.subr.mxu0 0.0
    %v1903 = vand.u32 %v1868, 4294901760
    %1904 = vmatpush1.msra.mxu0 %v1903
    %1905 = vmatprep.subr.mxu0 0.0
    %v1906 = vand.u32 %v1867, 4294901760
    %1907 = vmatpush1.msra.mxu0 %v1906
    %1908 = vmatprep.subr.mxu0 0.0
    %v1909 = vand.u32 %v1866, 4294901760
    %1910 = vmatpush1.msra.mxu0 %v1909
    %1911 = vmatprep.subr.mxu0 0.0
    %v1912 = vand.u32 %v1865, 4294901760
    %1913 = vmatpush1.msra.mxu0 %v1912
    %1914 = vmatprep.subr.mxu0 0.0
    %v1915 = vand.u32 %v1864, 4294901760
    %1916 = vmatpush1.msra.mxu0 %v1915
    %1917 = vmatprep.subr.mxu0 0.0
    %v1918 = vand.u32 %v1863, 4294901760
    %1919 = vmatpush1.msra.mxu0 %v1918
    %1920 = vmatprep.subr.mxu0 0.0
    %v1921 = vand.u32 %v1862, 4294901760
    %1922 = vmatpush1.msra.mxu0 %v1921
    %1923 = vmatprep.subr.mxu0 0.0
    %v1924 = vand.u32 %v1861, 4294901760
    %1925 = vmatpush1.msra.mxu0 %v1924
    %1926 = vmatprep.subr.mxu0 0.0
    %1927 = vmatpush2.msra.mxu0 0.0
    %1928 = vmatprep.subr.mxu0 0.0
    %1929 = vmatpush2.msra.mxu0 0.0
    %1930 = vmatprep.subr.mxu0 0.0
    %1931 = vmatpush2.msra.mxu0 0.0
    %1932 = vmatprep.subr.mxu0 0.0
    %1933 = vmatpush2.msra.mxu0 0.0
    %1934 = vmatprep.subr.mxu0 0.0
    %1935 = vmatpush2.msra.mxu0 0.0
    %1936 = vmatprep.subr.mxu0 0.0
    %1937 = vmatpush2.msra.mxu0 0.0
    %1938 = vmatprep.subr.mxu0 0.0
    %1939 = vmatpush2.msra.mxu0 0.0
    %1940 = vmatprep.subr.mxu0 0.0
    %1941 = vmatpush2.msra.mxu0 0.0
    %1942 = vmatprep.subr.mxu0 0.0
    %1943 = vmatpush2.msra.mxu0 0.0
    %1944 = vmatprep.subr.mxu0 0.0
    %1945 = vmatpush2.msra.mxu0 0.0
    %1946 = vmatprep.subr.mxu0 0.0
    %1947 = vmatpush2.msra.mxu0 0.0
    %1948 = vmatprep.subr.mxu0 0.0
    %1949 = vmatpush2.msra.mxu0 0.0
    %1950 = vmatprep.subr.mxu0 0.0
    %1951 = vmatpush2.msra.mxu0 0.0
    %1952 = vmatprep.subr.mxu0 0.0
    %1953 = vmatpush2.msra.mxu0 0.0
    %1954 = vmatprep.subr.mxu0 0.0
    %1955 = vmatpush2.msra.mxu0 0.0
    %1956 = vmatprep.subr.mxu0 0.0
    %1957 = vmatpush2.msra.mxu0 0.0
    %1958 = vmatprep.mubr.f32.mxu0 0.0
    %v1959 = vand.u32 %v1859, 4294901760
    %v1960 = vsub.f32 %v1859, %v1959
    %v1961 = vand.u32 %v1960, 4294901760
    %v1962 = vsub.f32 %v1960, %v1961
    %v1963 = vand.u32 %v1962, 4294901760
    %1964 = vmatmul.mubr.f32.gmra.mxu0 %v1963
    %v1965 = vpop.f32.mrf.mxu0
    %v1966 = vadd.f32 %v1877, %v1965
    %v1967 = vpop.f32.mrf.mxu0
    %1968 = vdwg.mxu0
    %1969 = vmatprep.subr.mxu0 0.0
    %v1970 = vand.u32 %v1876, 4294901760
    %v1971 = vsub.f32 %v1876, %v1970
    %v1972 = vand.u32 %v1971, 4294901760
    %v1973 = vsub.f32 %v1971, %v1972
    %v1974 = vand.u32 %v1973, 4294901760
    %1975 = vmatpush1.msra.mxu0 %v1974
    %1976 = vmatprep.subr.mxu0 0.0
    %v1977 = vand.u32 %v1875, 4294901760
    %v1978 = vsub.f32 %v1875, %v1977
    %v1979 = vand.u32 %v1978, 4294901760
    %v1980 = vsub.f32 %v1978, %v1979
    %v1981 = vand.u32 %v1980, 4294901760
    %1982 = vmatpush1.msra.mxu0 %v1981
    %1983 = vmatprep.subr.mxu0 0.0
    %v1984 = vand.u32 %v1874, 4294901760
    %v1985 = vsub.f32 %v1874, %v1984
    %v1986 = vand.u32 %v1985, 4294901760
    %v1987 = vsub.f32 %v1985, %v1986
    %v1988 = vand.u32 %v1987, 4294901760
    %1989 = vmatpush1.msra.mxu0 %v1988
    %1990 = vmatprep.subr.mxu0 0.0
    %v1991 = vand.u32 %v1873, 4294901760
    %v1992 = vsub.f32 %v1873, %v1991
    %v1993 = vand.u32 %v1992, 4294901760
    %v1994 = vsub.f32 %v1992, %v1993
    %v1995 = vand.u32 %v1994, 4294901760
    %1996 = vmatpush1.msra.mxu0 %v1995
    %1997 = vmatprep.subr.mxu0 0.0
    %v1998 = vand.u32 %v1872, 4294901760
    %v1999 = vsub.f32 %v1872, %v1998
    %v2000 = vand.u32 %v1999, 4294901760
    %v2001 = vsub.f32 %v1999, %v2000
    %v2002 = vand.u32 %v2001, 4294901760
    %2003 = vmatpush1.msra.mxu0 %v2002
    %2004 = vmatprep.subr.mxu0 0.0
    %v2005 = vand.u32 %v1871, 4294901760
    %v2006 = vsub.f32 %v1871, %v2005
    %v2007 = vand.u32 %v2006, 4294901760
    %v2008 = vsub.f32 %v2006, %v2007
    %v2009 = vand.u32 %v2008, 4294901760
    %2010 = vmatpush1.msra.mxu0 %v2009
    %2011 = vmatprep.subr.mxu0 0.0
    %v2012 = vand.u32 %v1870, 4294901760
    %v2013 = vsub.f32 %v1870, %v2012
    %v2014 = vand.u32 %v2013, 4294901760
    %v2015 = vsub.f32 %v2013, %v2014
    %v2016 = vand.u32 %v2015, 4294901760
    %2017 = vmatpush1.msra.mxu0 %v2016
    %2018 = vmatprep.subr.mxu0 0.0
    %v2019 = vand.u32 %v1869, 4294901760
    %v2020 = vsub.f32 %v1869, %v2019
    %v2021 = vand.u32 %v2020, 4294901760
    %v2022 = vsub.f32 %v2020, %v2021
    %v2023 = vand.u32 %v2022, 4294901760
    %2024 = vmatpush1.msra.mxu0 %v2023
    %2025 = vmatprep.subr.mxu0 0.0
    %v2026 = vand.u32 %v1868, 4294901760
    %v2027 = vsub.f32 %v1868, %v2026
    %v2028 = vand.u32 %v2027, 4294901760
    %v2029 = vsub.f32 %v2027, %v2028
    %v2030 = vand.u32 %v2029, 4294901760
    %2031 = vmatpush1.msra.mxu0 %v2030
    %2032 = vmatprep.subr.mxu0 0.0
    %v2033 = vand.u32 %v1867, 4294901760
    %v2034 = vsub.f32 %v1867, %v2033
    %v2035 = vand.u32 %v2034, 4294901760
    %v2036 = vsub.f32 %v2034, %v2035
    %v2037 = vand.u32 %v2036, 4294901760
    %2038 = vmatpush1.msra.mxu0 %v2037
    %2039 = vmatprep.subr.mxu0 0.0
    %v2040 = vand.u32 %v1866, 4294901760
    %v2041 = vsub.f32 %v1866, %v2040
    %v2042 = vand.u32 %v2041, 4294901760
    %v2043 = vsub.f32 %v2041, %v2042
    %v2044 = vand.u32 %v2043, 4294901760
    %2045 = vmatpush1.msra.mxu0 %v2044
    %2046 = vmatprep.subr.mxu0 0.0
    %v2047 = vand.u32 %v1865, 4294901760
    %v2048 = vsub.f32 %v1865, %v2047
    %v2049 = vand.u32 %v2048, 4294901760
    %v2050 = vsub.f32 %v2048, %v2049
    %v2051 = vand.u32 %v2050, 4294901760
    %2052 = vmatpush1.msra.mxu0 %v2051
    %2053 = vmatprep.subr.mxu0 0.0
    %v2054 = vand.u32 %v1864, 4294901760
    %v2055 = vsub.f32 %v1864, %v2054
    %v2056 = vand.u32 %v2055, 4294901760
    %v2057 = vsub.f32 %v2055, %v2056
    %v2058 = vand.u32 %v2057, 4294901760
    %2059 = vmatpush1.msra.mxu0 %v2058
    %2060 = vmatprep.subr.mxu0 0.0
    %v2061 = vand.u32 %v1863, 4294901760
    %v2062 = vsub.f32 %v1863, %v2061
    %v2063 = vand.u32 %v2062, 4294901760
    %v2064 = vsub.f32 %v2062, %v2063
    %v2065 = vand.u32 %v2064, 4294901760
    %2066 = vmatpush1.msra.mxu0 %v2065
    %2067 = vmatprep.subr.mxu0 0.0
    %v2068 = vand.u32 %v1862, 4294901760
    %v2069 = vsub.f32 %v1862, %v2068
    %v2070 = vand.u32 %v2069, 4294901760
    %v2071 = vsub.f32 %v2069, %v2070
    %v2072 = vand.u32 %v2071, 4294901760
    %2073 = vmatpush1.msra.mxu0 %v2072
    %2074 = vmatprep.subr.mxu0 0.0
    %v2075 = vand.u32 %v1861, 4294901760
    %v2076 = vsub.f32 %v1861, %v2075
    %v2077 = vand.u32 %v2076, 4294901760
    %v2078 = vsub.f32 %v2076, %v2077
    %v2079 = vand.u32 %v2078, 4294901760
    %2080 = vmatpush1.msra.mxu0 %v2079
    %2081 = vmatprep.subr.mxu0 0.0
    %2082 = vmatpush2.msra.mxu0 0.0
    %2083 = vmatprep.subr.mxu0 0.0
    %2084 = vmatpush2.msra.mxu0 0.0
    %2085 = vmatprep.subr.mxu0 0.0
    %2086 = vmatpush2.msra.mxu0 0.0
    %2087 = vmatprep.subr.mxu0 0.0
    %2088 = vmatpush2.msra.mxu0 0.0
    %2089 = vmatprep.subr.mxu0 0.0
    %2090 = vmatpush2.msra.mxu0 0.0
    %2091 = vmatprep.subr.mxu0 0.0
    %2092 = vmatpush2.msra.mxu0 0.0
    %2093 = vmatprep.subr.mxu0 0.0
    %2094 = vmatpush2.msra.mxu0 0.0
    %2095 = vmatprep.subr.mxu0 0.0
    %2096 = vmatpush2.msra.mxu0 0.0
    %2097 = vmatprep.subr.mxu0 0.0
    %2098 = vmatpush2.msra.mxu0 0.0
    %2099 = vmatprep.subr.mxu0 0.0
    %2100 = vmatpush2.msra.mxu0 0.0
    %2101 = vmatprep.subr.mxu0 0.0
    %2102 = vmatpush2.msra.mxu0 0.0
    %2103 = vmatprep.subr.mxu0 0.0
    %2104 = vmatpush2.msra.mxu0 0.0
    %2105 = vmatprep.subr.mxu0 0.0
    %2106 = vmatpush2.msra.mxu0 0.0
    %2107 = vmatprep.subr.mxu0 0.0
    %2108 = vmatpush2.msra.mxu0 0.0
    %2109 = vmatprep.subr.mxu0 0.0
    %2110 = vmatpush2.msra.mxu0 0.0
    %2111 = vmatprep.subr.mxu0 0.0
    %2112 = vmatpush2.msra.mxu0 0.0
    %2113 = vmatprep.mubr.f32.mxu0 0.0
    %v2114 = vand.u32 %v1859, 4294901760
    %2115 = vmatmul.mubr.f32.gmra.mxu0 %v2114
    %v2116 = vpop.f32.mrf.mxu0
    %v2117 = vadd.f32 %v1966, %v2116
    %v2118 = vpop.f32.mrf.mxu0
    %2119 = vdwg.mxu0
    %2120 = vmatprep.subr.mxu0 0.0
    %v2121 = vand.u32 %v1876, 4294901760
    %v2122 = vsub.f32 %v1876, %v2121
    %2123 = vmatpush1.msra.mxu0 %v2122
    %2124 = vmatprep.subr.mxu0 0.0
    %v2125 = vand.u32 %v1875, 4294901760
    %v2126 = vsub.f32 %v1875, %v2125
    %2127 = vmatpush1.msra.mxu0 %v2126
    %2128 = vmatprep.subr.mxu0 0.0
    %v2129 = vand.u32 %v1874, 4294901760
    %v2130 = vsub.f32 %v1874, %v2129
    %2131 = vmatpush1.msra.mxu0 %v2130
    %2132 = vmatprep.subr.mxu0 0.0
    %v2133 = vand.u32 %v1873, 4294901760
    %v2134 = vsub.f32 %v1873, %v2133
    %2135 = vmatpush1.msra.mxu0 %v2134
    %2136 = vmatprep.subr.mxu0 0.0
    %v2137 = vand.u32 %v1872, 4294901760
    %v2138 = vsub.f32 %v1872, %v2137
    %2139 = vmatpush1.msra.mxu0 %v2138
    %2140 = vmatprep.subr.mxu0 0.0
    %v2141 = vand.u32 %v1871, 4294901760
    %v2142 = vsub.f32 %v1871, %v2141
    %2143 = vmatpush1.msra.mxu0 %v2142
    %2144 = vmatprep.subr.mxu0 0.0
    %v2145 = vand.u32 %v1870, 4294901760
    %v2146 = vsub.f32 %v1870, %v2145
    %2147 = vmatpush1.msra.mxu0 %v2146
    %2148 = vmatprep.subr.mxu0 0.0
    %v2149 = vand.u32 %v1869, 4294901760
    %v2150 = vsub.f32 %v1869, %v2149
    %2151 = vmatpush1.msra.mxu0 %v2150
    %2152 = vmatprep.subr.mxu0 0.0
    %v2153 = vand.u32 %v1868, 4294901760
    %v2154 = vsub.f32 %v1868, %v2153
    %2155 = vmatpush1.msra.mxu0 %v2154
    %2156 = vmatprep.subr.mxu0 0.0
    %v2157 = vand.u32 %v1867, 4294901760
    %v2158 = vsub.f32 %v1867, %v2157
    %2159 = vmatpush1.msra.mxu0 %v2158
    %2160 = vmatprep.subr.mxu0 0.0
    %v2161 = vand.u32 %v1866, 4294901760
    %v2162 = vsub.f32 %v1866, %v2161
    %2163 = vmatpush1.msra.mxu0 %v2162
    %2164 = vmatprep.subr.mxu0 0.0
    %v2165 = vand.u32 %v1865, 4294901760
    %v2166 = vsub.f32 %v1865, %v2165
    %2167 = vmatpush1.msra.mxu0 %v2166
    %2168 = vmatprep.subr.mxu0 0.0
    %v2169 = vand.u32 %v1864, 4294901760
    %v2170 = vsub.f32 %v1864, %v2169
    %2171 = vmatpush1.msra.mxu0 %v2170
    %2172 = vmatprep.subr.mxu0 0.0
    %v2173 = vand.u32 %v1863, 4294901760
    %v2174 = vsub.f32 %v1863, %v2173
    %2175 = vmatpush1.msra.mxu0 %v2174
    %2176 = vmatprep.subr.mxu0 0.0
    %v2177 = vand.u32 %v1862, 4294901760
    %v2178 = vsub.f32 %v1862, %v2177
    %2179 = vmatpush1.msra.mxu0 %v2178
    %2180 = vmatprep.subr.mxu0 0.0
    %v2181 = vand.u32 %v1861, 4294901760
    %v2182 = vsub.f32 %v1861, %v2181
    %2183 = vmatpush1.msra.mxu0 %v2182
    %2184 = vmatprep.subr.mxu0 0.0
    %2185 = vmatpush2.msra.mxu0 0.0
    %2186 = vmatprep.subr.mxu0 0.0
    %2187 = vmatpush2.msra.mxu0 0.0
    %2188 = vmatprep.subr.mxu0 0.0
    %2189 = vmatpush2.msra.mxu0 0.0
    %2190 = vmatprep.subr.mxu0 0.0
    %2191 = vmatpush2.msra.mxu0 0.0
    %2192 = vmatprep.subr.mxu0 0.0
    %2193 = vmatpush2.msra.mxu0 0.0
    %2194 = vmatprep.subr.mxu0 0.0
    %2195 = vmatpush2.msra.mxu0 0.0
    %2196 = vmatprep.subr.mxu0 0.0
    %2197 = vmatpush2.msra.mxu0 0.0
    %2198 = vmatprep.subr.mxu0 0.0
    %2199 = vmatpush2.msra.mxu0 0.0
    %2200 = vmatprep.subr.mxu0 0.0
    %2201 = vmatpush2.msra.mxu0 0.0
    %2202 = vmatprep.subr.mxu0 0.0
    %2203 = vmatpush2.msra.mxu0 0.0
    %2204 = vmatprep.subr.mxu0 0.0
    %2205 = vmatpush2.msra.mxu0 0.0
    %2206 = vmatprep.subr.mxu0 0.0
    %2207 = vmatpush2.msra.mxu0 0.0
    %2208 = vmatprep.subr.mxu0 0.0
    %2209 = vmatpush2.msra.mxu0 0.0
    %2210 = vmatprep.subr.mxu0 0.0
    %2211 = vmatpush2.msra.mxu0 0.0
    %2212 = vmatprep.subr.mxu0 0.0
    %2213 = vmatpush2.msra.mxu0 0.0
    %2214 = vmatprep.subr.mxu0 0.0
    %2215 = vmatpush2.msra.mxu0 0.0
    %2216 = vmatprep.mubr.f32.mxu0 0.0
    %v2217 = vand.u32 %v1859, 4294901760
    %v2218 = vsub.f32 %v1859, %v2217
    %2219 = vmatmul.mubr.f32.gmra.mxu0 %v2218
    %v2220 = vpop.f32.mrf.mxu0
    %v2221 = vadd.f32 %v2117, %v2220
    %v2222 = vpop.f32.mrf.mxu0
    %2223 = vdwg.mxu0
    %2224 = vmatprep.subr.mxu0 0.0
    %v2225 = vand.u32 %v1876, 4294901760
    %2226 = vmatpush1.msra.mxu0 %v2225
    %2227 = vmatprep.subr.mxu0 0.0
    %v2228 = vand.u32 %v1875, 4294901760
    %2229 = vmatpush1.msra.mxu0 %v2228
    %2230 = vmatprep.subr.mxu0 0.0
    %v2231 = vand.u32 %v1874, 4294901760
    %2232 = vmatpush1.msra.mxu0 %v2231
    %2233 = vmatprep.subr.mxu0 0.0
    %v2234 = vand.u32 %v1873, 4294901760
    %2235 = vmatpush1.msra.mxu0 %v2234
    %2236 = vmatprep.subr.mxu0 0.0
    %v2237 = vand.u32 %v1872, 4294901760
    %2238 = vmatpush1.msra.mxu0 %v2237
    %2239 = vmatprep.subr.mxu0 0.0
    %v2240 = vand.u32 %v1871, 4294901760
    %2241 = vmatpush1.msra.mxu0 %v2240
    %2242 = vmatprep.subr.mxu0 0.0
    %v2243 = vand.u32 %v1870, 4294901760
    %2244 = vmatpush1.msra.mxu0 %v2243
    %2245 = vmatprep.subr.mxu0 0.0
    %v2246 = vand.u32 %v1869, 4294901760
    %2247 = vmatpush1.msra.mxu0 %v2246
    %2248 = vmatprep.subr.mxu0 0.0
    %v2249 = vand.u32 %v1868, 4294901760
    %2250 = vmatpush1.msra.mxu0 %v2249
    %2251 = vmatprep.subr.mxu0 0.0
    %v2252 = vand.u32 %v1867, 4294901760
    %2253 = vmatpush1.msra.mxu0 %v2252
    %2254 = vmatprep.subr.mxu0 0.0
    %v2255 = vand.u32 %v1866, 4294901760
    %2256 = vmatpush1.msra.mxu0 %v2255
    %2257 = vmatprep.subr.mxu0 0.0
    %v2258 = vand.u32 %v1865, 4294901760
    %2259 = vmatpush1.msra.mxu0 %v2258
    %2260 = vmatprep.subr.mxu0 0.0
    %v2261 = vand.u32 %v1864, 4294901760
    %2262 = vmatpush1.msra.mxu0 %v2261
    %2263 = vmatprep.subr.mxu0 0.0
    %v2264 = vand.u32 %v1863, 4294901760
    %2265 = vmatpush1.msra.mxu0 %v2264
    %2266 = vmatprep.subr.mxu0 0.0
    %v2267 = vand.u32 %v1862, 4294901760
    %2268 = vmatpush1.msra.mxu0 %v2267
    %2269 = vmatprep.subr.mxu0 0.0
    %v2270 = vand.u32 %v1861, 4294901760
    %2271 = vmatpush1.msra.mxu0 %v2270
    %2272 = vmatprep.subr.mxu0 0.0
    %2273 = vmatpush2.msra.mxu0 0.0
    %2274 = vmatprep.subr.mxu0 0.0
    %2275 = vmatpush2.msra.mxu0 0.0
    %2276 = vmatprep.subr.mxu0 0.0
    %2277 = vmatpush2.msra.mxu0 0.0
    %2278 = vmatprep.subr.mxu0 0.0
    %2279 = vmatpush2.msra.mxu0 0.0
    %2280 = vmatprep.subr.mxu0 0.0
    %2281 = vmatpush2.msra.mxu0 0.0
    %2282 = vmatprep.subr.mxu0 0.0
    %2283 = vmatpush2.msra.mxu0 0.0
    %2284 = vmatprep.subr.mxu0 0.0
    %2285 = vmatpush2.msra.mxu0 0.0
    %2286 = vmatprep.subr.mxu0 0.0
    %2287 = vmatpush2.msra.mxu0 0.0
    %2288 = vmatprep.subr.mxu0 0.0
    %2289 = vmatpush2.msra.mxu0 0.0
    %2290 = vmatprep.subr.mxu0 0.0
    %2291 = vmatpush2.msra.mxu0 0.0
    %2292 = vmatprep.subr.mxu0 0.0
    %2293 = vmatpush2.msra.mxu0 0.0
    %2294 = vmatprep.subr.mxu0 0.0
    %2295 = vmatpush2.msra.mxu0 0.0
    %2296 = vmatprep.subr.mxu0 0.0
    %2297 = vmatpush2.msra.mxu0 0.0
    %2298 = vmatprep.subr.mxu0 0.0
    %2299 = vmatpush2.msra.mxu0 0.0
    %2300 = vmatprep.subr.mxu0 0.0
    %2301 = vmatpush2.msra.mxu0 0.0
    %2302 = vmatprep.subr.mxu0 0.0
    %2303 = vmatpush2.msra.mxu0 0.0
    %2304 = vmatprep.mubr.f32.mxu0 0.0
    %v2305 = vand.u32 %v1859, 4294901760
    %v2306 = vsub.f32 %v1859, %v2305
    %v2307 = vand.u32 %v2306, 4294901760
    %2308 = vmatmul.mubr.f32.gmra.mxu0 %v2307
    %v2309 = vpop.f32.mrf.mxu0
    %v2310 = vadd.f32 %v2221, %v2309
    %v2311 = vpop.f32.mrf.mxu0
    %2312 = vdwg.mxu0
    %2313 = vmatprep.subr.mxu0 0.0
    %v2314 = vand.u32 %v1876, 4294901760
    %v2315 = vsub.f32 %v1876, %v2314
    %v2316 = vand.u32 %v2315, 4294901760
    %2317 = vmatpush1.msra.mxu0 %v2316
    %2318 = vmatprep.subr.mxu0 0.0
    %v2319 = vand.u32 %v1875, 4294901760
    %v2320 = vsub.f32 %v1875, %v2319
    %v2321 = vand.u32 %v2320, 4294901760
    %2322 = vmatpush1.msra.mxu0 %v2321
    %2323 = vmatprep.subr.mxu0 0.0
    %v2324 = vand.u32 %v1874, 4294901760
    %v2325 = vsub.f32 %v1874, %v2324
    %v2326 = vand.u32 %v2325, 4294901760
    %2327 = vmatpush1.msra.mxu0 %v2326
    %2328 = vmatprep.subr.mxu0 0.0
    %v2329 = vand.u32 %v1873, 4294901760
    %v2330 = vsub.f32 %v1873, %v2329
    %v2331 = vand.u32 %v2330, 4294901760
    %2332 = vmatpush1.msra.mxu0 %v2331
    %2333 = vmatprep.subr.mxu0 0.0
    %v2334 = vand.u32 %v1872, 4294901760
    %v2335 = vsub.f32 %v1872, %v2334
    %v2336 = vand.u32 %v2335, 4294901760
    %2337 = vmatpush1.msra.mxu0 %v2336
    %2338 = vmatprep.subr.mxu0 0.0
    %v2339 = vand.u32 %v1871, 4294901760
    %v2340 = vsub.f32 %v1871, %v2339
    %v2341 = vand.u32 %v2340, 4294901760
    %2342 = vmatpush1.msra.mxu0 %v2341
    %2343 = vmatprep.subr.mxu0 0.0
    %v2344 = vand.u32 %v1870, 4294901760
    %v2345 = vsub.f32 %v1870, %v2344
    %v2346 = vand.u32 %v2345, 4294901760
    %2347 = vmatpush1.msra.mxu0 %v2346
    %2348 = vmatprep.subr.mxu0 0.0
    %v2349 = vand.u32 %v1869, 4294901760
    %v2350 = vsub.f32 %v1869, %v2349
    %v2351 = vand.u32 %v2350, 4294901760
    %2352 = vmatpush1.msra.mxu0 %v2351
    %2353 = vmatprep.subr.mxu0 0.0
    %v2354 = vand.u32 %v1868, 4294901760
    %v2355 = vsub.f32 %v1868, %v2354
    %v2356 = vand.u32 %v2355, 4294901760
    %2357 = vmatpush1.msra.mxu0 %v2356
    %2358 = vmatprep.subr.mxu0 0.0
    %v2359 = vand.u32 %v1867, 4294901760
    %v2360 = vsub.f32 %v1867, %v2359
    %v2361 = vand.u32 %v2360, 4294901760
    %2362 = vmatpush1.msra.mxu0 %v2361
    %2363 = vmatprep.subr.mxu0 0.0
    %v2364 = vand.u32 %v1866, 4294901760
    %v2365 = vsub.f32 %v1866, %v2364
    %v2366 = vand.u32 %v2365, 4294901760
    %2367 = vmatpush1.msra.mxu0 %v2366
    %2368 = vmatprep.subr.mxu0 0.0
    %v2369 = vand.u32 %v1865, 4294901760
    %v2370 = vsub.f32 %v1865, %v2369
    %v2371 = vand.u32 %v2370, 4294901760
    %2372 = vmatpush1.msra.mxu0 %v2371
    %2373 = vmatprep.subr.mxu0 0.0
    %v2374 = vand.u32 %v1864, 4294901760
    %v2375 = vsub.f32 %v1864, %v2374
    %v2376 = vand.u32 %v2375, 4294901760
    %2377 = vmatpush1.msra.mxu0 %v2376
    %2378 = vmatprep.subr.mxu0 0.0
    %v2379 = vand.u32 %v1863, 4294901760
    %v2380 = vsub.f32 %v1863, %v2379
    %v2381 = vand.u32 %v2380, 4294901760
    %2382 = vmatpush1.msra.mxu0 %v2381
    %2383 = vmatprep.subr.mxu0 0.0
    %v2384 = vand.u32 %v1862, 4294901760
    %v2385 = vsub.f32 %v1862, %v2384
    %v2386 = vand.u32 %v2385, 4294901760
    %2387 = vmatpush1.msra.mxu0 %v2386
    %2388 = vmatprep.subr.mxu0 0.0
    %v2389 = vand.u32 %v1861, 4294901760
    %v2390 = vsub.f32 %v1861, %v2389
    %v2391 = vand.u32 %v2390, 4294901760
    %2392 = vmatpush1.msra.mxu0 %v2391
    %2393 = vmatprep.subr.mxu0 0.0
    %2394 = vmatpush2.msra.mxu0 0.0
    %2395 = vmatprep.subr.mxu0 0.0
    %2396 = vmatpush2.msra.mxu0 0.0
    %2397 = vmatprep.subr.mxu0 0.0
    %2398 = vmatpush2.msra.mxu0 0.0
    %2399 = vmatprep.subr.mxu0 0.0
    %2400 = vmatpush2.msra.mxu0 0.0
    %2401 = vmatprep.subr.mxu0 0.0
    %2402 = vmatpush2.msra.mxu0 0.0
    %2403 = vmatprep.subr.mxu0 0.0
    %2404 = vmatpush2.msra.mxu0 0.0
    %2405 = vmatprep.subr.mxu0 0.0
    %2406 = vmatpush2.msra.mxu0 0.0
    %2407 = vmatprep.subr.mxu0 0.0
    %2408 = vmatpush2.msra.mxu0 0.0
    %2409 = vmatprep.subr.mxu0 0.0
    %2410 = vmatpush2.msra.mxu0 0.0
    %2411 = vmatprep.subr.mxu0 0.0
    %2412 = vmatpush2.msra.mxu0 0.0
    %2413 = vmatprep.subr.mxu0 0.0
    %2414 = vmatpush2.msra.mxu0 0.0
    %2415 = vmatprep.subr.mxu0 0.0
    %2416 = vmatpush2.msra.mxu0 0.0
    %2417 = vmatprep.subr.mxu0 0.0
    %2418 = vmatpush2.msra.mxu0 0.0
    %2419 = vmatprep.subr.mxu0 0.0
    %2420 = vmatpush2.msra.mxu0 0.0
    %2421 = vmatprep.subr.mxu0 0.0
    %2422 = vmatpush2.msra.mxu0 0.0
    %2423 = vmatprep.subr.mxu0 0.0
    %2424 = vmatpush2.msra.mxu0 0.0
    %2425 = vmatprep.mubr.f32.mxu0 0.0
    %v2426 = vand.u32 %v1859, 4294901760
    %2427 = vmatmul.mubr.f32.gmra.mxu0 %v2426
    %v2428 = vpop.f32.mrf.mxu0
    %v2429 = vadd.f32 %v2310, %v2428
    %v2430 = vpop.f32.mrf.mxu0
    %2431 = vdwg.mxu0
    %2432 = vmatprep.subr.mxu0 0.0
    %v2433 = vand.u32 %v1876, 4294901760
    %2434 = vmatpush1.msra.mxu0 %v2433
    %2435 = vmatprep.subr.mxu0 0.0
    %v2436 = vand.u32 %v1875, 4294901760
    %2437 = vmatpush1.msra.mxu0 %v2436
    %2438 = vmatprep.subr.mxu0 0.0
    %v2439 = vand.u32 %v1874, 4294901760
    %2440 = vmatpush1.msra.mxu0 %v2439
    %2441 = vmatprep.subr.mxu0 0.0
    %v2442 = vand.u32 %v1873, 4294901760
    %2443 = vmatpush1.msra.mxu0 %v2442
    %2444 = vmatprep.subr.mxu0 0.0
    %v2445 = vand.u32 %v1872, 4294901760
    %2446 = vmatpush1.msra.mxu0 %v2445
    %2447 = vmatprep.subr.mxu0 0.0
    %v2448 = vand.u32 %v1871, 4294901760
    %2449 = vmatpush1.msra.mxu0 %v2448
    %2450 = vmatprep.subr.mxu0 0.0
    %v2451 = vand.u32 %v1870, 4294901760
    %2452 = vmatpush1.msra.mxu0 %v2451
    %2453 = vmatprep.subr.mxu0 0.0
    %v2454 = vand.u32 %v1869, 4294901760
    %2455 = vmatpush1.msra.mxu0 %v2454
    %2456 = vmatprep.subr.mxu0 0.0
    %v2457 = vand.u32 %v1868, 4294901760
    %2458 = vmatpush1.msra.mxu0 %v2457
    %2459 = vmatprep.subr.mxu0 0.0
    %v2460 = vand.u32 %v1867, 4294901760
    %2461 = vmatpush1.msra.mxu0 %v2460
    %2462 = vmatprep.subr.mxu0 0.0
    %v2463 = vand.u32 %v1866, 4294901760
    %2464 = vmatpush1.msra.mxu0 %v2463
    %2465 = vmatprep.subr.mxu0 0.0
    %v2466 = vand.u32 %v1865, 4294901760
    %2467 = vmatpush1.msra.mxu0 %v2466
    %2468 = vmatprep.subr.mxu0 0.0
    %v2469 = vand.u32 %v1864, 4294901760
    %2470 = vmatpush1.msra.mxu0 %v2469
    %2471 = vmatprep.subr.mxu0 0.0
    %v2472 = vand.u32 %v1863, 4294901760
    %2473 = vmatpush1.msra.mxu0 %v2472
    %2474 = vmatprep.subr.mxu0 0.0
    %v2475 = vand.u32 %v1862, 4294901760
    %2476 = vmatpush1.msra.mxu0 %v2475
    %2477 = vmatprep.subr.mxu0 0.0
    %v2478 = vand.u32 %v1861, 4294901760
    %2479 = vmatpush1.msra.mxu0 %v2478
    %2480 = vmatprep.subr.mxu0 0.0
    %2481 = vmatpush2.msra.mxu0 0.0
    %2482 = vmatprep.subr.mxu0 0.0
    %2483 = vmatpush2.msra.mxu0 0.0
    %2484 = vmatprep.subr.mxu0 0.0
    %2485 = vmatpush2.msra.mxu0 0.0
    %2486 = vmatprep.subr.mxu0 0.0
    %2487 = vmatpush2.msra.mxu0 0.0
    %2488 = vmatprep.subr.mxu0 0.0
    %2489 = vmatpush2.msra.mxu0 0.0
    %2490 = vmatprep.subr.mxu0 0.0
    %2491 = vmatpush2.msra.mxu0 0.0
    %2492 = vmatprep.subr.mxu0 0.0
    %2493 = vmatpush2.msra.mxu0 0.0
    %2494 = vmatprep.subr.mxu0 0.0
    %2495 = vmatpush2.msra.mxu0 0.0
    %2496 = vmatprep.subr.mxu0 0.0
    %2497 = vmatpush2.msra.mxu0 0.0
    %2498 = vmatprep.subr.mxu0 0.0
    %2499 = vmatpush2.msra.mxu0 0.0
    %2500 = vmatprep.subr.mxu0 0.0
    %2501 = vmatpush2.msra.mxu0 0.0
    %2502 = vmatprep.subr.mxu0 0.0
    %2503 = vmatpush2.msra.mxu0 0.0
    %2504 = vmatprep.subr.mxu0 0.0
    %2505 = vmatpush2.msra.mxu0 0.0
    %2506 = vmatprep.subr.mxu0 0.0
    %2507 = vmatpush2.msra.mxu0 0.0
    %2508 = vmatprep.subr.mxu0 0.0
    %2509 = vmatpush2.msra.mxu0 0.0
    %2510 = vmatprep.subr.mxu0 0.0
    %2511 = vmatpush2.msra.mxu0 0.0
    %2512 = vmatprep.mubr.f32.mxu0 0.0
    %v2513 = vand.u32 %v1859, 4294901760
    %2514 = vmatmul.mubr.f32.gmra.mxu0 %v2513
    %v2515 = vpop.f32.mrf.mxu0
    %v2516 = vadd.f32 %v2429, %v2515
    %v2517 = vpop.f32.mrf.mxu0
    %2518 = vdwg.mxu0
    %vm2519 = vcmp.gt.f32.partialorder %v2516, 20.0
    %v2520 = vmul.f32 %v2516, 1.442695
    %v2521 = vpow.pop %v2520
    %v2522 = vadd.f32 %v2521, 1.0
    %v2523 = vlog2.pop %v2522
    %v2524 = vmul.f32 %v2523, 0.6931472
    %v2525 = vmul.f32 -0.5, %v2521
    %v2526 = vadd.f32 %v2525, 1.0
    %v2527 = vmul.f32 %v2526, %v2521
    %v2528 = vand.u32 2147483647, %v2521
    %vm2529 = vcmp.lt.f32.partialorder %v2528, 0.0004427343
    %v2530 = vsel %vm2529, %v2527, %v2524
    %v2531 = vsel %vm2519, %v2516, %v2530
    %v2532 = vld [vmem:[#allocation5 + $0x210] sm:$0xff]
    %v2533 = vld [vmem:[#allocation5 + $0x220] sm:$0xff]
    %v2534 = vld [vmem:[#allocation5 + $0x230] sm:$0xff]
    %v2535 = vld [vmem:[#allocation5 + $0x240] sm:$0xff]
    %2536 = vmatprep.subr.mxu0 0.0
    %2537 = vmatpush1.xpose.msra.mxu0 0.0
    %2538 = vmatprep.subr.mxu0 0.0
    %2539 = vmatpush1.xpose.msra.mxu0 0.0
    %2540 = vmatprep.subr.mxu0 0.0
    %2541 = vmatpush1.xpose.msra.mxu0 0.0
    %2542 = vmatprep.subr.mxu0 0.0
    %2543 = vmatpush1.xpose.msra.mxu0 0.0
    %2544 = vmatprep.subr.mxu0 0.0
    %2545 = vmatpush1.xpose.msra.mxu0 0.0
    %2546 = vmatprep.subr.mxu0 0.0
    %2547 = vmatpush1.xpose.msra.mxu0 0.0
    %2548 = vmatprep.subr.mxu0 0.0
    %2549 = vmatpush1.xpose.msra.mxu0 0.0
    %2550 = vmatprep.subr.mxu0 0.0
    %2551 = vmatpush1.xpose.msra.mxu0 0.0
    %2552 = vmatprep.subr.mxu0 0.0
    %2553 = vmatpush1.xpose.msra.mxu0 0.0
    %2554 = vmatprep.subr.mxu0 0.0
    %2555 = vmatpush1.xpose.msra.mxu0 0.0
    %2556 = vmatprep.subr.mxu0 0.0
    %2557 = vmatpush1.xpose.msra.mxu0 0.0
    %2558 = vmatprep.subr.mxu0 0.0
    %2559 = vmatpush1.xpose.msra.mxu0 0.0
    %2560 = vmatprep.subr.mxu0 0.0
    %2561 = vmatpush1.xpose.msra.mxu0 0.0
    %2562 = vmatprep.subr.mxu0 0.0
    %2563 = vmatpush1.xpose.msra.mxu0 0.0
    %2564 = vmatprep.subr.mxu0 0.0
    %2565 = vmatpush1.xpose.msra.mxu0 0.0
    %2566 = vmatprep.subr.mxu0 0.0
    %v2567 = vand.u32 %v1859, 4294901760
    %2568 = vmatpush1.xpose.msra.mxu0 %v2567
    %2569 = vmatprep.subr.mxu0 0.0
    %2570 = vmatpush2.xpose.msra.mxu0 0.0
    %2571 = vmatprep.subr.mxu0 0.0
    %2572 = vmatpush2.xpose.msra.mxu0 0.0
    %2573 = vmatprep.subr.mxu0 0.0
    %2574 = vmatpush2.xpose.msra.mxu0 0.0
    %2575 = vmatprep.subr.mxu0 0.0
    %2576 = vmatpush2.xpose.msra.mxu0 0.0
    %2577 = vmatprep.subr.mxu0 0.0
    %2578 = vmatpush2.xpose.msra.mxu0 0.0
    %2579 = vmatprep.subr.mxu0 0.0
    %2580 = vmatpush2.xpose.msra.mxu0 0.0
    %2581 = vmatprep.subr.mxu0 0.0
    %2582 = vmatpush2.xpose.msra.mxu0 0.0
    %2583 = vmatprep.subr.mxu0 0.0
    %2584 = vmatpush2.xpose.msra.mxu0 0.0
    %2585 = vmatprep.subr.mxu0 0.0
    %2586 = vmatpush2.xpose.msra.mxu0 0.0
    %2587 = vmatprep.subr.mxu0 0.0
    %2588 = vmatpush2.xpose.msra.mxu0 0.0
    %2589 = vmatprep.subr.mxu0 0.0
    %2590 = vmatpush2.xpose.msra.mxu0 0.0
    %2591 = vmatprep.subr.mxu0 0.0
    %2592 = vmatpush2.xpose.msra.mxu0 0.0
    %2593 = vmatprep.subr.mxu0 0.0
    %2594 = vmatpush2.xpose.msra.mxu0 0.0
    %2595 = vmatprep.subr.mxu0 0.0
    %2596 = vmatpush2.xpose.msra.mxu0 0.0
    %2597 = vmatprep.subr.mxu0 0.0
    %2598 = vmatpush2.xpose.msra.mxu0 0.0
    %2599 = vmatprep.subr.mxu0 0.0
    %2600 = vmatpush2.xpose.msra.mxu0 0.0
    %2601 = vmatprep.mubr.f32.mxu0 0.0
    %v2602 = vand.u32 %v2532, 4294901760
    %v2603 = vsub.f32 %v2532, %v2602
    %v2604 = vand.u32 %v2603, 4294901760
    %v2605 = vsub.f32 %v2603, %v2604
    %v2606 = vand.u32 %v2605, 4294901760
    %2607 = vmatmul.mubr.f32.gmra.mxu0 %v2606
    %v2608 = vpop.f32.mrf.mxu0
    %v2609 = vadd.f32 0.0, %v2608
    %v2610 = vpop.f32.mrf.mxu0
    %2611 = vmatprep.mubr.f32.mxu0 0.0
    %v2612 = vand.u32 %v2533, 4294901760
    %v2613 = vsub.f32 %v2533, %v2612
    %v2614 = vand.u32 %v2613, 4294901760
    %v2615 = vsub.f32 %v2613, %v2614
    %v2616 = vand.u32 %v2615, 4294901760
    %2617 = vmatmul.mubr.f32.gmra.mxu0 %v2616
    %v2618 = vpop.f32.mrf.mxu0
    %v2619 = vadd.f32 0.0, %v2618
    %v2620 = vpop.f32.mrf.mxu0
    %2621 = vmatprep.mubr.f32.mxu0 0.0
    %v2622 = vand.u32 %v2534, 4294901760
    %v2623 = vsub.f32 %v2534, %v2622
    %v2624 = vand.u32 %v2623, 4294901760
    %v2625 = vsub.f32 %v2623, %v2624
    %v2626 = vand.u32 %v2625, 4294901760
    %2627 = vmatmul.mubr.f32.gmra.mxu0 %v2626
    %v2628 = vpop.f32.mrf.mxu0
    %v2629 = vadd.f32 0.0, %v2628
    %v2630 = vpop.f32.mrf.mxu0
    %2631 = vmatprep.mubr.f32.mxu0 0.0
    %v2632 = vand.u32 %v2535, 4294901760
    %v2633 = vsub.f32 %v2535, %v2632
    %v2634 = vand.u32 %v2633, 4294901760
    %v2635 = vsub.f32 %v2633, %v2634
    %v2636 = vand.u32 %v2635, 4294901760
    %2637 = vmatmul.mubr.f32.gmra.mxu0 %v2636
    %v2638 = vpop.f32.mrf.mxu0
    %v2639 = vadd.f32 0.0, %v2638
    %v2640 = vpop.f32.mrf.mxu0
    %2641 = vdwg.mxu0
    %2642 = vmatprep.subr.mxu0 0.0
    %2643 = vmatpush1.xpose.msra.mxu0 0.0
    %2644 = vmatprep.subr.mxu0 0.0
    %2645 = vmatpush1.xpose.msra.mxu0 0.0
    %2646 = vmatprep.subr.mxu0 0.0
    %2647 = vmatpush1.xpose.msra.mxu0 0.0
    %2648 = vmatprep.subr.mxu0 0.0
    %2649 = vmatpush1.xpose.msra.mxu0 0.0
    %2650 = vmatprep.subr.mxu0 0.0
    %2651 = vmatpush1.xpose.msra.mxu0 0.0
    %2652 = vmatprep.subr.mxu0 0.0
    %2653 = vmatpush1.xpose.msra.mxu0 0.0
    %2654 = vmatprep.subr.mxu0 0.0
    %2655 = vmatpush1.xpose.msra.mxu0 0.0
    %2656 = vmatprep.subr.mxu0 0.0
    %2657 = vmatpush1.xpose.msra.mxu0 0.0
    %2658 = vmatprep.subr.mxu0 0.0
    %2659 = vmatpush1.xpose.msra.mxu0 0.0
    %2660 = vmatprep.subr.mxu0 0.0
    %2661 = vmatpush1.xpose.msra.mxu0 0.0
    %2662 = vmatprep.subr.mxu0 0.0
    %2663 = vmatpush1.xpose.msra.mxu0 0.0
    %2664 = vmatprep.subr.mxu0 0.0
    %2665 = vmatpush1.xpose.msra.mxu0 0.0
    %2666 = vmatprep.subr.mxu0 0.0
    %2667 = vmatpush1.xpose.msra.mxu0 0.0
    %2668 = vmatprep.subr.mxu0 0.0
    %2669 = vmatpush1.xpose.msra.mxu0 0.0
    %2670 = vmatprep.subr.mxu0 0.0
    %2671 = vmatpush1.xpose.msra.mxu0 0.0
    %2672 = vmatprep.subr.mxu0 0.0
    %v2673 = vand.u32 %v1859, 4294901760
    %v2674 = vsub.f32 %v1859, %v2673
    %v2675 = vand.u32 %v2674, 4294901760
    %v2676 = vsub.f32 %v2674, %v2675
    %v2677 = vand.u32 %v2676, 4294901760
    %2678 = vmatpush1.xpose.msra.mxu0 %v2677
    %2679 = vmatprep.subr.mxu0 0.0
    %2680 = vmatpush2.xpose.msra.mxu0 0.0
    %2681 = vmatprep.subr.mxu0 0.0
    %2682 = vmatpush2.xpose.msra.mxu0 0.0
    %2683 = vmatprep.subr.mxu0 0.0
    %2684 = vmatpush2.xpose.msra.mxu0 0.0
    %2685 = vmatprep.subr.mxu0 0.0
    %2686 = vmatpush2.xpose.msra.mxu0 0.0
    %2687 = vmatprep.subr.mxu0 0.0
    %2688 = vmatpush2.xpose.msra.mxu0 0.0
    %2689 = vmatprep.subr.mxu0 0.0
    %2690 = vmatpush2.xpose.msra.mxu0 0.0
    %2691 = vmatprep.subr.mxu0 0.0
    %2692 = vmatpush2.xpose.msra.mxu0 0.0
    %2693 = vmatprep.subr.mxu0 0.0
    %2694 = vmatpush2.xpose.msra.mxu0 0.0
    %2695 = vmatprep.subr.mxu0 0.0
    %2696 = vmatpush2.xpose.msra.mxu0 0.0
    %2697 = vmatprep.subr.mxu0 0.0
    %2698 = vmatpush2.xpose.msra.mxu0 0.0
    %2699 = vmatprep.subr.mxu0 0.0
    %2700 = vmatpush2.xpose.msra.mxu0 0.0
    %2701 = vmatprep.subr.mxu0 0.0
    %2702 = vmatpush2.xpose.msra.mxu0 0.0
    %2703 = vmatprep.subr.mxu0 0.0
    %2704 = vmatpush2.xpose.msra.mxu0 0.0
    %2705 = vmatprep.subr.mxu0 0.0
    %2706 = vmatpush2.xpose.msra.mxu0 0.0
    %2707 = vmatprep.subr.mxu0 0.0
    %2708 = vmatpush2.xpose.msra.mxu0 0.0
    %2709 = vmatprep.subr.mxu0 0.0
    %2710 = vmatpush2.xpose.msra.mxu0 0.0
    %2711 = vmatprep.mubr.f32.mxu0 0.0
    %v2712 = vand.u32 %v2532, 4294901760
    %2713 = vmatmul.mubr.f32.gmra.mxu0 %v2712
    %v2714 = vpop.f32.mrf.mxu0
    %v2715 = vadd.f32 %v2609, %v2714
    %v2716 = vpop.f32.mrf.mxu0
    %2717 = vmatprep.mubr.f32.mxu0 0.0
    %v2718 = vand.u32 %v2533, 4294901760
    %2719 = vmatmul.mubr.f32.gmra.mxu0 %v2718
    %v2720 = vpop.f32.mrf.mxu0
    %v2721 = vadd.f32 %v2619, %v2720
    %v2722 = vpop.f32.mrf.mxu0
    %2723 = vmatprep.mubr.f32.mxu0 0.0
    %v2724 = vand.u32 %v2534, 4294901760
    %2725 = vmatmul.mubr.f32.gmra.mxu0 %v2724
    %v2726 = vpop.f32.mrf.mxu0
    %v2727 = vadd.f32 %v2629, %v2726
    %v2728 = vpop.f32.mrf.mxu0
    %2729 = vmatprep.mubr.f32.mxu0 0.0
    %v2730 = vand.u32 %v2535, 4294901760
    %2731 = vmatmul.mubr.f32.gmra.mxu0 %v2730
    %v2732 = vpop.f32.mrf.mxu0
    %v2733 = vadd.f32 %v2639, %v2732
    %v2734 = vpop.f32.mrf.mxu0
    %2735 = vdwg.mxu0
    %2736 = vmatprep.subr.mxu0 0.0
    %2737 = vmatpush1.xpose.msra.mxu0 0.0
    %2738 = vmatprep.subr.mxu0 0.0
    %2739 = vmatpush1.xpose.msra.mxu0 0.0
    %2740 = vmatprep.subr.mxu0 0.0
    %2741 = vmatpush1.xpose.msra.mxu0 0.0
    %2742 = vmatprep.subr.mxu0 0.0
    %2743 = vmatpush1.xpose.msra.mxu0 0.0
    %2744 = vmatprep.subr.mxu0 0.0
    %2745 = vmatpush1.xpose.msra.mxu0 0.0
    %2746 = vmatprep.subr.mxu0 0.0
    %2747 = vmatpush1.xpose.msra.mxu0 0.0
    %2748 = vmatprep.subr.mxu0 0.0
    %2749 = vmatpush1.xpose.msra.mxu0 0.0
    %2750 = vmatprep.subr.mxu0 0.0
    %2751 = vmatpush1.xpose.msra.mxu0 0.0
    %2752 = vmatprep.subr.mxu0 0.0
    %2753 = vmatpush1.xpose.msra.mxu0 0.0
    %2754 = vmatprep.subr.mxu0 0.0
    %2755 = vmatpush1.xpose.msra.mxu0 0.0
    %2756 = vmatprep.subr.mxu0 0.0
    %2757 = vmatpush1.xpose.msra.mxu0 0.0
    %2758 = vmatprep.subr.mxu0 0.0
    %2759 = vmatpush1.xpose.msra.mxu0 0.0
    %2760 = vmatprep.subr.mxu0 0.0
    %2761 = vmatpush1.xpose.msra.mxu0 0.0
    %2762 = vmatprep.subr.mxu0 0.0
    %2763 = vmatpush1.xpose.msra.mxu0 0.0
    %2764 = vmatprep.subr.mxu0 0.0
    %2765 = vmatpush1.xpose.msra.mxu0 0.0
    %2766 = vmatprep.subr.mxu0 0.0
    %v2767 = vand.u32 %v1859, 4294901760
    %v2768 = vsub.f32 %v1859, %v2767
    %2769 = vmatpush1.xpose.msra.mxu0 %v2768
    %2770 = vmatprep.subr.mxu0 0.0
    %2771 = vmatpush2.xpose.msra.mxu0 0.0
    %2772 = vmatprep.subr.mxu0 0.0
    %2773 = vmatpush2.xpose.msra.mxu0 0.0
    %2774 = vmatprep.subr.mxu0 0.0
    %2775 = vmatpush2.xpose.msra.mxu0 0.0
    %2776 = vmatprep.subr.mxu0 0.0
    %2777 = vmatpush2.xpose.msra.mxu0 0.0
    %2778 = vmatprep.subr.mxu0 0.0
    %2779 = vmatpush2.xpose.msra.mxu0 0.0
    %2780 = vmatprep.subr.mxu0 0.0
    %2781 = vmatpush2.xpose.msra.mxu0 0.0
    %2782 = vmatprep.subr.mxu0 0.0
    %2783 = vmatpush2.xpose.msra.mxu0 0.0
    %2784 = vmatprep.subr.mxu0 0.0
    %2785 = vmatpush2.xpose.msra.mxu0 0.0
    %2786 = vmatprep.subr.mxu0 0.0
    %2787 = vmatpush2.xpose.msra.mxu0 0.0
    %2788 = vmatprep.subr.mxu0 0.0
    %2789 = vmatpush2.xpose.msra.mxu0 0.0
    %2790 = vmatprep.subr.mxu0 0.0
    %2791 = vmatpush2.xpose.msra.mxu0 0.0
    %2792 = vmatprep.subr.mxu0 0.0
    %2793 = vmatpush2.xpose.msra.mxu0 0.0
    %2794 = vmatprep.subr.mxu0 0.0
    %2795 = vmatpush2.xpose.msra.mxu0 0.0
    %2796 = vmatprep.subr.mxu0 0.0
    %2797 = vmatpush2.xpose.msra.mxu0 0.0
    %2798 = vmatprep.subr.mxu0 0.0
    %2799 = vmatpush2.xpose.msra.mxu0 0.0
    %2800 = vmatprep.subr.mxu0 0.0
    %2801 = vmatpush2.xpose.msra.mxu0 0.0
    %2802 = vmatprep.mubr.f32.mxu0 0.0
    %v2803 = vand.u32 %v2532, 4294901760
    %v2804 = vsub.f32 %v2532, %v2803
    %2805 = vmatmul.mubr.f32.gmra.mxu0 %v2804
    %v2806 = vpop.f32.mrf.mxu0
    %v2807 = vadd.f32 %v2715, %v2806
    %v2808 = vpop.f32.mrf.mxu0
    %2809 = vmatprep.mubr.f32.mxu0 0.0
    %v2810 = vand.u32 %v2533, 4294901760
    %v2811 = vsub.f32 %v2533, %v2810
    %2812 = vmatmul.mubr.f32.gmra.mxu0 %v2811
    %v2813 = vpop.f32.mrf.mxu0
    %v2814 = vadd.f32 %v2721, %v2813
    %v2815 = vpop.f32.mrf.mxu0
    %2816 = vmatprep.mubr.f32.mxu0 0.0
    %v2817 = vand.u32 %v2534, 4294901760
    %v2818 = vsub.f32 %v2534, %v2817
    %2819 = vmatmul.mubr.f32.gmra.mxu0 %v2818
    %v2820 = vpop.f32.mrf.mxu0
    %v2821 = vadd.f32 %v2727, %v2820
    %v2822 = vpop.f32.mrf.mxu0
    %2823 = vmatprep.mubr.f32.mxu0 0.0
    %v2824 = vand.u32 %v2535, 4294901760
    %v2825 = vsub.f32 %v2535, %v2824
    %2826 = vmatmul.mubr.f32.gmra.mxu0 %v2825
    %v2827 = vpop.f32.mrf.mxu0
    %v2828 = vadd.f32 %v2733, %v2827
    %v2829 = vpop.f32.mrf.mxu0
    %2830 = vdwg.mxu0
    %2831 = vmatprep.subr.mxu0 0.0
    %2832 = vmatpush1.xpose.msra.mxu0 0.0
    %2833 = vmatprep.subr.mxu0 0.0
    %2834 = vmatpush1.xpose.msra.mxu0 0.0
    %2835 = vmatprep.subr.mxu0 0.0
    %2836 = vmatpush1.xpose.msra.mxu0 0.0
    %2837 = vmatprep.subr.mxu0 0.0
    %2838 = vmatpush1.xpose.msra.mxu0 0.0
    %2839 = vmatprep.subr.mxu0 0.0
    %2840 = vmatpush1.xpose.msra.mxu0 0.0
    %2841 = vmatprep.subr.mxu0 0.0
    %2842 = vmatpush1.xpose.msra.mxu0 0.0
    %2843 = vmatprep.subr.mxu0 0.0
    %2844 = vmatpush1.xpose.msra.mxu0 0.0
    %2845 = vmatprep.subr.mxu0 0.0
    %2846 = vmatpush1.xpose.msra.mxu0 0.0
    %2847 = vmatprep.subr.mxu0 0.0
    %2848 = vmatpush1.xpose.msra.mxu0 0.0
    %2849 = vmatprep.subr.mxu0 0.0
    %2850 = vmatpush1.xpose.msra.mxu0 0.0
    %2851 = vmatprep.subr.mxu0 0.0
    %2852 = vmatpush1.xpose.msra.mxu0 0.0
    %2853 = vmatprep.subr.mxu0 0.0
    %2854 = vmatpush1.xpose.msra.mxu0 0.0
    %2855 = vmatprep.subr.mxu0 0.0
    %2856 = vmatpush1.xpose.msra.mxu0 0.0
    %2857 = vmatprep.subr.mxu0 0.0
    %2858 = vmatpush1.xpose.msra.mxu0 0.0
    %2859 = vmatprep.subr.mxu0 0.0
    %2860 = vmatpush1.xpose.msra.mxu0 0.0
    %2861 = vmatprep.subr.mxu0 0.0
    %v2862 = vand.u32 %v1859, 4294901760
    %2863 = vmatpush1.xpose.msra.mxu0 %v2862
    %2864 = vmatprep.subr.mxu0 0.0
    %2865 = vmatpush2.xpose.msra.mxu0 0.0
    %2866 = vmatprep.subr.mxu0 0.0
    %2867 = vmatpush2.xpose.msra.mxu0 0.0
    %2868 = vmatprep.subr.mxu0 0.0
    %2869 = vmatpush2.xpose.msra.mxu0 0.0
    %2870 = vmatprep.subr.mxu0 0.0
    %2871 = vmatpush2.xpose.msra.mxu0 0.0
    %2872 = vmatprep.subr.mxu0 0.0
    %2873 = vmatpush2.xpose.msra.mxu0 0.0
    %2874 = vmatprep.subr.mxu0 0.0
    %2875 = vmatpush2.xpose.msra.mxu0 0.0
    %2876 = vmatprep.subr.mxu0 0.0
    %2877 = vmatpush2.xpose.msra.mxu0 0.0
    %2878 = vmatprep.subr.mxu0 0.0
    %2879 = vmatpush2.xpose.msra.mxu0 0.0
    %2880 = vmatprep.subr.mxu0 0.0
    %2881 = vmatpush2.xpose.msra.mxu0 0.0
    %2882 = vmatprep.subr.mxu0 0.0
    %2883 = vmatpush2.xpose.msra.mxu0 0.0
    %2884 = vmatprep.subr.mxu0 0.0
    %2885 = vmatpush2.xpose.msra.mxu0 0.0
    %2886 = vmatprep.subr.mxu0 0.0
    %2887 = vmatpush2.xpose.msra.mxu0 0.0
    %2888 = vmatprep.subr.mxu0 0.0
    %2889 = vmatpush2.xpose.msra.mxu0 0.0
    %2890 = vmatprep.subr.mxu0 0.0
    %2891 = vmatpush2.xpose.msra.mxu0 0.0
    %2892 = vmatprep.subr.mxu0 0.0
    %2893 = vmatpush2.xpose.msra.mxu0 0.0
    %2894 = vmatprep.subr.mxu0 0.0
    %2895 = vmatpush2.xpose.msra.mxu0 0.0
    %2896 = vmatprep.mubr.f32.mxu0 0.0
    %v2897 = vand.u32 %v2532, 4294901760
    %v2898 = vsub.f32 %v2532, %v2897
    %v2899 = vand.u32 %v2898, 4294901760
    %2900 = vmatmul.mubr.f32.gmra.mxu0 %v2899
    %v2901 = vpop.f32.mrf.mxu0
    %v2902 = vadd.f32 %v2807, %v2901
    %v2903 = vpop.f32.mrf.mxu0
    %2904 = vmatprep.mubr.f32.mxu0 0.0
    %v2905 = vand.u32 %v2533, 4294901760
    %v2906 = vsub.f32 %v2533, %v2905
    %v2907 = vand.u32 %v2906, 4294901760
    %2908 = vmatmul.mubr.f32.gmra.mxu0 %v2907
    %v2909 = vpop.f32.mrf.mxu0
    %v2910 = vadd.f32 %v2814, %v2909
    %v2911 = vpop.f32.mrf.mxu0
    %2912 = vmatprep.mubr.f32.mxu0 0.0
    %v2913 = vand.u32 %v2534, 4294901760
    %v2914 = vsub.f32 %v2534, %v2913
    %v2915 = vand.u32 %v2914, 4294901760
    %2916 = vmatmul.mubr.f32.gmra.mxu0 %v2915
    %v2917 = vpop.f32.mrf.mxu0
    %v2918 = vadd.f32 %v2821, %v2917
    %v2919 = vpop.f32.mrf.mxu0
    %2920 = vmatprep.mubr.f32.mxu0 0.0
    %v2921 = vand.u32 %v2535, 4294901760
    %v2922 = vsub.f32 %v2535, %v2921
    %v2923 = vand.u32 %v2922, 4294901760
    %2924 = vmatmul.mubr.f32.gmra.mxu0 %v2923
    %v2925 = vpop.f32.mrf.mxu0
    %v2926 = vadd.f32 %v2828, %v2925
    %v2927 = vpop.f32.mrf.mxu0
    %2928 = vdwg.mxu0
    %2929 = vmatprep.subr.mxu0 0.0
    %2930 = vmatpush1.xpose.msra.mxu0 0.0
    %2931 = vmatprep.subr.mxu0 0.0
    %2932 = vmatpush1.xpose.msra.mxu0 0.0
    %2933 = vmatprep.subr.mxu0 0.0
    %2934 = vmatpush1.xpose.msra.mxu0 0.0
    %2935 = vmatprep.subr.mxu0 0.0
    %2936 = vmatpush1.xpose.msra.mxu0 0.0
    %2937 = vmatprep.subr.mxu0 0.0
    %2938 = vmatpush1.xpose.msra.mxu0 0.0
    %2939 = vmatprep.subr.mxu0 0.0
    %2940 = vmatpush1.xpose.msra.mxu0 0.0
    %2941 = vmatprep.subr.mxu0 0.0
    %2942 = vmatpush1.xpose.msra.mxu0 0.0
    %2943 = vmatprep.subr.mxu0 0.0
    %2944 = vmatpush1.xpose.msra.mxu0 0.0
    %2945 = vmatprep.subr.mxu0 0.0
    %2946 = vmatpush1.xpose.msra.mxu0 0.0
    %2947 = vmatprep.subr.mxu0 0.0
    %2948 = vmatpush1.xpose.msra.mxu0 0.0
    %2949 = vmatprep.subr.mxu0 0.0
    %2950 = vmatpush1.xpose.msra.mxu0 0.0
    %2951 = vmatprep.subr.mxu0 0.0
    %2952 = vmatpush1.xpose.msra.mxu0 0.0
    %2953 = vmatprep.subr.mxu0 0.0
    %2954 = vmatpush1.xpose.msra.mxu0 0.0
    %2955 = vmatprep.subr.mxu0 0.0
    %2956 = vmatpush1.xpose.msra.mxu0 0.0
    %2957 = vmatprep.subr.mxu0 0.0
    %2958 = vmatpush1.xpose.msra.mxu0 0.0
    %2959 = vmatprep.subr.mxu0 0.0
    %v2960 = vand.u32 %v1859, 4294901760
    %v2961 = vsub.f32 %v1859, %v2960
    %v2962 = vand.u32 %v2961, 4294901760
    %2963 = vmatpush1.xpose.msra.mxu0 %v2962
    %2964 = vmatprep.subr.mxu0 0.0
    %2965 = vmatpush2.xpose.msra.mxu0 0.0
    %2966 = vmatprep.subr.mxu0 0.0
    %2967 = vmatpush2.xpose.msra.mxu0 0.0
    %2968 = vmatprep.subr.mxu0 0.0
    %2969 = vmatpush2.xpose.msra.mxu0 0.0
    %2970 = vmatprep.subr.mxu0 0.0
    %2971 = vmatpush2.xpose.msra.mxu0 0.0
    %2972 = vmatprep.subr.mxu0 0.0
    %2973 = vmatpush2.xpose.msra.mxu0 0.0
    %2974 = vmatprep.subr.mxu0 0.0
    %2975 = vmatpush2.xpose.msra.mxu0 0.0
    %2976 = vmatprep.subr.mxu0 0.0
    %2977 = vmatpush2.xpose.msra.mxu0 0.0
    %2978 = vmatprep.subr.mxu0 0.0
    %2979 = vmatpush2.xpose.msra.mxu0 0.0
    %2980 = vmatprep.subr.mxu0 0.0
    %2981 = vmatpush2.xpose.msra.mxu0 0.0
    %2982 = vmatprep.subr.mxu0 0.0
    %2983 = vmatpush2.xpose.msra.mxu0 0.0
    %2984 = vmatprep.subr.mxu0 0.0
    %2985 = vmatpush2.xpose.msra.mxu0 0.0
    %2986 = vmatprep.subr.mxu0 0.0
    %2987 = vmatpush2.xpose.msra.mxu0 0.0
    %2988 = vmatprep.subr.mxu0 0.0
    %2989 = vmatpush2.xpose.msra.mxu0 0.0
    %2990 = vmatprep.subr.mxu0 0.0
    %2991 = vmatpush2.xpose.msra.mxu0 0.0
    %2992 = vmatprep.subr.mxu0 0.0
    %2993 = vmatpush2.xpose.msra.mxu0 0.0
    %2994 = vmatprep.subr.mxu0 0.0
    %2995 = vmatpush2.xpose.msra.mxu0 0.0
    %2996 = vmatprep.mubr.f32.mxu0 0.0
    %v2997 = vand.u32 %v2532, 4294901760
    %2998 = vmatmul.mubr.f32.gmra.mxu0 %v2997
    %v2999 = vpop.f32.mrf.mxu0
    %v3000 = vadd.f32 %v2902, %v2999
    %v3001 = vpop.f32.mrf.mxu0
    %3002 = vmatprep.mubr.f32.mxu0 0.0
    %v3003 = vand.u32 %v2533, 4294901760
    %3004 = vmatmul.mubr.f32.gmra.mxu0 %v3003
    %v3005 = vpop.f32.mrf.mxu0
    %v3006 = vadd.f32 %v2910, %v3005
    %v3007 = vpop.f32.mrf.mxu0
    %3008 = vmatprep.mubr.f32.mxu0 0.0
    %v3009 = vand.u32 %v2534, 4294901760
    %3010 = vmatmul.mubr.f32.gmra.mxu0 %v3009
    %v3011 = vpop.f32.mrf.mxu0
    %v3012 = vadd.f32 %v2918, %v3011
    %v3013 = vpop.f32.mrf.mxu0
    %3014 = vmatprep.mubr.f32.mxu0 0.0
    %v3015 = vand.u32 %v2535, 4294901760
    %3016 = vmatmul.mubr.f32.gmra.mxu0 %v3015
    %v3017 = vpop.f32.mrf.mxu0
    %v3018 = vadd.f32 %v2926, %v3017
    %v3019 = vpop.f32.mrf.mxu0
    %3020 = vdwg.mxu0
    %3021 = vmatprep.subr.mxu0 0.0
    %3022 = vmatpush1.xpose.msra.mxu0 0.0
    %3023 = vmatprep.subr.mxu0 0.0
    %3024 = vmatpush1.xpose.msra.mxu0 0.0
    %3025 = vmatprep.subr.mxu0 0.0
    %3026 = vmatpush1.xpose.msra.mxu0 0.0
    %3027 = vmatprep.subr.mxu0 0.0
    %3028 = vmatpush1.xpose.msra.mxu0 0.0
    %3029 = vmatprep.subr.mxu0 0.0
    %3030 = vmatpush1.xpose.msra.mxu0 0.0
    %3031 = vmatprep.subr.mxu0 0.0
    %3032 = vmatpush1.xpose.msra.mxu0 0.0
    %3033 = vmatprep.subr.mxu0 0.0
    %3034 = vmatpush1.xpose.msra.mxu0 0.0
    %3035 = vmatprep.subr.mxu0 0.0
    %3036 = vmatpush1.xpose.msra.mxu0 0.0
    %3037 = vmatprep.subr.mxu0 0.0
    %3038 = vmatpush1.xpose.msra.mxu0 0.0
    %3039 = vmatprep.subr.mxu0 0.0
    %3040 = vmatpush1.xpose.msra.mxu0 0.0
    %3041 = vmatprep.subr.mxu0 0.0
    %3042 = vmatpush1.xpose.msra.mxu0 0.0
    %3043 = vmatprep.subr.mxu0 0.0
    %3044 = vmatpush1.xpose.msra.mxu0 0.0
    %3045 = vmatprep.subr.mxu0 0.0
    %3046 = vmatpush1.xpose.msra.mxu0 0.0
    %3047 = vmatprep.subr.mxu0 0.0
    %3048 = vmatpush1.xpose.msra.mxu0 0.0
    %3049 = vmatprep.subr.mxu0 0.0
    %3050 = vmatpush1.xpose.msra.mxu0 0.0
    %3051 = vmatprep.subr.mxu0 0.0
    %v3052 = vand.u32 %v1859, 4294901760
    %3053 = vmatpush1.xpose.msra.mxu0 %v3052
    %3054 = vmatprep.subr.mxu0 0.0
    %3055 = vmatpush2.xpose.msra.mxu0 0.0
    %3056 = vmatprep.subr.mxu0 0.0
    %3057 = vmatpush2.xpose.msra.mxu0 0.0
    %3058 = vmatprep.subr.mxu0 0.0
    %3059 = vmatpush2.xpose.msra.mxu0 0.0
    %3060 = vmatprep.subr.mxu0 0.0
    %3061 = vmatpush2.xpose.msra.mxu0 0.0
    %3062 = vmatprep.subr.mxu0 0.0
    %3063 = vmatpush2.xpose.msra.mxu0 0.0
    %3064 = vmatprep.subr.mxu0 0.0
    %3065 = vmatpush2.xpose.msra.mxu0 0.0
    %3066 = vmatprep.subr.mxu0 0.0
    %3067 = vmatpush2.xpose.msra.mxu0 0.0
    %3068 = vmatprep.subr.mxu0 0.0
    %3069 = vmatpush2.xpose.msra.mxu0 0.0
    %3070 = vmatprep.subr.mxu0 0.0
    %3071 = vmatpush2.xpose.msra.mxu0 0.0
    %3072 = vmatprep.subr.mxu0 0.0
    %3073 = vmatpush2.xpose.msra.mxu0 0.0
    %3074 = vmatprep.subr.mxu0 0.0
    %3075 = vmatpush2.xpose.msra.mxu0 0.0
    %3076 = vmatprep.subr.mxu0 0.0
    %3077 = vmatpush2.xpose.msra.mxu0 0.0
    %3078 = vmatprep.subr.mxu0 0.0
    %3079 = vmatpush2.xpose.msra.mxu0 0.0
    %3080 = vmatprep.subr.mxu0 0.0
    %3081 = vmatpush2.xpose.msra.mxu0 0.0
    %3082 = vmatprep.subr.mxu0 0.0
    %3083 = vmatpush2.xpose.msra.mxu0 0.0
    %3084 = vmatprep.subr.mxu0 0.0
    %3085 = vmatpush2.xpose.msra.mxu0 0.0
    %3086 = vmatprep.mubr.f32.mxu0 0.0
    %v3087 = vand.u32 %v2532, 4294901760
    %3088 = vmatmul.mubr.f32.gmra.mxu0 %v3087
    %v3089 = vpop.f32.mrf.mxu0
    %v3090 = vadd.f32 %v3000, %v3089
    %v3091 = vpop.f32.mrf.mxu0
    %3092 = vmatprep.mubr.f32.mxu0 0.0
    %v3093 = vand.u32 %v2533, 4294901760
    %3094 = vmatmul.mubr.f32.gmra.mxu0 %v3093
    %v3095 = vpop.f32.mrf.mxu0
    %v3096 = vadd.f32 %v3006, %v3095
    %v3097 = vpop.f32.mrf.mxu0
    %3098 = vmatprep.mubr.f32.mxu0 0.0
    %v3099 = vand.u32 %v2534, 4294901760
    %3100 = vmatmul.mubr.f32.gmra.mxu0 %v3099
    %v3101 = vpop.f32.mrf.mxu0
    %v3102 = vadd.f32 %v3012, %v3101
    %v3103 = vpop.f32.mrf.mxu0
    %3104 = vmatprep.mubr.f32.mxu0 0.0
    %v3105 = vand.u32 %v2535, 4294901760
    %3106 = vmatmul.mubr.f32.gmra.mxu0 %v3105
    %v3107 = vpop.f32.mrf.mxu0
    %v3108 = vadd.f32 %v3018, %v3107
    %v3109 = vpop.f32.mrf.mxu0
    %3110 = vdwg.mxu0
    %v3111 = vld [vmem:[#allocation5 + $0x250] sm:$0xff]
    %v3112 = vmul.f32 %v2531, %v1859
    %v3113 = vlaneseq
    %v3114 = vand.u32 %v3113, 127
    %vm3115 = vcmp.lt.s32.totalorder %v3114, 64
    %v3116 = vsel %vm3115, 1.0, 0.0
    %v3117 = vsub.f32 1.0, %v3116
    %v3118 = vlaneseq
    %v3119 = vshrl.u32 %v3118, 7
    %v3120 = vsub.s32 0, %v3119
    %v3121 = vrot.slane %v2531, %v3120
    %v3122 = vmul.f32 %v3121, %v3111
    %v3123 = vmul.f32 %v3122, 1.442695
    %v3124 = vpow.pop %v3123
    %3125 = vst [vmem:[#allocation2] sm:$0xff] %v3124
    %3127 = vset.pattern.permute.xlu0 0
    %3128 = vperm.xlu0 %3127, %v3090
    %v3129 = vpop.permute.xlu0 %3128
    %v3131 = vmul.f32 %v3129, %v3116
    %3133 = vset.pattern.permute.xlu0 0
    %3134 = vperm.xlu0 %3133, %v3096
    %v3135 = vpop.permute.xlu0 %3134
    %v3137 = vmul.f32 %v3135, %v3117
    %v3138 = vadd.f32 %v3131, %v3137
    %v3139 = vlaneseq
    %v3140 = vshrl.u32 %v3139, 7
    %v3141 = vsub.s32 0, %v3140
    %v3142 = vrot.slane %v3112, %v3141
    %v3143 = vmul.f32 %v3138, %v3142
    %3144 = vst [vmem:[#allocation3] sm:$0xff] %v3143
    %v3145 = vlaneseq
    %v3146 = vshrl.u32 %v3145, 7
    %v3147 = vsub.s32 1, %v3146
    %v3148 = vrot.slane %v2531, %v3147
    %v3149 = vmul.f32 %v3148, %v3111
    %v3150 = vmul.f32 %v3149, 1.442695
    %v3151 = vpow.pop %v3150
    %3152 = vst [vmem:[#allocation2 + $0x8] sm:$0xff] %v3151
    %3153 = vset.pattern.permute.xlu0 1
    %3154 = vperm.xlu0 %3153, %v3090
    %v3155 = vpop.permute.xlu0 %3154
    %v3157 = vmul.f32 %v3155, %v3116
    %3158 = vset.pattern.permute.xlu0 1
    %3159 = vperm.xlu0 %3158, %v3096
    %v3160 = vpop.permute.xlu0 %3159
    %v3162 = vmul.f32 %v3160, %v3117
    %v3163 = vadd.f32 %v3157, %v3162
    %v3164 = vlaneseq
    %v3165 = vshrl.u32 %v3164, 7
    %v3166 = vsub.s32 1, %v3165
    %v3167 = vrot.slane %v3112, %v3166
    %v3168 = vmul.f32 %v3163, %v3167
    %3169 = vst [vmem:[#allocation3 + $0x8] sm:$0xff] %v3168
    %v3170 = vlaneseq
    %v3171 = vshrl.u32 %v3170, 7
    %v3172 = vsub.s32 2, %v3171
    %v3173 = vrot.slane %v2531, %v3172
    %v3174 = vmul.f32 %v3173, %v3111
    %v3175 = vmul.f32 %v3174, 1.442695
    %v3176 = vpow.pop %v3175
    %3177 = vst [vmem:[#allocation2 + $0x10] sm:$0xff] %v3176
    %3178 = vset.pattern.permute.xlu0 2
    %3179 = vperm.xlu0 %3178, %v3090
    %v3180 = vpop.permute.xlu0 %3179
    %v3182 = vmul.f32 %v3180, %v3116
    %3183 = vset.pattern.permute.xlu0 2
    %3184 = vperm.xlu0 %3183, %v3096
    %v3185 = vpop.permute.xlu0 %3184
    %v3187 = vmul.f32 %v3185, %v3117
    %v3188 = vadd.f32 %v3182, %v3187
    %v3189 = vlaneseq
    %v3190 = vshrl.u32 %v3189, 7
    %v3191 = vsub.s32 2, %v3190
    %v3192 = vrot.slane %v3112, %v3191
    %v3193 = vmul.f32 %v3188, %v3192
    %3194 = vst [vmem:[#allocation3 + $0x10] sm:$0xff] %v3193
    %v3195 = vlaneseq
    %v3196 = vshrl.u32 %v3195, 7
    %v3197 = vsub.s32 3, %v3196
    %v3198 = vrot.slane %v2531, %v3197
    %v3199 = vmul.f32 %v3198, %v3111
    %v3200 = vmul.f32 %v3199, 1.442695
    %v3201 = vpow.pop %v3200
    %3202 = vst [vmem:[#allocation2 + $0x18] sm:$0xff] %v3201
    %3203 = vset.pattern.permute.xlu0 3
    %3204 = vperm.xlu0 %3203, %v3090
    %v3205 = vpop.permute.xlu0 %3204
    %v3207 = vmul.f32 %v3205, %v3116
    %3208 = vset.pattern.permute.xlu0 3
    %3209 = vperm.xlu0 %3208, %v3096
    %v3210 = vpop.permute.xlu0 %3209
    %v3212 = vmul.f32 %v3210, %v3117
    %v3213 = vadd.f32 %v3207, %v3212
    %v3214 = vlaneseq
    %v3215 = vshrl.u32 %v3214, 7
    %v3216 = vsub.s32 3, %v3215
    %v3217 = vrot.slane %v3112, %v3216
    %v3218 = vmul.f32 %v3213, %v3217
    %3219 = vst [vmem:[#allocation3 + $0x18] sm:$0xff] %v3218
    %v3220 = vlaneseq
    %v3221 = vshrl.u32 %v3220, 7
    %v3222 = vsub.s32 4, %v3221
    %v3223 = vrot.slane %v2531, %v3222
    %v3224 = vmul.f32 %v3223, %v3111
    %v3225 = vmul.f32 %v3224, 1.442695
    %v3226 = vpow.pop %v3225
    %3227 = vst [vmem:[#allocation2 + $0x20] sm:$0xff] %v3226
    %3228 = vset.pattern.permute.xlu0 4
    %3229 = vperm.xlu0 %3228, %v3090
    %v3230 = vpop.permute.xlu0 %3229
    %v3232 = vmul.f32 %v3230, %v3116
    %3233 = vset.pattern.permute.xlu0 4
    %3234 = vperm.xlu0 %3233, %v3096
    %v3235 = vpop.permute.xlu0 %3234
    %v3237 = vmul.f32 %v3235, %v3117
    %v3238 = vadd.f32 %v3232, %v3237
    %v3239 = vlaneseq
    %v3240 = vshrl.u32 %v3239, 7
    %v3241 = vsub.s32 4, %v3240
    %v3242 = vrot.slane %v3112, %v3241
    %v3243 = vmul.f32 %v3238, %v3242
    %3244 = vst [vmem:[#allocation3 + $0x20] sm:$0xff] %v3243
    %v3245 = vlaneseq
    %v3246 = vshrl.u32 %v3245, 7
    %v3247 = vsub.s32 5, %v3246
    %v3248 = vrot.slane %v2531, %v3247
    %v3249 = vmul.f32 %v3248, %v3111
    %v3250 = vmul.f32 %v3249, 1.442695
    %v3251 = vpow.pop %v3250
    %3252 = vst [vmem:[#allocation2 + $0x28] sm:$0xff] %v3251
    %3253 = vset.pattern.permute.xlu0 5
    %3254 = vperm.xlu0 %3253, %v3090
    %v3255 = vpop.permute.xlu0 %3254
    %v3257 = vmul.f32 %v3255, %v3116
    %3258 = vset.pattern.permute.xlu0 5
    %3259 = vperm.xlu0 %3258, %v3096
    %v3260 = vpop.permute.xlu0 %3259
    %v3262 = vmul.f32 %v3260, %v3117
    %v3263 = vadd.f32 %v3257, %v3262
    %v3264 = vlaneseq
    %v3265 = vshrl.u32 %v3264, 7
    %v3266 = vsub.s32 5, %v3265
    %v3267 = vrot.slane %v3112, %v3266
    %v3268 = vmul.f32 %v3263, %v3267
    %3269 = vst [vmem:[#allocation3 + $0x28] sm:$0xff] %v3268
    %v3270 = vlaneseq
    %v3271 = vshrl.u32 %v3270, 7
    %v3272 = vsub.s32 6, %v3271
    %v3273 = vrot.slane %v2531, %v3272
    %v3274 = vmul.f32 %v3273, %v3111
    %v3275 = vmul.f32 %v3274, 1.442695
    %v3276 = vpow.pop %v3275
    %3277 = vst [vmem:[#allocation2 + $0x30] sm:$0xff] %v3276
    %3278 = vset.pattern.permute.xlu0 6
    %3279 = vperm.xlu0 %3278, %v3090
    %v3280 = vpop.permute.xlu0 %3279
    %v3282 = vmul.f32 %v3280, %v3116
    %3283 = vset.pattern.permute.xlu0 6
    %3284 = vperm.xlu0 %3283, %v3096
    %v3285 = vpop.permute.xlu0 %3284
    %v3287 = vmul.f32 %v3285, %v3117
    %v3288 = vadd.f32 %v3282, %v3287
    %v3289 = vlaneseq
    %v3290 = vshrl.u32 %v3289, 7
    %v3291 = vsub.s32 6, %v3290
    %v3292 = vrot.slane %v3112, %v3291
    %v3293 = vmul.f32 %v3288, %v3292
    %3294 = vst [vmem:[#allocation3 + $0x30] sm:$0xff] %v3293
    %v3295 = vlaneseq
    %v3296 = vshrl.u32 %v3295, 7
    %v3297 = vsub.s32 7, %v3296
    %v3298 = vrot.slane %v2531, %v3297
    %v3299 = vmul.f32 %v3298, %v3111
    %v3300 = vmul.f32 %v3299, 1.442695
    %v3301 = vpow.pop %v3300
    %3302 = vst [vmem:[#allocation2 + $0x38] sm:$0xff] %v3301
    %3303 = vset.pattern.permute.xlu0 7
    %3304 = vperm.xlu0 %3303, %v3090
    %v3305 = vpop.permute.xlu0 %3304
    %v3307 = vmul.f32 %v3305, %v3116
    %3308 = vset.pattern.permute.xlu0 7
    %3309 = vperm.xlu0 %3308, %v3096
    %v3310 = vpop.permute.xlu0 %3309
    %v3312 = vmul.f32 %v3310, %v3117
    %v3313 = vadd.f32 %v3307, %v3312
    %v3314 = vlaneseq
    %v3315 = vshrl.u32 %v3314, 7
    %v3316 = vsub.s32 7, %v3315
    %v3317 = vrot.slane %v3112, %v3316
    %v3318 = vmul.f32 %v3313, %v3317
    %3319 = vst [vmem:[#allocation3 + $0x38] sm:$0xff] %v3318
    %v3320 = vld [vmem:[#allocation2] sm:$0xff]
    %v3321 = vmul.f32 %v3320, 0.0
    %v3322 = vld [vmem:[#allocation3] sm:$0xff]
    %v3323 = vadd.f32 %v3321, %v3322
    %3324 = vst [vmem:[#allocation4] sm:$0xff] %v3323
    %v3325 = vld [vmem:[#allocation2 + $0x8] sm:$0xff]
    %v3326 = vmul.f32 %v3325, %v3323
    %v3327 = vld [vmem:[#allocation3 + $0x8] sm:$0xff]
    %v3328 = vadd.f32 %v3326, %v3327
    %3329 = vst [vmem:[#allocation4 + $0x8] sm:$0xff] %v3328
    %v3330 = vld [vmem:[#allocation2 + $0x10] sm:$0xff]
    %v3331 = vmul.f32 %v3330, %v3328
    %v3332 = vld [vmem:[#allocation3 + $0x10] sm:$0xff]
    %v3333 = vadd.f32 %v3331, %v3332
    %3334 = vst [vmem:[#allocation4 + $0x10] sm:$0xff] %v3333
    %v3335 = vld [vmem:[#allocation2 + $0x18] sm:$0xff]
    %v3336 = vmul.f32 %v3335, %v3333
    %v3337 = vld [vmem:[#allocation3 + $0x18] sm:$0xff]
    %v3338 = vadd.f32 %v3336, %v3337
    %3339 = vst [vmem:[#allocation4 + $0x18] sm:$0xff] %v3338
    %v3340 = vld [vmem:[#allocation2 + $0x20] sm:$0xff]
    %v3341 = vmul.f32 %v3340, %v3338
    %v3342 = vld [vmem:[#allocation3 + $0x20] sm:$0xff]
    %v3343 = vadd.f32 %v3341, %v3342
    %3344 = vst [vmem:[#allocation4 + $0x20] sm:$0xff] %v3343
    %v3345 = vld [vmem:[#allocation2 + $0x28] sm:$0xff]
    %v3346 = vmul.f32 %v3345, %v3343
    %v3347 = vld [vmem:[#allocation3 + $0x28] sm:$0xff]
    %v3348 = vadd.f32 %v3346, %v3347
    %3349 = vst [vmem:[#allocation4 + $0x28] sm:$0xff] %v3348
    %v3350 = vld [vmem:[#allocation2 + $0x30] sm:$0xff]
    %v3351 = vmul.f32 %v3350, %v3348
    %v3352 = vld [vmem:[#allocation3 + $0x30] sm:$0xff]
    %v3353 = vadd.f32 %v3351, %v3352
    %3354 = vst [vmem:[#allocation4 + $0x30] sm:$0xff] %v3353
    %v3355 = vld [vmem:[#allocation2 + $0x38] sm:$0xff]
    %v3356 = vmul.f32 %v3355, %v3353
    %v3357 = vld [vmem:[#allocation3 + $0x38] sm:$0xff]
    %v3358 = vadd.f32 %v3356, %v3357
    %3359 = vst [vmem:[#allocation4 + $0x38] sm:$0xff] %v3358
    %3361 = vset.pattern.permute.xlu0 0
    %3362 = vperm.xlu0 %3361, %v3102
    %v3363 = vpop.permute.xlu0 %3362
    %v3365 = vmul.f32 %v3363, %v3116
    %3367 = vset.pattern.permute.xlu0 0
    %3368 = vperm.xlu0 %3367, %v3108
    %v3369 = vpop.permute.xlu0 %3368
    %v3371 = vmul.f32 %v3369, %v3117
    %v3372 = vadd.f32 %v3365, %v3371
    %v3373 = vld [vmem:[#allocation4] sm:$0xff]
    %v3374 = vmul.f32 %v3372, %v3373
    %v3375 = vrot.slane %v3374, 4
    %v3376 = vadd.f32 %v3374, %v3375
    %v3377 = vrot.slane %v3376, 2
    %v3378 = vadd.f32 %v3376, %v3377
    %v3379 = vrot.slane %v3378, 1
    %v3380 = vadd.f32 %v3378, %v3379
    %3381 = vset.pattern.permute.xlu0 1
    %3382 = vperm.xlu0 %3381, %v3102
    %v3383 = vpop.permute.xlu0 %3382
    %v3385 = vmul.f32 %v3383, %v3116
    %3386 = vset.pattern.permute.xlu0 1
    %3387 = vperm.xlu0 %3386, %v3108
    %v3388 = vpop.permute.xlu0 %3387
    %v3390 = vmul.f32 %v3388, %v3117
    %v3391 = vadd.f32 %v3385, %v3390
    %v3392 = vld [vmem:[#allocation4 + $0x8] sm:$0xff]
    %v3393 = vmul.f32 %v3391, %v3392
    %v3394 = vrot.slane %v3393, 4
    %v3395 = vadd.f32 %v3393, %v3394
    %v3396 = vrot.slane %v3395, 2
    %v3397 = vadd.f32 %v3395, %v3396
    %v3398 = vrot.slane %v3397, 1
    %v3399 = vadd.f32 %v3397, %v3398
    %3400 = vset.pattern.permute.xlu0 2
    %3401 = vperm.xlu0 %3400, %v3102
    %v3402 = vpop.permute.xlu0 %3401
    %v3404 = vmul.f32 %v3402, %v3116
    %3405 = vset.pattern.permute.xlu0 2
    %3406 = vperm.xlu0 %3405, %v3108
    %v3407 = vpop.permute.xlu0 %3406
    %v3409 = vmul.f32 %v3407, %v3117
    %v3410 = vadd.f32 %v3404, %v3409
    %v3411 = vld [vmem:[#allocation4 + $0x10] sm:$0xff]
    %v3412 = vmul.f32 %v3410, %v3411
    %v3413 = vrot.slane %v3412, 4
    %v3414 = vadd.f32 %v3412, %v3413
    %v3415 = vrot.slane %v3414, 2
    %v3416 = vadd.f32 %v3414, %v3415
    %v3417 = vrot.slane %v3416, 1
    %v3418 = vadd.f32 %v3416, %v3417
    %3419 = vset.pattern.permute.xlu0 3
    %3420 = vperm.xlu0 %3419, %v3102
    %v3421 = vpop.permute.xlu0 %3420
    %v3423 = vmul.f32 %v3421, %v3116
    %3424 = vset.pattern.permute.xlu0 3
    %3425 = vperm.xlu0 %3424, %v3108
    %v3426 = vpop.permute.xlu0 %3425
    %v3428 = vmul.f32 %v3426, %v3117
    %v3429 = vadd.f32 %v3423, %v3428
    %v3430 = vld [vmem:[#allocation4 + $0x18] sm:$0xff]
    %v3431 = vmul.f32 %v3429, %v3430
    %v3432 = vrot.slane %v3431, 4
    %v3433 = vadd.f32 %v3431, %v3432
    %v3434 = vrot.slane %v3433, 2
    %v3435 = vadd.f32 %v3433, %v3434
    %v3436 = vrot.slane %v3435, 1
    %v3437 = vadd.f32 %v3435, %v3436
    %3438 = vset.pattern.permute.xlu0 4
    %3439 = vperm.xlu0 %3438, %v3102
    %v3440 = vpop.permute.xlu0 %3439
    %v3442 = vmul.f32 %v3440, %v3116
    %3443 = vset.pattern.permute.xlu0 4
    %3444 = vperm.xlu0 %3443, %v3108
    %v3445 = vpop.permute.xlu0 %3444
    %v3447 = vmul.f32 %v3445, %v3117
    %v3448 = vadd.f32 %v3442, %v3447
    %v3449 = vld [vmem:[#allocation4 + $0x20] sm:$0xff]
    %v3450 = vmul.f32 %v3448, %v3449
    %v3451 = vrot.slane %v3450, 4
    %v3452 = vadd.f32 %v3450, %v3451
    %v3453 = vrot.slane %v3452, 2
    %v3454 = vadd.f32 %v3452, %v3453
    %v3455 = vrot.slane %v3454, 1
    %v3456 = vadd.f32 %v3454, %v3455
    %3457 = vset.pattern.permute.xlu0 5
    %3458 = vperm.xlu0 %3457, %v3102
    %v3459 = vpop.permute.xlu0 %3458
    %v3461 = vmul.f32 %v3459, %v3116
    %3462 = vset.pattern.permute.xlu0 5
    %3463 = vperm.xlu0 %3462, %v3108
    %v3464 = vpop.permute.xlu0 %3463
    %v3466 = vmul.f32 %v3464, %v3117
    %v3467 = vadd.f32 %v3461, %v3466
    %v3468 = vld [vmem:[#allocation4 + $0x28] sm:$0xff]
    %v3469 = vmul.f32 %v3467, %v3468
    %v3470 = vrot.slane %v3469, 4
    %v3471 = vadd.f32 %v3469, %v3470
    %v3472 = vrot.slane %v3471, 2
    %v3473 = vadd.f32 %v3471, %v3472
    %v3474 = vrot.slane %v3473, 1
    %v3475 = vadd.f32 %v3473, %v3474
    %3476 = vset.pattern.permute.xlu0 6
    %3477 = vperm.xlu0 %3476, %v3102
    %v3478 = vpop.permute.xlu0 %3477
    %v3480 = vmul.f32 %v3478, %v3116
    %3481 = vset.pattern.permute.xlu0 6
    %3482 = vperm.xlu0 %3481, %v3108
    %v3483 = vpop.permute.xlu0 %3482
    %v3485 = vmul.f32 %v3483, %v3117
    %v3486 = vadd.f32 %v3480, %v3485
    %v3487 = vld [vmem:[#allocation4 + $0x30] sm:$0xff]
    %v3488 = vmul.f32 %v3486, %v3487
    %v3489 = vrot.slane %v3488, 4
    %v3490 = vadd.f32 %v3488, %v3489
    %v3491 = vrot.slane %v3490, 2
    %v3492 = vadd.f32 %v3490, %v3491
    %v3493 = vrot.slane %v3492, 1
    %v3494 = vadd.f32 %v3492, %v3493
    %3495 = vset.pattern.permute.xlu0 7
    %3496 = vperm.xlu0 %3495, %v3102
    %v3497 = vpop.permute.xlu0 %3496
    %v3499 = vmul.f32 %v3497, %v3116
    %3500 = vset.pattern.permute.xlu0 7
    %3501 = vperm.xlu0 %3500, %v3108
    %v3502 = vpop.permute.xlu0 %3501
    %v3504 = vmul.f32 %v3502, %v3117
    %v3505 = vadd.f32 %v3499, %v3504
    %v3506 = vld [vmem:[#allocation4 + $0x38] sm:$0xff]
    %v3507 = vmul.f32 %v3505, %v3506
    %v3508 = vrot.slane %v3507, 4
    %v3509 = vadd.f32 %v3507, %v3508
    %v3510 = vrot.slane %v3509, 2
    %v3511 = vadd.f32 %v3509, %v3510
    %v3512 = vrot.slane %v3511, 1
    %v3513 = vadd.f32 %v3511, %v3512
    %v3514 = vsel %vm1798, %v3380, %v3399
    %v3515 = vsel %vm1817, %v3514, %v3418
    %v3516 = vsel %vm1836, %v3515, %v3437
    %vm3517 = vcmask 1043456
    %v3518 = vsel %vm3517, %v3516, %v3456
    %vm3519 = vcmask 1044480
    %v3520 = vsel %vm3519, %v3518, %v3475
    %vm3521 = vcmask 1045504
    %v3522 = vsel %vm3521, %v3520, %v3494
    %vm3523 = vcmask 1046528
    %v3524 = vsel %vm3523, %v3522, %v3513
    %v3525 = vld [vmem:[#allocation5 + $0x260] ss:$0 sm:$0xff]
    %v3526 = vmul.f32 %v3525, %v1859
    %v3527 = vadd.f32 %v3524, %v3526
    %v3528 = vmul.f32 %v3527, %v1860
    %v3529 = vld [vmem:[#allocation5 + $0x270] sm:$0xff]
    %v3530 = vld [vmem:[#allocation5 + $0x280] sm:$0xff]
    %v3531 = vld [vmem:[#allocation5 + $0x290] sm:$0xff]
    %v3532 = vld [vmem:[#allocation5 + $0x2a0] sm:$0xff]
    %v3534 = vsel %vm1114, %v3531, 0
    %v3537 = vsel %vm1114, %v3532, 0
    %3539 = vmatprep.subr.mxu0 0.0
    %3540 = vmatpush1.xpose.msra.mxu0 0.0
    %3541 = vmatprep.subr.mxu0 0.0
    %3542 = vmatpush1.xpose.msra.mxu0 0.0
    %3543 = vmatprep.subr.mxu0 0.0
    %3544 = vmatpush1.xpose.msra.mxu0 0.0
    %3545 = vmatprep.subr.mxu0 0.0
    %3546 = vmatpush1.xpose.msra.mxu0 0.0
    %3547 = vmatprep.subr.mxu0 0.0
    %3548 = vmatpush1.xpose.msra.mxu0 0.0
    %3549 = vmatprep.subr.mxu0 0.0
    %3550 = vmatpush1.xpose.msra.mxu0 0.0
    %3551 = vmatprep.subr.mxu0 0.0
    %3552 = vmatpush1.xpose.msra.mxu0 0.0
    %3553 = vmatprep.subr.mxu0 0.0
    %3554 = vmatpush1.xpose.msra.mxu0 0.0
    %3555 = vmatprep.subr.mxu0 0.0
    %3556 = vmatpush1.xpose.msra.mxu0 0.0
    %3557 = vmatprep.subr.mxu0 0.0
    %3558 = vmatpush1.xpose.msra.mxu0 0.0
    %3559 = vmatprep.subr.mxu0 0.0
    %3560 = vmatpush1.xpose.msra.mxu0 0.0
    %3561 = vmatprep.subr.mxu0 0.0
    %3562 = vmatpush1.xpose.msra.mxu0 0.0
    %3563 = vmatprep.subr.mxu0 0.0
    %3564 = vmatpush1.xpose.msra.mxu0 0.0
    %3565 = vmatprep.subr.mxu0 0.0
    %3566 = vmatpush1.xpose.msra.mxu0 0.0
    %3567 = vmatprep.subr.mxu0 0.0
    %3568 = vmatpush1.xpose.msra.mxu0 0.0
    %3569 = vmatprep.subr.mxu0 0.0
    %v3570 = vand.u32 %v1116, 4294901760
    %3571 = vmatpush1.xpose.msra.mxu0 %v3570
    %3572 = vmatprep.subr.mxu0 0.0
    %3573 = vmatpush2.xpose.msra.mxu0 0.0
    %3574 = vmatprep.subr.mxu0 0.0
    %3575 = vmatpush2.xpose.msra.mxu0 0.0
    %3576 = vmatprep.subr.mxu0 0.0
    %3577 = vmatpush2.xpose.msra.mxu0 0.0
    %3578 = vmatprep.subr.mxu0 0.0
    %3579 = vmatpush2.xpose.msra.mxu0 0.0
    %3580 = vmatprep.subr.mxu0 0.0
    %3581 = vmatpush2.xpose.msra.mxu0 0.0
    %3582 = vmatprep.subr.mxu0 0.0
    %3583 = vmatpush2.xpose.msra.mxu0 0.0
    %3584 = vmatprep.subr.mxu0 0.0
    %3585 = vmatpush2.xpose.msra.mxu0 0.0
    %3586 = vmatprep.subr.mxu0 0.0
    %3587 = vmatpush2.xpose.msra.mxu0 0.0
    %3588 = vmatprep.subr.mxu0 0.0
    %3589 = vmatpush2.xpose.msra.mxu0 0.0
    %3590 = vmatprep.subr.mxu0 0.0
    %3591 = vmatpush2.xpose.msra.mxu0 0.0
    %3592 = vmatprep.subr.mxu0 0.0
    %3593 = vmatpush2.xpose.msra.mxu0 0.0
    %3594 = vmatprep.subr.mxu0 0.0
    %3595 = vmatpush2.xpose.msra.mxu0 0.0
    %3596 = vmatprep.subr.mxu0 0.0
    %3597 = vmatpush2.xpose.msra.mxu0 0.0
    %3598 = vmatprep.subr.mxu0 0.0
    %3599 = vmatpush2.xpose.msra.mxu0 0.0
    %3600 = vmatprep.subr.mxu0 0.0
    %3601 = vmatpush2.xpose.msra.mxu0 0.0
    %3602 = vmatprep.subr.mxu0 0.0
    %3603 = vmatpush2.xpose.msra.mxu0 0.0
    %3604 = vmatprep.mubr.f32.mxu0 0.0
    %v3605 = vand.u32 %v3534, 4294901760
    %v3606 = vsub.f32 %v3534, %v3605
    %v3607 = vand.u32 %v3606, 4294901760
    %v3608 = vsub.f32 %v3606, %v3607
    %v3609 = vand.u32 %v3608, 4294901760
    %3610 = vmatmul.mubr.f32.gmra.mxu0 %v3609
    %v3611 = vpop.f32.mrf.mxu0
    %v3612 = vadd.f32 0.0, %v3611
    %v3613 = vpop.f32.mrf.mxu0
    %3614 = vmatprep.mubr.f32.mxu0 0.0
    %v3615 = vand.u32 %v3537, 4294901760
    %v3616 = vsub.f32 %v3537, %v3615
    %v3617 = vand.u32 %v3616, 4294901760
    %v3618 = vsub.f32 %v3616, %v3617
    %v3619 = vand.u32 %v3618, 4294901760
    %3620 = vmatmul.mubr.f32.gmra.mxu0 %v3619
    %v3621 = vpop.f32.mrf.mxu0
    %v3622 = vadd.f32 0.0, %v3621
    %v3623 = vpop.f32.mrf.mxu0
    %3624 = vdwg.mxu0
    %3625 = vmatprep.subr.mxu0 0.0
    %3626 = vmatpush1.xpose.msra.mxu0 0.0
    %3627 = vmatprep.subr.mxu0 0.0
    %3628 = vmatpush1.xpose.msra.mxu0 0.0
    %3629 = vmatprep.subr.mxu0 0.0
    %3630 = vmatpush1.xpose.msra.mxu0 0.0
    %3631 = vmatprep.subr.mxu0 0.0
    %3632 = vmatpush1.xpose.msra.mxu0 0.0
    %3633 = vmatprep.subr.mxu0 0.0
    %3634 = vmatpush1.xpose.msra.mxu0 0.0
    %3635 = vmatprep.subr.mxu0 0.0
    %3636 = vmatpush1.xpose.msra.mxu0 0.0
    %3637 = vmatprep.subr.mxu0 0.0
    %3638 = vmatpush1.xpose.msra.mxu0 0.0
    %3639 = vmatprep.subr.mxu0 0.0
    %3640 = vmatpush1.xpose.msra.mxu0 0.0
    %3641 = vmatprep.subr.mxu0 0.0
    %3642 = vmatpush1.xpose.msra.mxu0 0.0
    %3643 = vmatprep.subr.mxu0 0.0
    %3644 = vmatpush1.xpose.msra.mxu0 0.0
    %3645 = vmatprep.subr.mxu0 0.0
    %3646 = vmatpush1.xpose.msra.mxu0 0.0
    %3647 = vmatprep.subr.mxu0 0.0
    %3648 = vmatpush1.xpose.msra.mxu0 0.0
    %3649 = vmatprep.subr.mxu0 0.0
    %3650 = vmatpush1.xpose.msra.mxu0 0.0
    %3651 = vmatprep.subr.mxu0 0.0
    %3652 = vmatpush1.xpose.msra.mxu0 0.0
    %3653 = vmatprep.subr.mxu0 0.0
    %3654 = vmatpush1.xpose.msra.mxu0 0.0
    %3655 = vmatprep.subr.mxu0 0.0
    %v3656 = vand.u32 %v1116, 4294901760
    %v3657 = vsub.f32 %v1116, %v3656
    %v3658 = vand.u32 %v3657, 4294901760
    %v3659 = vsub.f32 %v3657, %v3658
    %v3660 = vand.u32 %v3659, 4294901760
    %3661 = vmatpush1.xpose.msra.mxu0 %v3660
    %3662 = vmatprep.subr.mxu0 0.0
    %3663 = vmatpush2.xpose.msra.mxu0 0.0
    %3664 = vmatprep.subr.mxu0 0.0
    %3665 = vmatpush2.xpose.msra.mxu0 0.0
    %3666 = vmatprep.subr.mxu0 0.0
    %3667 = vmatpush2.xpose.msra.mxu0 0.0
    %3668 = vmatprep.subr.mxu0 0.0
    %3669 = vmatpush2.xpose.msra.mxu0 0.0
    %3670 = vmatprep.subr.mxu0 0.0
    %3671 = vmatpush2.xpose.msra.mxu0 0.0
    %3672 = vmatprep.subr.mxu0 0.0
    %3673 = vmatpush2.xpose.msra.mxu0 0.0
    %3674 = vmatprep.subr.mxu0 0.0
    %3675 = vmatpush2.xpose.msra.mxu0 0.0
    %3676 = vmatprep.subr.mxu0 0.0
    %3677 = vmatpush2.xpose.msra.mxu0 0.0
    %3678 = vmatprep.subr.mxu0 0.0
    %3679 = vmatpush2.xpose.msra.mxu0 0.0
    %3680 = vmatprep.subr.mxu0 0.0
    %3681 = vmatpush2.xpose.msra.mxu0 0.0
    %3682 = vmatprep.subr.mxu0 0.0
    %3683 = vmatpush2.xpose.msra.mxu0 0.0
    %3684 = vmatprep.subr.mxu0 0.0
    %3685 = vmatpush2.xpose.msra.mxu0 0.0
    %3686 = vmatprep.subr.mxu0 0.0
    %3687 = vmatpush2.xpose.msra.mxu0 0.0
    %3688 = vmatprep.subr.mxu0 0.0
    %3689 = vmatpush2.xpose.msra.mxu0 0.0
    %3690 = vmatprep.subr.mxu0 0.0
    %3691 = vmatpush2.xpose.msra.mxu0 0.0
    %3692 = vmatprep.subr.mxu0 0.0
    %3693 = vmatpush2.xpose.msra.mxu0 0.0
    %3694 = vmatprep.mubr.f32.mxu0 0.0
    %v3695 = vand.u32 %v3534, 4294901760
    %3696 = vmatmul.mubr.f32.gmra.mxu0 %v3695
    %v3697 = vpop.f32.mrf.mxu0
    %v3698 = vadd.f32 %v3612, %v3697
    %v3699 = vpop.f32.mrf.mxu0
    %3700 = vmatprep.mubr.f32.mxu0 0.0
    %v3701 = vand.u32 %v3537, 4294901760
    %3702 = vmatmul.mubr.f32.gmra.mxu0 %v3701
    %v3703 = vpop.f32.mrf.mxu0
    %v3704 = vadd.f32 %v3622, %v3703
    %v3705 = vpop.f32.mrf.mxu0
    %3706 = vdwg.mxu0
    %3707 = vmatprep.subr.mxu0 0.0
    %3708 = vmatpush1.xpose.msra.mxu0 0.0
    %3709 = vmatprep.subr.mxu0 0.0
    %3710 = vmatpush1.xpose.msra.mxu0 0.0
    %3711 = vmatprep.subr.mxu0 0.0
    %3712 = vmatpush1.xpose.msra.mxu0 0.0
    %3713 = vmatprep.subr.mxu0 0.0
    %3714 = vmatpush1.xpose.msra.mxu0 0.0
    %3715 = vmatprep.subr.mxu0 0.0
    %3716 = vmatpush1.xpose.msra.mxu0 0.0
    %3717 = vmatprep.subr.mxu0 0.0
    %3718 = vmatpush1.xpose.msra.mxu0 0.0
    %3719 = vmatprep.subr.mxu0 0.0
    %3720 = vmatpush1.xpose.msra.mxu0 0.0
    %3721 = vmatprep.subr.mxu0 0.0
    %3722 = vmatpush1.xpose.msra.mxu0 0.0
    %3723 = vmatprep.subr.mxu0 0.0
    %3724 = vmatpush1.xpose.msra.mxu0 0.0
    %3725 = vmatprep.subr.mxu0 0.0
    %3726 = vmatpush1.xpose.msra.mxu0 0.0
    %3727 = vmatprep.subr.mxu0 0.0
    %3728 = vmatpush1.xpose.msra.mxu0 0.0
    %3729 = vmatprep.subr.mxu0 0.0
    %3730 = vmatpush1.xpose.msra.mxu0 0.0
    %3731 = vmatprep.subr.mxu0 0.0
    %3732 = vmatpush1.xpose.msra.mxu0 0.0
    %3733 = vmatprep.subr.mxu0 0.0
    %3734 = vmatpush1.xpose.msra.mxu0 0.0
    %3735 = vmatprep.subr.mxu0 0.0
    %3736 = vmatpush1.xpose.msra.mxu0 0.0
    %3737 = vmatprep.subr.mxu0 0.0
    %v3738 = vand.u32 %v1116, 4294901760
    %v3739 = vsub.f32 %v1116, %v3738
    %3740 = vmatpush1.xpose.msra.mxu0 %v3739
    %3741 = vmatprep.subr.mxu0 0.0
    %3742 = vmatpush2.xpose.msra.mxu0 0.0
    %3743 = vmatprep.subr.mxu0 0.0
    %3744 = vmatpush2.xpose.msra.mxu0 0.0
    %3745 = vmatprep.subr.mxu0 0.0
    %3746 = vmatpush2.xpose.msra.mxu0 0.0
    %3747 = vmatprep.subr.mxu0 0.0
    %3748 = vmatpush2.xpose.msra.mxu0 0.0
    %3749 = vmatprep.subr.mxu0 0.0
    %3750 = vmatpush2.xpose.msra.mxu0 0.0
    %3751 = vmatprep.subr.mxu0 0.0
    %3752 = vmatpush2.xpose.msra.mxu0 0.0
    %3753 = vmatprep.subr.mxu0 0.0
    %3754 = vmatpush2.xpose.msra.mxu0 0.0
    %3755 = vmatprep.subr.mxu0 0.0
    %3756 = vmatpush2.xpose.msra.mxu0 0.0
    %3757 = vmatprep.subr.mxu0 0.0
    %3758 = vmatpush2.xpose.msra.mxu0 0.0
    %3759 = vmatprep.subr.mxu0 0.0
    %3760 = vmatpush2.xpose.msra.mxu0 0.0
    %3761 = vmatprep.subr.mxu0 0.0
    %3762 = vmatpush2.xpose.msra.mxu0 0.0
    %3763 = vmatprep.subr.mxu0 0.0
    %3764 = vmatpush2.xpose.msra.mxu0 0.0
    %3765 = vmatprep.subr.mxu0 0.0
    %3766 = vmatpush2.xpose.msra.mxu0 0.0
    %3767 = vmatprep.subr.mxu0 0.0
    %3768 = vmatpush2.xpose.msra.mxu0 0.0
    %3769 = vmatprep.subr.mxu0 0.0
    %3770 = vmatpush2.xpose.msra.mxu0 0.0
    %3771 = vmatprep.subr.mxu0 0.0
    %3772 = vmatpush2.xpose.msra.mxu0 0.0
    %3773 = vmatprep.mubr.f32.mxu0 0.0
    %v3774 = vand.u32 %v3534, 4294901760
    %v3775 = vsub.f32 %v3534, %v3774
    %3776 = vmatmul.mubr.f32.gmra.mxu0 %v3775
    %v3777 = vpop.f32.mrf.mxu0
    %v3778 = vadd.f32 %v3698, %v3777
    %v3779 = vpop.f32.mrf.mxu0
    %3780 = vmatprep.mubr.f32.mxu0 0.0
    %v3781 = vand.u32 %v3537, 4294901760
    %v3782 = vsub.f32 %v3537, %v3781
    %3783 = vmatmul.mubr.f32.gmra.mxu0 %v3782
    %v3784 = vpop.f32.mrf.mxu0
    %v3785 = vadd.f32 %v3704, %v3784
    %v3786 = vpop.f32.mrf.mxu0
    %3787 = vdwg.mxu0
    %3788 = vmatprep.subr.mxu0 0.0
    %3789 = vmatpush1.xpose.msra.mxu0 0.0
    %3790 = vmatprep.subr.mxu0 0.0
    %3791 = vmatpush1.xpose.msra.mxu0 0.0
    %3792 = vmatprep.subr.mxu0 0.0
    %3793 = vmatpush1.xpose.msra.mxu0 0.0
    %3794 = vmatprep.subr.mxu0 0.0
    %3795 = vmatpush1.xpose.msra.mxu0 0.0
    %3796 = vmatprep.subr.mxu0 0.0
    %3797 = vmatpush1.xpose.msra.mxu0 0.0
    %3798 = vmatprep.subr.mxu0 0.0
    %3799 = vmatpush1.xpose.msra.mxu0 0.0
    %3800 = vmatprep.subr.mxu0 0.0
    %3801 = vmatpush1.xpose.msra.mxu0 0.0
    %3802 = vmatprep.subr.mxu0 0.0
    %3803 = vmatpush1.xpose.msra.mxu0 0.0
    %3804 = vmatprep.subr.mxu0 0.0
    %3805 = vmatpush1.xpose.msra.mxu0 0.0
    %3806 = vmatprep.subr.mxu0 0.0
    %3807 = vmatpush1.xpose.msra.mxu0 0.0
    %3808 = vmatprep.subr.mxu0 0.0
    %3809 = vmatpush1.xpose.msra.mxu0 0.0
    %3810 = vmatprep.subr.mxu0 0.0
    %3811 = vmatpush1.xpose.msra.mxu0 0.0
    %3812 = vmatprep.subr.mxu0 0.0
    %3813 = vmatpush1.xpose.msra.mxu0 0.0
    %3814 = vmatprep.subr.mxu0 0.0
    %3815 = vmatpush1.xpose.msra.mxu0 0.0
    %3816 = vmatprep.subr.mxu0 0.0
    %3817 = vmatpush1.xpose.msra.mxu0 0.0
    %3818 = vmatprep.subr.mxu0 0.0
    %v3819 = vand.u32 %v1116, 4294901760
    %3820 = vmatpush1.xpose.msra.mxu0 %v3819
    %3821 = vmatprep.subr.mxu0 0.0
    %3822 = vmatpush2.xpose.msra.mxu0 0.0
    %3823 = vmatprep.subr.mxu0 0.0
    %3824 = vmatpush2.xpose.msra.mxu0 0.0
    %3825 = vmatprep.subr.mxu0 0.0
    %3826 = vmatpush2.xpose.msra.mxu0 0.0
    %3827 = vmatprep.subr.mxu0 0.0
    %3828 = vmatpush2.xpose.msra.mxu0 0.0
    %3829 = vmatprep.subr.mxu0 0.0
    %3830 = vmatpush2.xpose.msra.mxu0 0.0
    %3831 = vmatprep.subr.mxu0 0.0
    %3832 = vmatpush2.xpose.msra.mxu0 0.0
    %3833 = vmatprep.subr.mxu0 0.0
    %3834 = vmatpush2.xpose.msra.mxu0 0.0
    %3835 = vmatprep.subr.mxu0 0.0
    %3836 = vmatpush2.xpose.msra.mxu0 0.0
    %3837 = vmatprep.subr.mxu0 0.0
    %3838 = vmatpush2.xpose.msra.mxu0 0.0
    %3839 = vmatprep.subr.mxu0 0.0
    %3840 = vmatpush2.xpose.msra.mxu0 0.0
    %3841 = vmatprep.subr.mxu0 0.0
    %3842 = vmatpush2.xpose.msra.mxu0 0.0
    %3843 = vmatprep.subr.mxu0 0.0
    %3844 = vmatpush2.xpose.msra.mxu0 0.0
    %3845 = vmatprep.subr.mxu0 0.0
    %3846 = vmatpush2.xpose.msra.mxu0 0.0
    %3847 = vmatprep.subr.mxu0 0.0
    %3848 = vmatpush2.xpose.msra.mxu0 0.0
    %3849 = vmatprep.subr.mxu0 0.0
    %3850 = vmatpush2.xpose.msra.mxu0 0.0
    %3851 = vmatprep.subr.mxu0 0.0
    %3852 = vmatpush2.xpose.msra.mxu0 0.0
    %3853 = vmatprep.mubr.f32.mxu0 0.0
    %v3854 = vand.u32 %v3534, 4294901760
    %v3855 = vsub.f32 %v3534, %v3854
    %v3856 = vand.u32 %v3855, 4294901760
    %3857 = vmatmul.mubr.f32.gmra.mxu0 %v3856
    %v3858 = vpop.f32.mrf.mxu0
    %v3859 = vadd.f32 %v3778, %v3858
    %v3860 = vpop.f32.mrf.mxu0
    %3861 = vmatprep.mubr.f32.mxu0 0.0
    %v3862 = vand.u32 %v3537, 4294901760
    %v3863 = vsub.f32 %v3537, %v3862
    %v3864 = vand.u32 %v3863, 4294901760
    %3865 = vmatmul.mubr.f32.gmra.mxu0 %v3864
    %v3866 = vpop.f32.mrf.mxu0
    %v3867 = vadd.f32 %v3785, %v3866
    %v3868 = vpop.f32.mrf.mxu0
    %3869 = vdwg.mxu0
    %3870 = vmatprep.subr.mxu0 0.0
    %3871 = vmatpush1.xpose.msra.mxu0 0.0
    %3872 = vmatprep.subr.mxu0 0.0
    %3873 = vmatpush1.xpose.msra.mxu0 0.0
    %3874 = vmatprep.subr.mxu0 0.0
    %3875 = vmatpush1.xpose.msra.mxu0 0.0
    %3876 = vmatprep.subr.mxu0 0.0
    %3877 = vmatpush1.xpose.msra.mxu0 0.0
    %3878 = vmatprep.subr.mxu0 0.0
    %3879 = vmatpush1.xpose.msra.mxu0 0.0
    %3880 = vmatprep.subr.mxu0 0.0
    %3881 = vmatpush1.xpose.msra.mxu0 0.0
    %3882 = vmatprep.subr.mxu0 0.0
    %3883 = vmatpush1.xpose.msra.mxu0 0.0
    %3884 = vmatprep.subr.mxu0 0.0
    %3885 = vmatpush1.xpose.msra.mxu0 0.0
    %3886 = vmatprep.subr.mxu0 0.0
    %3887 = vmatpush1.xpose.msra.mxu0 0.0
    %3888 = vmatprep.subr.mxu0 0.0
    %3889 = vmatpush1.xpose.msra.mxu0 0.0
    %3890 = vmatprep.subr.mxu0 0.0
    %3891 = vmatpush1.xpose.msra.mxu0 0.0
    %3892 = vmatprep.subr.mxu0 0.0
    %3893 = vmatpush1.xpose.msra.mxu0 0.0
    %3894 = vmatprep.subr.mxu0 0.0
    %3895 = vmatpush1.xpose.msra.mxu0 0.0
    %3896 = vmatprep.subr.mxu0 0.0
    %3897 = vmatpush1.xpose.msra.mxu0 0.0
    %3898 = vmatprep.subr.mxu0 0.0
    %3899 = vmatpush1.xpose.msra.mxu0 0.0
    %3900 = vmatprep.subr.mxu0 0.0
    %v3901 = vand.u32 %v1116, 4294901760
    %v3902 = vsub.f32 %v1116, %v3901
    %v3903 = vand.u32 %v3902, 4294901760
    %3904 = vmatpush1.xpose.msra.mxu0 %v3903
    %3905 = vmatprep.subr.mxu0 0.0
    %3906 = vmatpush2.xpose.msra.mxu0 0.0
    %3907 = vmatprep.subr.mxu0 0.0
    %3908 = vmatpush2.xpose.msra.mxu0 0.0
    %3909 = vmatprep.subr.mxu0 0.0
    %3910 = vmatpush2.xpose.msra.mxu0 0.0
    %3911 = vmatprep.subr.mxu0 0.0
    %3912 = vmatpush2.xpose.msra.mxu0 0.0
    %3913 = vmatprep.subr.mxu0 0.0
    %3914 = vmatpush2.xpose.msra.mxu0 0.0
    %3915 = vmatprep.subr.mxu0 0.0
    %3916 = vmatpush2.xpose.msra.mxu0 0.0
    %3917 = vmatprep.subr.mxu0 0.0
    %3918 = vmatpush2.xpose.msra.mxu0 0.0
    %3919 = vmatprep.subr.mxu0 0.0
    %3920 = vmatpush2.xpose.msra.mxu0 0.0
    %3921 = vmatprep.subr.mxu0 0.0
    %3922 = vmatpush2.xpose.msra.mxu0 0.0
    %3923 = vmatprep.subr.mxu0 0.0
    %3924 = vmatpush2.xpose.msra.mxu0 0.0
    %3925 = vmatprep.subr.mxu0 0.0
    %3926 = vmatpush2.xpose.msra.mxu0 0.0
    %3927 = vmatprep.subr.mxu0 0.0
    %3928 = vmatpush2.xpose.msra.mxu0 0.0
    %3929 = vmatprep.subr.mxu0 0.0
    %3930 = vmatpush2.xpose.msra.mxu0 0.0
    %3931 = vmatprep.subr.mxu0 0.0
    %3932 = vmatpush2.xpose.msra.mxu0 0.0
    %3933 = vmatprep.subr.mxu0 0.0
    %3934 = vmatpush2.xpose.msra.mxu0 0.0
    %3935 = vmatprep.subr.mxu0 0.0
    %3936 = vmatpush2.xpose.msra.mxu0 0.0
    %3937 = vmatprep.mubr.f32.mxu0 0.0
    %v3938 = vand.u32 %v3534, 4294901760
    %3939 = vmatmul.mubr.f32.gmra.mxu0 %v3938
    %v3940 = vpop.f32.mrf.mxu0
    %v3941 = vadd.f32 %v3859, %v3940
    %v3942 = vpop.f32.mrf.mxu0
    %3943 = vmatprep.mubr.f32.mxu0 0.0
    %v3944 = vand.u32 %v3537, 4294901760
    %3945 = vmatmul.mubr.f32.gmra.mxu0 %v3944
    %v3946 = vpop.f32.mrf.mxu0
    %v3947 = vadd.f32 %v3867, %v3946
    %v3948 = vpop.f32.mrf.mxu0
    %3949 = vdwg.mxu0
    %3950 = vmatprep.subr.mxu0 0.0
    %3951 = vmatpush1.xpose.msra.mxu0 0.0
    %3952 = vmatprep.subr.mxu0 0.0
    %3953 = vmatpush1.xpose.msra.mxu0 0.0
    %3954 = vmatprep.subr.mxu0 0.0
    %3955 = vmatpush1.xpose.msra.mxu0 0.0
    %3956 = vmatprep.subr.mxu0 0.0
    %3957 = vmatpush1.xpose.msra.mxu0 0.0
    %3958 = vmatprep.subr.mxu0 0.0
    %3959 = vmatpush1.xpose.msra.mxu0 0.0
    %3960 = vmatprep.subr.mxu0 0.0
    %3961 = vmatpush1.xpose.msra.mxu0 0.0
    %3962 = vmatprep.subr.mxu0 0.0
    %3963 = vmatpush1.xpose.msra.mxu0 0.0
    %3964 = vmatprep.subr.mxu0 0.0
    %3965 = vmatpush1.xpose.msra.mxu0 0.0
    %3966 = vmatprep.subr.mxu0 0.0
    %3967 = vmatpush1.xpose.msra.mxu0 0.0
    %3968 = vmatprep.subr.mxu0 0.0
    %3969 = vmatpush1.xpose.msra.mxu0 0.0
    %3970 = vmatprep.subr.mxu0 0.0
    %3971 = vmatpush1.xpose.msra.mxu0 0.0
    %3972 = vmatprep.subr.mxu0 0.0
    %3973 = vmatpush1.xpose.msra.mxu0 0.0
    %3974 = vmatprep.subr.mxu0 0.0
    %3975 = vmatpush1.xpose.msra.mxu0 0.0
    %3976 = vmatprep.subr.mxu0 0.0
    %3977 = vmatpush1.xpose.msra.mxu0 0.0
    %3978 = vmatprep.subr.mxu0 0.0
    %3979 = vmatpush1.xpose.msra.mxu0 0.0
    %3980 = vmatprep.subr.mxu0 0.0
    %v3981 = vand.u32 %v1116, 4294901760
    %3982 = vmatpush1.xpose.msra.mxu0 %v3981
    %3983 = vmatprep.subr.mxu0 0.0
    %3984 = vmatpush2.xpose.msra.mxu0 0.0
    %3985 = vmatprep.subr.mxu0 0.0
    %3986 = vmatpush2.xpose.msra.mxu0 0.0
    %3987 = vmatprep.subr.mxu0 0.0
    %3988 = vmatpush2.xpose.msra.mxu0 0.0
    %3989 = vmatprep.subr.mxu0 0.0
    %3990 = vmatpush2.xpose.msra.mxu0 0.0
    %3991 = vmatprep.subr.mxu0 0.0
    %3992 = vmatpush2.xpose.msra.mxu0 0.0
    %3993 = vmatprep.subr.mxu0 0.0
    %3994 = vmatpush2.xpose.msra.mxu0 0.0
    %3995 = vmatprep.subr.mxu0 0.0
    %3996 = vmatpush2.xpose.msra.mxu0 0.0
    %3997 = vmatprep.subr.mxu0 0.0
    %3998 = vmatpush2.xpose.msra.mxu0 0.0
    %3999 = vmatprep.subr.mxu0 0.0
    %4000 = vmatpush2.xpose.msra.mxu0 0.0
    %4001 = vmatprep.subr.mxu0 0.0
    %4002 = vmatpush2.xpose.msra.mxu0 0.0
    %4003 = vmatprep.subr.mxu0 0.0
    %4004 = vmatpush2.xpose.msra.mxu0 0.0
    %4005 = vmatprep.subr.mxu0 0.0
    %4006 = vmatpush2.xpose.msra.mxu0 0.0
    %4007 = vmatprep.subr.mxu0 0.0
    %4008 = vmatpush2.xpose.msra.mxu0 0.0
    %4009 = vmatprep.subr.mxu0 0.0
    %4010 = vmatpush2.xpose.msra.mxu0 0.0
    %4011 = vmatprep.subr.mxu0 0.0
    %4012 = vmatpush2.xpose.msra.mxu0 0.0
    %4013 = vmatprep.subr.mxu0 0.0
    %4014 = vmatpush2.xpose.msra.mxu0 0.0
    %4015 = vmatprep.mubr.f32.mxu0 0.0
    %v4016 = vand.u32 %v3534, 4294901760
    %4017 = vmatmul.mubr.f32.gmra.mxu0 %v4016
    %v4018 = vpop.f32.mrf.mxu0
    %v4019 = vadd.f32 %v3941, %v4018
    %v4020 = vpop.f32.mrf.mxu0
    %4021 = vmatprep.mubr.f32.mxu0 0.0
    %v4022 = vand.u32 %v3537, 4294901760
    %4023 = vmatmul.mubr.f32.gmra.mxu0 %v4022
    %v4024 = vpop.f32.mrf.mxu0
    %v4025 = vadd.f32 %v3947, %v4024
    %v4026 = vpop.f32.mrf.mxu0
    %4027 = vdwg.mxu0
    %4028 = vmatprep.subr.mxu0 0.0
    %4029 = vmatpush1.xpose.msra.mxu0 0.0
    %4030 = vmatprep.subr.mxu0 0.0
    %4031 = vmatpush1.xpose.msra.mxu0 0.0
    %4032 = vmatprep.subr.mxu0 0.0
    %4033 = vmatpush1.xpose.msra.mxu0 0.0
    %4034 = vmatprep.subr.mxu0 0.0
    %4035 = vmatpush1.xpose.msra.mxu0 0.0
    %4036 = vmatprep.subr.mxu0 0.0
    %4037 = vmatpush1.xpose.msra.mxu0 0.0
    %4038 = vmatprep.subr.mxu0 0.0
    %4039 = vmatpush1.xpose.msra.mxu0 0.0
    %4040 = vmatprep.subr.mxu0 0.0
    %4041 = vmatpush1.xpose.msra.mxu0 0.0
    %4042 = vmatprep.subr.mxu0 0.0
    %4043 = vmatpush1.xpose.msra.mxu0 0.0
    %4044 = vmatprep.subr.mxu0 0.0
    %4045 = vmatpush1.xpose.msra.mxu0 0.0
    %4046 = vmatprep.subr.mxu0 0.0
    %4047 = vmatpush1.xpose.msra.mxu0 0.0
    %4048 = vmatprep.subr.mxu0 0.0
    %4049 = vmatpush1.xpose.msra.mxu0 0.0
    %4050 = vmatprep.subr.mxu0 0.0
    %4051 = vmatpush1.xpose.msra.mxu0 0.0
    %4052 = vmatprep.subr.mxu0 0.0
    %4053 = vmatpush1.xpose.msra.mxu0 0.0
    %4054 = vmatprep.subr.mxu0 0.0
    %4055 = vmatpush1.xpose.msra.mxu0 0.0
    %4056 = vmatprep.subr.mxu0 0.0
    %4057 = vmatpush1.xpose.msra.mxu0 0.0
    %4058 = vmatprep.subr.mxu0 0.0
    %v4059 = vand.u32 %v3528, 4294901760
    %4060 = vmatpush1.xpose.msra.mxu0 %v4059
    %4061 = vmatprep.subr.mxu0 0.0
    %4062 = vmatpush2.xpose.msra.mxu0 0.0
    %4063 = vmatprep.subr.mxu0 0.0
    %4064 = vmatpush2.xpose.msra.mxu0 0.0
    %4065 = vmatprep.subr.mxu0 0.0
    %4066 = vmatpush2.xpose.msra.mxu0 0.0
    %4067 = vmatprep.subr.mxu0 0.0
    %4068 = vmatpush2.xpose.msra.mxu0 0.0
    %4069 = vmatprep.subr.mxu0 0.0
    %4070 = vmatpush2.xpose.msra.mxu0 0.0
    %4071 = vmatprep.subr.mxu0 0.0
    %4072 = vmatpush2.xpose.msra.mxu0 0.0
    %4073 = vmatprep.subr.mxu0 0.0
    %4074 = vmatpush2.xpose.msra.mxu0 0.0
    %4075 = vmatprep.subr.mxu0 0.0
    %4076 = vmatpush2.xpose.msra.mxu0 0.0
    %4077 = vmatprep.subr.mxu0 0.0
    %4078 = vmatpush2.xpose.msra.mxu0 0.0
    %4079 = vmatprep.subr.mxu0 0.0
    %4080 = vmatpush2.xpose.msra.mxu0 0.0
    %4081 = vmatprep.subr.mxu0 0.0
    %4082 = vmatpush2.xpose.msra.mxu0 0.0
    %4083 = vmatprep.subr.mxu0 0.0
    %4084 = vmatpush2.xpose.msra.mxu0 0.0
    %4085 = vmatprep.subr.mxu0 0.0
    %4086 = vmatpush2.xpose.msra.mxu0 0.0
    %4087 = vmatprep.subr.mxu0 0.0
    %4088 = vmatpush2.xpose.msra.mxu0 0.0
    %4089 = vmatprep.subr.mxu0 0.0
    %4090 = vmatpush2.xpose.msra.mxu0 0.0
    %4091 = vmatprep.subr.mxu0 0.0
    %4092 = vmatpush2.xpose.msra.mxu0 0.0
    %4093 = vmatprep.mubr.f32.mxu0 0.0
    %v4094 = vand.u32 %v3529, 4294901760
    %v4095 = vsub.f32 %v3529, %v4094
    %v4096 = vand.u32 %v4095, 4294901760
    %v4097 = vsub.f32 %v4095, %v4096
    %v4098 = vand.u32 %v4097, 4294901760
    %4099 = vmatmul.mubr.f32.gmra.mxu0 %v4098
    %v4100 = vpop.f32.mrf.mxu0
    %v4101 = vadd.f32 %v4019, %v4100
    %v4102 = vpop.f32.mrf.mxu0
    %4103 = vmatprep.mubr.f32.mxu0 0.0
    %v4104 = vand.u32 %v3530, 4294901760
    %v4105 = vsub.f32 %v3530, %v4104
    %v4106 = vand.u32 %v4105, 4294901760
    %v4107 = vsub.f32 %v4105, %v4106
    %v4108 = vand.u32 %v4107, 4294901760
    %4109 = vmatmul.mubr.f32.gmra.mxu0 %v4108
    %v4110 = vpop.f32.mrf.mxu0
    %v4111 = vadd.f32 %v4025, %v4110
    %v4112 = vpop.f32.mrf.mxu0
    %4113 = vdwg.mxu0
    %4114 = vmatprep.subr.mxu0 0.0
    %4115 = vmatpush1.xpose.msra.mxu0 0.0
    %4116 = vmatprep.subr.mxu0 0.0
    %4117 = vmatpush1.xpose.msra.mxu0 0.0
    %4118 = vmatprep.subr.mxu0 0.0
    %4119 = vmatpush1.xpose.msra.mxu0 0.0
    %4120 = vmatprep.subr.mxu0 0.0
    %4121 = vmatpush1.xpose.msra.mxu0 0.0
    %4122 = vmatprep.subr.mxu0 0.0
    %4123 = vmatpush1.xpose.msra.mxu0 0.0
    %4124 = vmatprep.subr.mxu0 0.0
    %4125 = vmatpush1.xpose.msra.mxu0 0.0
    %4126 = vmatprep.subr.mxu0 0.0
    %4127 = vmatpush1.xpose.msra.mxu0 0.0
    %4128 = vmatprep.subr.mxu0 0.0
    %4129 = vmatpush1.xpose.msra.mxu0 0.0
    %4130 = vmatprep.subr.mxu0 0.0
    %4131 = vmatpush1.xpose.msra.mxu0 0.0
    %4132 = vmatprep.subr.mxu0 0.0
    %4133 = vmatpush1.xpose.msra.mxu0 0.0
    %4134 = vmatprep.subr.mxu0 0.0
    %4135 = vmatpush1.xpose.msra.mxu0 0.0
    %4136 = vmatprep.subr.mxu0 0.0
    %4137 = vmatpush1.xpose.msra.mxu0 0.0
    %4138 = vmatprep.subr.mxu0 0.0
    %4139 = vmatpush1.xpose.msra.mxu0 0.0
    %4140 = vmatprep.subr.mxu0 0.0
    %4141 = vmatpush1.xpose.msra.mxu0 0.0
    %4142 = vmatprep.subr.mxu0 0.0
    %4143 = vmatpush1.xpose.msra.mxu0 0.0
    %4144 = vmatprep.subr.mxu0 0.0
    %v4145 = vand.u32 %v3528, 4294901760
    %v4146 = vsub.f32 %v3528, %v4145
    %v4147 = vand.u32 %v4146, 4294901760
    %v4148 = vsub.f32 %v4146, %v4147
    %v4149 = vand.u32 %v4148, 4294901760
    %4150 = vmatpush1.xpose.msra.mxu0 %v4149
    %4151 = vmatprep.subr.mxu0 0.0
    %4152 = vmatpush2.xpose.msra.mxu0 0.0
    %4153 = vmatprep.subr.mxu0 0.0
    %4154 = vmatpush2.xpose.msra.mxu0 0.0
    %4155 = vmatprep.subr.mxu0 0.0
    %4156 = vmatpush2.xpose.msra.mxu0 0.0
    %4157 = vmatprep.subr.mxu0 0.0
    %4158 = vmatpush2.xpose.msra.mxu0 0.0
    %4159 = vmatprep.subr.mxu0 0.0
    %4160 = vmatpush2.xpose.msra.mxu0 0.0
    %4161 = vmatprep.subr.mxu0 0.0
    %4162 = vmatpush2.xpose.msra.mxu0 0.0
    %4163 = vmatprep.subr.mxu0 0.0
    %4164 = vmatpush2.xpose.msra.mxu0 0.0
    %4165 = vmatprep.subr.mxu0 0.0
    %4166 = vmatpush2.xpose.msra.mxu0 0.0
    %4167 = vmatprep.subr.mxu0 0.0
    %4168 = vmatpush2.xpose.msra.mxu0 0.0
    %4169 = vmatprep.subr.mxu0 0.0
    %4170 = vmatpush2.xpose.msra.mxu0 0.0
    %4171 = vmatprep.subr.mxu0 0.0
    %4172 = vmatpush2.xpose.msra.mxu0 0.0
    %4173 = vmatprep.subr.mxu0 0.0
    %4174 = vmatpush2.xpose.msra.mxu0 0.0
    %4175 = vmatprep.subr.mxu0 0.0
    %4176 = vmatpush2.xpose.msra.mxu0 0.0
    %4177 = vmatprep.subr.mxu0 0.0
    %4178 = vmatpush2.xpose.msra.mxu0 0.0
    %4179 = vmatprep.subr.mxu0 0.0
    %4180 = vmatpush2.xpose.msra.mxu0 0.0
    %4181 = vmatprep.subr.mxu0 0.0
    %4182 = vmatpush2.xpose.msra.mxu0 0.0
    %4183 = vmatprep.mubr.f32.mxu0 0.0
    %v4184 = vand.u32 %v3529, 4294901760
    %4185 = vmatmul.mubr.f32.gmra.mxu0 %v4184
    %v4186 = vpop.f32.mrf.mxu0
    %v4187 = vadd.f32 %v4101, %v4186
    %v4188 = vpop.f32.mrf.mxu0
    %4189 = vmatprep.mubr.f32.mxu0 0.0
    %v4190 = vand.u32 %v3530, 4294901760
    %4191 = vmatmul.mubr.f32.gmra.mxu0 %v4190
    %v4192 = vpop.f32.mrf.mxu0
    %v4193 = vadd.f32 %v4111, %v4192
    %v4194 = vpop.f32.mrf.mxu0
    %4195 = vdwg.mxu0
    %4196 = vmatprep.subr.mxu0 0.0
    %4197 = vmatpush1.xpose.msra.mxu0 0.0
    %4198 = vmatprep.subr.mxu0 0.0
    %4199 = vmatpush1.xpose.msra.mxu0 0.0
    %4200 = vmatprep.subr.mxu0 0.0
    %4201 = vmatpush1.xpose.msra.mxu0 0.0
    %4202 = vmatprep.subr.mxu0 0.0
    %4203 = vmatpush1.xpose.msra.mxu0 0.0
    %4204 = vmatprep.subr.mxu0 0.0
    %4205 = vmatpush1.xpose.msra.mxu0 0.0
    %4206 = vmatprep.subr.mxu0 0.0
    %4207 = vmatpush1.xpose.msra.mxu0 0.0
    %4208 = vmatprep.subr.mxu0 0.0
    %4209 = vmatpush1.xpose.msra.mxu0 0.0
    %4210 = vmatprep.subr.mxu0 0.0
    %4211 = vmatpush1.xpose.msra.mxu0 0.0
    %4212 = vmatprep.subr.mxu0 0.0
    %4213 = vmatpush1.xpose.msra.mxu0 0.0
    %4214 = vmatprep.subr.mxu0 0.0
    %4215 = vmatpush1.xpose.msra.mxu0 0.0
    %4216 = vmatprep.subr.mxu0 0.0
    %4217 = vmatpush1.xpose.msra.mxu0 0.0
    %4218 = vmatprep.subr.mxu0 0.0
    %4219 = vmatpush1.xpose.msra.mxu0 0.0
    %4220 = vmatprep.subr.mxu0 0.0
    %4221 = vmatpush1.xpose.msra.mxu0 0.0
    %4222 = vmatprep.subr.mxu0 0.0
    %4223 = vmatpush1.xpose.msra.mxu0 0.0
    %4224 = vmatprep.subr.mxu0 0.0
    %4225 = vmatpush1.xpose.msra.mxu0 0.0
    %4226 = vmatprep.subr.mxu0 0.0
    %v4227 = vand.u32 %v3528, 4294901760
    %v4228 = vsub.f32 %v3528, %v4227
    %4229 = vmatpush1.xpose.msra.mxu0 %v4228
    %4230 = vmatprep.subr.mxu0 0.0
    %4231 = vmatpush2.xpose.msra.mxu0 0.0
    %4232 = vmatprep.subr.mxu0 0.0
    %4233 = vmatpush2.xpose.msra.mxu0 0.0
    %4234 = vmatprep.subr.mxu0 0.0
    %4235 = vmatpush2.xpose.msra.mxu0 0.0
    %4236 = vmatprep.subr.mxu0 0.0
    %4237 = vmatpush2.xpose.msra.mxu0 0.0
    %4238 = vmatprep.subr.mxu0 0.0
    %4239 = vmatpush2.xpose.msra.mxu0 0.0
    %4240 = vmatprep.subr.mxu0 0.0
    %4241 = vmatpush2.xpose.msra.mxu0 0.0
    %4242 = vmatprep.subr.mxu0 0.0
    %4243 = vmatpush2.xpose.msra.mxu0 0.0
    %4244 = vmatprep.subr.mxu0 0.0
    %4245 = vmatpush2.xpose.msra.mxu0 0.0
    %4246 = vmatprep.subr.mxu0 0.0
    %4247 = vmatpush2.xpose.msra.mxu0 0.0
    %4248 = vmatprep.subr.mxu0 0.0
    %4249 = vmatpush2.xpose.msra.mxu0 0.0
    %4250 = vmatprep.subr.mxu0 0.0
    %4251 = vmatpush2.xpose.msra.mxu0 0.0
    %4252 = vmatprep.subr.mxu0 0.0
    %4253 = vmatpush2.xpose.msra.mxu0 0.0
    %4254 = vmatprep.subr.mxu0 0.0
    %4255 = vmatpush2.xpose.msra.mxu0 0.0
    %4256 = vmatprep.subr.mxu0 0.0
    %4257 = vmatpush2.xpose.msra.mxu0 0.0
    %4258 = vmatprep.subr.mxu0 0.0
    %4259 = vmatpush2.xpose.msra.mxu0 0.0
    %4260 = vmatprep.subr.mxu0 0.0
    %4261 = vmatpush2.xpose.msra.mxu0 0.0
    %4262 = vmatprep.mubr.f32.mxu0 0.0
    %v4263 = vand.u32 %v3529, 4294901760
    %v4264 = vsub.f32 %v3529, %v4263
    %4265 = vmatmul.mubr.f32.gmra.mxu0 %v4264
    %v4266 = vpop.f32.mrf.mxu0
    %v4267 = vadd.f32 %v4187, %v4266
    %v4268 = vpop.f32.mrf.mxu0
    %4269 = vmatprep.mubr.f32.mxu0 0.0
    %v4270 = vand.u32 %v3530, 4294901760
    %v4271 = vsub.f32 %v3530, %v4270
    %4272 = vmatmul.mubr.f32.gmra.mxu0 %v4271
    %v4273 = vpop.f32.mrf.mxu0
    %v4274 = vadd.f32 %v4193, %v4273
    %v4275 = vpop.f32.mrf.mxu0
    %4276 = vdwg.mxu0
    %4277 = vmatprep.subr.mxu0 0.0
    %4278 = vmatpush1.xpose.msra.mxu0 0.0
    %4279 = vmatprep.subr.mxu0 0.0
    %4280 = vmatpush1.xpose.msra.mxu0 0.0
    %4281 = vmatprep.subr.mxu0 0.0
    %4282 = vmatpush1.xpose.msra.mxu0 0.0
    %4283 = vmatprep.subr.mxu0 0.0
    %4284 = vmatpush1.xpose.msra.mxu0 0.0
    %4285 = vmatprep.subr.mxu0 0.0
    %4286 = vmatpush1.xpose.msra.mxu0 0.0
    %4287 = vmatprep.subr.mxu0 0.0
    %4288 = vmatpush1.xpose.msra.mxu0 0.0
    %4289 = vmatprep.subr.mxu0 0.0
    %4290 = vmatpush1.xpose.msra.mxu0 0.0
    %4291 = vmatprep.subr.mxu0 0.0
    %4292 = vmatpush1.xpose.msra.mxu0 0.0
    %4293 = vmatprep.subr.mxu0 0.0
    %4294 = vmatpush1.xpose.msra.mxu0 0.0
    %4295 = vmatprep.subr.mxu0 0.0
    %4296 = vmatpush1.xpose.msra.mxu0 0.0
    %4297 = vmatprep.subr.mxu0 0.0
    %4298 = vmatpush1.xpose.msra.mxu0 0.0
    %4299 = vmatprep.subr.mxu0 0.0
    %4300 = vmatpush1.xpose.msra.mxu0 0.0
    %4301 = vmatprep.subr.mxu0 0.0
    %4302 = vmatpush1.xpose.msra.mxu0 0.0
    %4303 = vmatprep.subr.mxu0 0.0
    %4304 = vmatpush1.xpose.msra.mxu0 0.0
    %4305 = vmatprep.subr.mxu0 0.0
    %4306 = vmatpush1.xpose.msra.mxu0 0.0
    %4307 = vmatprep.subr.mxu0 0.0
    %v4308 = vand.u32 %v3528, 4294901760
    %4309 = vmatpush1.xpose.msra.mxu0 %v4308
    %4310 = vmatprep.subr.mxu0 0.0
    %4311 = vmatpush2.xpose.msra.mxu0 0.0
    %4312 = vmatprep.subr.mxu0 0.0
    %4313 = vmatpush2.xpose.msra.mxu0 0.0
    %4314 = vmatprep.subr.mxu0 0.0
    %4315 = vmatpush2.xpose.msra.mxu0 0.0
    %4316 = vmatprep.subr.mxu0 0.0
    %4317 = vmatpush2.xpose.msra.mxu0 0.0
    %4318 = vmatprep.subr.mxu0 0.0
    %4319 = vmatpush2.xpose.msra.mxu0 0.0
    %4320 = vmatprep.subr.mxu0 0.0
    %4321 = vmatpush2.xpose.msra.mxu0 0.0
    %4322 = vmatprep.subr.mxu0 0.0
    %4323 = vmatpush2.xpose.msra.mxu0 0.0
    %4324 = vmatprep.subr.mxu0 0.0
    %4325 = vmatpush2.xpose.msra.mxu0 0.0
    %4326 = vmatprep.subr.mxu0 0.0
    %4327 = vmatpush2.xpose.msra.mxu0 0.0
    %4328 = vmatprep.subr.mxu0 0.0
    %4329 = vmatpush2.xpose.msra.mxu0 0.0
    %4330 = vmatprep.subr.mxu0 0.0
    %4331 = vmatpush2.xpose.msra.mxu0 0.0
    %4332 = vmatprep.subr.mxu0 0.0
    %4333 = vmatpush2.xpose.msra.mxu0 0.0
    %4334 = vmatprep.subr.mxu0 0.0
    %4335 = vmatpush2.xpose.msra.mxu0 0.0
    %4336 = vmatprep.subr.mxu0 0.0
    %4337 = vmatpush2.xpose.msra.mxu0 0.0
    %4338 = vmatprep.subr.mxu0 0.0
    %4339 = vmatpush2.xpose.msra.mxu0 0.0
    %4340 = vmatprep.subr.mxu0 0.0
    %4341 = vmatpush2.xpose.msra.mxu0 0.0
    %4342 = vmatprep.mubr.f32.mxu0 0.0
    %v4343 = vand.u32 %v3529, 4294901760
    %v4344 = vsub.f32 %v3529, %v4343
    %v4345 = vand.u32 %v4344, 4294901760
    %4346 = vmatmul.mubr.f32.gmra.mxu0 %v4345
    %v4347 = vpop.f32.mrf.mxu0
    %v4348 = vadd.f32 %v4267, %v4347
    %v4349 = vpop.f32.mrf.mxu0
    %4350 = vmatprep.mubr.f32.mxu0 0.0
    %v4351 = vand.u32 %v3530, 4294901760
    %v4352 = vsub.f32 %v3530, %v4351
    %v4353 = vand.u32 %v4352, 4294901760
    %4354 = vmatmul.mubr.f32.gmra.mxu0 %v4353
    %v4355 = vpop.f32.mrf.mxu0
    %v4356 = vadd.f32 %v4274, %v4355
    %v4357 = vpop.f32.mrf.mxu0
    %4358 = vdwg.mxu0
    %4359 = vmatprep.subr.mxu0 0.0
    %4360 = vmatpush1.xpose.msra.mxu0 0.0
    %4361 = vmatprep.subr.mxu0 0.0
    %4362 = vmatpush1.xpose.msra.mxu0 0.0
    %4363 = vmatprep.subr.mxu0 0.0
    %4364 = vmatpush1.xpose.msra.mxu0 0.0
    %4365 = vmatprep.subr.mxu0 0.0
    %4366 = vmatpush1.xpose.msra.mxu0 0.0
    %4367 = vmatprep.subr.mxu0 0.0
    %4368 = vmatpush1.xpose.msra.mxu0 0.0
    %4369 = vmatprep.subr.mxu0 0.0
    %4370 = vmatpush1.xpose.msra.mxu0 0.0
    %4371 = vmatprep.subr.mxu0 0.0
    %4372 = vmatpush1.xpose.msra.mxu0 0.0
    %4373 = vmatprep.subr.mxu0 0.0
    %4374 = vmatpush1.xpose.msra.mxu0 0.0
    %4375 = vmatprep.subr.mxu0 0.0
    %4376 = vmatpush1.xpose.msra.mxu0 0.0
    %4377 = vmatprep.subr.mxu0 0.0
    %4378 = vmatpush1.xpose.msra.mxu0 0.0
    %4379 = vmatprep.subr.mxu0 0.0
    %4380 = vmatpush1.xpose.msra.mxu0 0.0
    %4381 = vmatprep.subr.mxu0 0.0
    %4382 = vmatpush1.xpose.msra.mxu0 0.0
    %4383 = vmatprep.subr.mxu0 0.0
    %4384 = vmatpush1.xpose.msra.mxu0 0.0
    %4385 = vmatprep.subr.mxu0 0.0
    %4386 = vmatpush1.xpose.msra.mxu0 0.0
    %4387 = vmatprep.subr.mxu0 0.0
    %4388 = vmatpush1.xpose.msra.mxu0 0.0
    %4389 = vmatprep.subr.mxu0 0.0
    %v4390 = vand.u32 %v3528, 4294901760
    %v4391 = vsub.f32 %v3528, %v4390
    %v4392 = vand.u32 %v4391, 4294901760
    %4393 = vmatpush1.xpose.msra.mxu0 %v4392
    %4394 = vmatprep.subr.mxu0 0.0
    %4395 = vmatpush2.xpose.msra.mxu0 0.0
    %4396 = vmatprep.subr.mxu0 0.0
    %4397 = vmatpush2.xpose.msra.mxu0 0.0
    %4398 = vmatprep.subr.mxu0 0.0
    %4399 = vmatpush2.xpose.msra.mxu0 0.0
    %4400 = vmatprep.subr.mxu0 0.0
    %4401 = vmatpush2.xpose.msra.mxu0 0.0
    %4402 = vmatprep.subr.mxu0 0.0
    %4403 = vmatpush2.xpose.msra.mxu0 0.0
    %4404 = vmatprep.subr.mxu0 0.0
    %4405 = vmatpush2.xpose.msra.mxu0 0.0
    %4406 = vmatprep.subr.mxu0 0.0
    %4407 = vmatpush2.xpose.msra.mxu0 0.0
    %4408 = vmatprep.subr.mxu0 0.0
    %4409 = vmatpush2.xpose.msra.mxu0 0.0
    %4410 = vmatprep.subr.mxu0 0.0
    %4411 = vmatpush2.xpose.msra.mxu0 0.0
    %4412 = vmatprep.subr.mxu0 0.0
    %4413 = vmatpush2.xpose.msra.mxu0 0.0
    %4414 = vmatprep.subr.mxu0 0.0
    %4415 = vmatpush2.xpose.msra.mxu0 0.0
    %4416 = vmatprep.subr.mxu0 0.0
    %4417 = vmatpush2.xpose.msra.mxu0 0.0
    %4418 = vmatprep.subr.mxu0 0.0
    %4419 = vmatpush2.xpose.msra.mxu0 0.0
    %4420 = vmatprep.subr.mxu0 0.0
    %4421 = vmatpush2.xpose.msra.mxu0 0.0
    %4422 = vmatprep.subr.mxu0 0.0
    %4423 = vmatpush2.xpose.msra.mxu0 0.0
    %4424 = vmatprep.subr.mxu0 0.0
    %4425 = vmatpush2.xpose.msra.mxu0 0.0
    %4426 = vmatprep.mubr.f32.mxu0 0.0
    %v4427 = vand.u32 %v3529, 4294901760
    %4428 = vmatmul.mubr.f32.gmra.mxu0 %v4427
    %v4429 = vpop.f32.mrf.mxu0
    %v4430 = vadd.f32 %v4348, %v4429
    %v4431 = vpop.f32.mrf.mxu0
    %4432 = vmatprep.mubr.f32.mxu0 0.0
    %v4433 = vand.u32 %v3530, 4294901760
    %4434 = vmatmul.mubr.f32.gmra.mxu0 %v4433
    %v4435 = vpop.f32.mrf.mxu0
    %v4436 = vadd.f32 %v4356, %v4435
    %v4437 = vpop.f32.mrf.mxu0
    %4438 = vdwg.mxu0
    %4439 = vmatprep.subr.mxu0 0.0
    %4440 = vmatpush1.xpose.msra.mxu0 0.0
    %4441 = vmatprep.subr.mxu0 0.0
    %4442 = vmatpush1.xpose.msra.mxu0 0.0
    %4443 = vmatprep.subr.mxu0 0.0
    %4444 = vmatpush1.xpose.msra.mxu0 0.0
    %4445 = vmatprep.subr.mxu0 0.0
    %4446 = vmatpush1.xpose.msra.mxu0 0.0
    %4447 = vmatprep.subr.mxu0 0.0
    %4448 = vmatpush1.xpose.msra.mxu0 0.0
    %4449 = vmatprep.subr.mxu0 0.0
    %4450 = vmatpush1.xpose.msra.mxu0 0.0
    %4451 = vmatprep.subr.mxu0 0.0
    %4452 = vmatpush1.xpose.msra.mxu0 0.0
    %4453 = vmatprep.subr.mxu0 0.0
    %4454 = vmatpush1.xpose.msra.mxu0 0.0
    %4455 = vmatprep.subr.mxu0 0.0
    %4456 = vmatpush1.xpose.msra.mxu0 0.0
    %4457 = vmatprep.subr.mxu0 0.0
    %4458 = vmatpush1.xpose.msra.mxu0 0.0
    %4459 = vmatprep.subr.mxu0 0.0
    %4460 = vmatpush1.xpose.msra.mxu0 0.0
    %4461 = vmatprep.subr.mxu0 0.0
    %4462 = vmatpush1.xpose.msra.mxu0 0.0
    %4463 = vmatprep.subr.mxu0 0.0
    %4464 = vmatpush1.xpose.msra.mxu0 0.0
    %4465 = vmatprep.subr.mxu0 0.0
    %4466 = vmatpush1.xpose.msra.mxu0 0.0
    %4467 = vmatprep.subr.mxu0 0.0
    %4468 = vmatpush1.xpose.msra.mxu0 0.0
    %4469 = vmatprep.subr.mxu0 0.0
    %v4470 = vand.u32 %v3528, 4294901760
    %4471 = vmatpush1.xpose.msra.mxu0 %v4470
    %4472 = vmatprep.subr.mxu0 0.0
    %4473 = vmatpush2.xpose.msra.mxu0 0.0
    %4474 = vmatprep.subr.mxu0 0.0
    %4475 = vmatpush2.xpose.msra.mxu0 0.0
    %4476 = vmatprep.subr.mxu0 0.0
    %4477 = vmatpush2.xpose.msra.mxu0 0.0
    %4478 = vmatprep.subr.mxu0 0.0
    %4479 = vmatpush2.xpose.msra.mxu0 0.0
    %4480 = vmatprep.subr.mxu0 0.0
    %4481 = vmatpush2.xpose.msra.mxu0 0.0
    %4482 = vmatprep.subr.mxu0 0.0
    %4483 = vmatpush2.xpose.msra.mxu0 0.0
    %4484 = vmatprep.subr.mxu0 0.0
    %4485 = vmatpush2.xpose.msra.mxu0 0.0
    %4486 = vmatprep.subr.mxu0 0.0
    %4487 = vmatpush2.xpose.msra.mxu0 0.0
    %4488 = vmatprep.subr.mxu0 0.0
    %4489 = vmatpush2.xpose.msra.mxu0 0.0
    %4490 = vmatprep.subr.mxu0 0.0
    %4491 = vmatpush2.xpose.msra.mxu0 0.0
    %4492 = vmatprep.subr.mxu0 0.0
    %4493 = vmatpush2.xpose.msra.mxu0 0.0
    %4494 = vmatprep.subr.mxu0 0.0
    %4495 = vmatpush2.xpose.msra.mxu0 0.0
    %4496 = vmatprep.subr.mxu0 0.0
    %4497 = vmatpush2.xpose.msra.mxu0 0.0
    %4498 = vmatprep.subr.mxu0 0.0
    %4499 = vmatpush2.xpose.msra.mxu0 0.0
    %4500 = vmatprep.subr.mxu0 0.0
    %4501 = vmatpush2.xpose.msra.mxu0 0.0
    %4502 = vmatprep.subr.mxu0 0.0
    %4503 = vmatpush2.xpose.msra.mxu0 0.0
    %4504 = vmatprep.mubr.f32.mxu0 0.0
    %v4505 = vand.u32 %v3529, 4294901760
    %4506 = vmatmul.mubr.f32.gmra.mxu0 %v4505
    %v4507 = vpop.f32.mrf.mxu0
    %v4508 = vadd.f32 %v4430, %v4507
    %v4509 = vpop.f32.mrf.mxu0
    %4510 = vmatprep.mubr.f32.mxu0 0.0
    %v4511 = vand.u32 %v3530, 4294901760
    %4512 = vmatmul.mubr.f32.gmra.mxu0 %v4511
    %v4513 = vpop.f32.mrf.mxu0
    %v4514 = vadd.f32 %v4436, %v4513
    %v4515 = vpop.f32.mrf.mxu0
    %4516 = vdwg.mxu0
    %v4517 = vld [vmem:[#allocation5 + $0x2b0] sm:$0xff]
    %v4518 = vld [vmem:[#allocation5 + $0x2c0] sm:$0xff]
    %4520 = vset.pattern.permute.xlu0 0
    %4521 = vperm.xlu0 %4520, %v4517
    %v4522 = vpop.permute.xlu0 %4521
    %4525 = vset.pattern.permute.xlu0 0
    %4526 = vperm.xlu0 %4525, %v4518
    %v4527 = vpop.permute.xlu0 %4526
    %v4529 = vadd.f32 %v4508, %v4522
    %v4530 = vadd.f32 %v4514, %v4527
    %v4531 = vmul.f32 %v4529, %v61
    %v4532 = vadd.f32 %v4531, %v39
    %4533 = vst.msk [vmem:[#allocation8] sm:$0xff] %vm28, %v4532
    %v4534 = vmul.f32 %v4530, %v99
    %v4535 = vadd.f32 %v4534, %v77
    %s4536 = scalar_lea.vmem [#allocation8], 8
    %4537 = vst.msk [vmem:[%s4536] sm:$0xff] %vm28, %v4535
    // Predicated region
    $region14: #{model_forward.1} parent=1 // pred_check
      _
    $region15: #{model_forward.1} parent=1 // pred_check_branch
      %4539 = sbr.rel (0) target = $region17
    $region16: #{model_forward.1} parent=1 // pred_region
      %s4541 = ssub.s32 256, 256
      %4542 = vsyncadd [#allocation7], %s4541
      %s4543 = sshll.u32 [#allocation8], 4
      %s4544 = int_to_ptr.vmem [resolvable:$true] %s4543
      %4549 = dma.vmem_to_hbm [thread:$0]  %s4544, 256, %s2, [#allocation7], 128, 128, 8
    $region17: #{model_forward.1} parent=1 // pred_fallthru
      _
    // Predicated region
    $region18: #{model_forward.1} parent=1 // pred_check
      _
    $region19: #{model_forward.1} parent=1 // pred_check_branch
      %4551 = sbr.rel (0) target = $region21
    $region20: #{model_forward.1} parent=1 // pred_region
      %4552 = dma.done [#allocation7], 256
    $region21: #{model_forward.1} parent=1 // pred_fallthru
      _
    %4553 = vsyncpa [#allocation6], 1
    %4554 = vsyncpa [#allocation7], 1

</llo_original>
